<compile_context>
chip_gen: v5e
topology: v5e:2x2
jax: 0.10.0
libtpu: 0.0.40
codegen_flags: <defaults>
</compile_context>

<pallas_src>
import functools

import jax
import jax.numpy as jnp
from jax.experimental import pallas as pl
from jax.experimental.pallas import tpu as pltpu

TM_CAP = 128  # max row tile for the matmul kernel


# ----------------------------------------------------------------------------
# Pallas kernel: tiled (M, K) x (K, N) matmul + bias (+ optional ReLU).
# ----------------------------------------------------------------------------
def _matmul_bias_kernel(a_ref, b_ref, bias_ref, o_ref, *, relu):
    acc = jnp.dot(a_ref[...], b_ref[...], preferred_element_type=jnp.float32)
    acc = acc + bias_ref[...]
    if relu:
        acc = jnp.maximum(acc, 0.0)
    o_ref[...] = acc


def _choose_tile_m(m, cap=TM_CAP):
    """Row tile: full M when small; else the largest multiple of 8 <= cap that
    divides M (falls back to cap with a ragged last block)."""
    if m <= cap:
        return m
    for d in range(cap, 63, -8):
        if m % d == 0:
            return d
    return cap  # ragged last block; Pallas masks the OOB rows


def matmul_bias(a, b, bias, relu=False):
    """a: (M, K) f32, b: (K, N) f32, bias: (N,) f32 -> (M, N) f32."""
    M, K = a.shape
    K2, N = b.shape
    assert K == K2
    tm = _choose_tile_m(M)
    grid = pl.cdiv(M, tm)

    return pl.pallas_call(
        functools.partial(_matmul_bias_kernel, relu=relu),
        out_shape=jax.ShapeDtypeStruct((M, N), jnp.float32),
        grid=(grid,),
        in_specs=[
            pl.BlockSpec((tm, K), lambda i: (i, 0)),
            pl.BlockSpec((K, N), lambda i: (0, 0)),   # resident weights
            pl.BlockSpec((1, N), lambda i: (0, 0)),   # resident bias
        ],
        out_specs=pl.BlockSpec((tm, N), lambda i: (i, 0)),
        compiler_params=pltpu.CompilerParams(
            dimension_semantics=("parallel",)),
    )(a.astype(jnp.float32), b.astype(jnp.float32),
      bias.reshape(1, N).astype(jnp.float32))


# ----------------------------------------------------------------------------
# NHWC conv / pooling glue (im2col without transposes; matmul in Pallas).
# ----------------------------------------------------------------------------
def _extract_patches_nhwc(x, kh, kw, pad):
    # x: (B, H, W, C) -> (B*OH*OW, kh*kw*C), feature order (kh, kw, C)
    if pad:
        x = jnp.pad(x, ((0, 0), (pad, pad), (pad, pad), (0, 0)))
    B, Hp, Wp, C = x.shape
    OH, OW = Hp - kh + 1, Wp - kw + 1
    cols = [x[:, i:i + OH, j:j + OW, :] for i in range(kh) for j in range(kw)]
    p = jnp.concatenate(cols, axis=-1)            # (B, OH, OW, kh*kw*C)
    return p.reshape(B * OH * OW, kh * kw * C), OH, OW


def conv2d_nhwc(x, w, b, pad=0, relu=False):
    """PyTorch-semantics Conv2d (stride 1). x: NHWC, w: (OC, IC, KH, KW)."""
    B = x.shape[0]
    OC, IC, KH, KW = w.shape
    if KH == 1 and KW == 1 and pad == 0:
        H, W = x.shape[1], x.shape[2]
        patches, OH, OW = x.reshape(B * H * W, IC), H, W
        wm = w.reshape(OC, IC).T
    else:
        patches, OH, OW = _extract_patches_nhwc(x, KH, KW, pad)
        wm = w.transpose(0, 2, 3, 1).reshape(OC, KH * KW * IC).T  # (K, OC)
    out = matmul_bias(patches, wm, b, relu=relu)   # (B*OH*OW, OC)
    return out.reshape(B, OH, OW, OC)


def fused_1x1_convs(x, branch_params):
    """Run several 1x1 convs on the same NHWC input as a single matmul."""
    B, H, W, IC = x.shape
    wms = [p["w"].reshape(p["w"].shape[0], IC).T for p in branch_params]
    wm = jnp.concatenate(wms, axis=1)                        # (IC, sum OC)
    bias = jnp.concatenate([p["b"] for p in branch_params])  # (sum OC,)
    out = matmul_bias(x.reshape(B * H * W, IC), wm, bias)
    out = out.reshape(B, H, W, -1)
    sizes = [p["w"].shape[0] for p in branch_params]
    splits, off = [], 0
    for s in sizes:
        splits.append(out[..., off:off + s])
        off += s
    return splits


def maxpool2_nhwc(x):
    B, H, W, C = x.shape
    return x.reshape(B, H // 2, 2, W // 2, 2, C).max(axis=(2, 4))


def avgpool3_s1_p1_nhwc(x):
    # AvgPool2d(3, stride=1, padding=1), count_include_pad=True (PyTorch default)
    B, H, W, C = x.shape
    xp = jnp.pad(x, ((0, 0), (1, 1), (1, 1), (0, 0)))
    s = jnp.zeros_like(x)
    for i in range(3):
        for j in range(3):
            s = s + xp[:, i:i + H, j:j + W, :]
    return s / 9.0


# ----------------------------------------------------------------------------
# Parameter init (deterministic, shapes from the PyTorch module __init__).
# ----------------------------------------------------------------------------
def _conv_params(key, oc, ic, k):
    kw, kb = jax.random.split(key)
    scale = 1.0 / jnp.sqrt(jnp.float32(ic * k * k))
    w = jax.random.uniform(kw, (oc, ic, k, k), jnp.float32, -scale, scale)
    b = jax.random.uniform(kb, (oc,), jnp.float32, -scale, scale)
    return {"w": w, "b": b}


def _linear_params(key, out_f, in_f):
    kw, kb = jax.random.split(key)
    scale = 1.0 / jnp.sqrt(jnp.float32(in_f))
    w = jax.random.uniform(kw, (out_f, in_f), jnp.float32, -scale, scale)
    b = jax.random.uniform(kb, (out_f,), jnp.float32, -scale, scale)
    return {"w": w, "b": b}


def _inception_params(key, in_channels):
    ks = jax.random.split(key, 7)
    return {
        "conv1":     _conv_params(ks[0], 16, in_channels, 1),
        "branch2":   _conv_params(ks[1], 24, in_channels, 1),
        "conv15_1":  _conv_params(ks[2], 16, in_channels, 3),
        "conv15_2":  _conv_params(ks[3], 24, 16, 5),
        "conv133_1": _conv_params(ks[4], 16, in_channels, 1),
        "conv133_2": _conv_params(ks[5], 24, 16, 3),
        "conv133_3": _conv_params(ks[6], 24, 24, 3),
    }


def init_net_params(key):
    ks = jax.random.split(key, 5)
    return {
        "conv1": _conv_params(ks[0], 10, 1, 5),
        "conv2": _conv_params(ks[1], 20, 88, 5),
        "inception1": _inception_params(ks[2], 10),
        "inception2": _inception_params(ks[3], 20),
        "fc": _linear_params(ks[4], 10, 1408),
    }


# ----------------------------------------------------------------------------
# Forward pass (matches PyTorch Net.forward; activations in NHWC).
# ----------------------------------------------------------------------------
def inception_forward(p, x):
    # All three 1x1 convs on x fused into one N=56 matmul.
    c1, branch2, c133_1 = fused_1x1_convs(
        x, [p["conv1"], p["branch2"], p["conv133_1"]])
    branch1 = avgpool3_s1_p1_nhwc(c1)
    b3 = conv2d_nhwc(x, p["conv15_1"]["w"], p["conv15_1"]["b"], pad=1)
    branch3 = conv2d_nhwc(b3, p["conv15_2"]["w"], p["conv15_2"]["b"], pad=2)
    b4 = conv2d_nhwc(c133_1, p["conv133_2"]["w"], p["conv133_2"]["b"], pad=1)
    branch4 = conv2d_nhwc(b4, p["conv133_3"]["w"], p["conv133_3"]["b"], pad=1)
    return jnp.concatenate([branch1, branch2, branch3, branch4], axis=-1)


@jax.jit
def net_forward(params, x_nchw):
    B = x_nchw.shape[0]
    x = x_nchw.transpose(0, 2, 3, 1)                             # NCHW -> NHWC once
    # relu(mp(conv)) == mp(conv with fused relu) exactly.
    x = maxpool2_nhwc(conv2d_nhwc(x, params["conv1"]["w"],
                                  params["conv1"]["b"], relu=True))   # (B,12,12,10)
    x = inception_forward(params["inception1"], x)                    # (B,12,12,88)
    x = maxpool2_nhwc(conv2d_nhwc(x, params["conv2"]["w"],
                                  params["conv2"]["b"], relu=True))   # (B,4,4,20)
    x = inception_forward(params["inception2"], x)                    # (B,4,4,88)

    # PyTorch flattens NCHW -> (C,H,W) column order; reorder the tiny FC weight
    # instead of transposing the activation.
    H, W, C = x.shape[1], x.shape[2], x.shape[3]
    fc_w = params["fc"]["w"]                                     # (10, C*H*W)
    fc_w_nhwc = fc_w.reshape(-1, C, H, W).transpose(0, 2, 3, 1).reshape(-1, H * W * C)
    x = x.reshape(B, H * W * C)                                  # (B, 1408)
    # TODO(synk): at these sizes (M=B=2) XLA's fused dot would be marginally
    # cheaper than a pallas_call; kept in Pallas to keep the whole hot path in-kernel.
    return matmul_bias(x, fc_w_nhwc.T, params["fc"]["b"])        # (B, 10)


if __name__ == "__main__":
    key = jax.random.PRNGKey(0)
    kp, kx = jax.random.split(key)
    params = init_net_params(kp)
    # Input must be (B, 1, 28, 28) for the fc(1408) flatten to line up
    # (28 -> conv5 -> 24 -> mp -> 12 -> conv5 -> 8 -> mp -> 4; 88*4*4 = 1408).
    x = jax.random.normal(kx, (2, 1, 28, 28), dtype=jnp.float32)
    out = net_forward(params, x)
    out = jax.block_until_ready(out)
    assert out.shape == (2, 10), out.shape
    assert jnp.all(jnp.isfinite(out))
    print("KERNEL_OK")
</pallas_src>

<mosaic_0001>
module attributes {stable_mosaic.version = 11 : i64} {
  func.func @_matmul_bias_kernel(%arg0: i32, %arg1: memref<128x25xf32, #tpu.memory_space<vmem>>, %arg2: memref<25x10xf32, #tpu.memory_space<vmem>>, %arg3: memref<1x10xf32, #tpu.memory_space<vmem>>, %arg4: memref<128x10xf32, #tpu.memory_space<vmem>>) attributes {dimension_semantics = [#tpu.dimension_semantics<parallel>], iteration_bounds = array<i64: 9>, scalar_prefetch = 0 : i64, scratch_operands = 0 : i64, tpu.core_type = #tpu.core_type<tc>, window_params = [{transform_indices = @transform_0, window_bounds = array<i64: 128, 25>}, {pipeline_mode = #tpu.pipeline_mode<synchronous>, transform_indices = @transform_1, window_bounds = array<i64: 25, 10>}, {pipeline_mode = #tpu.pipeline_mode<synchronous>, transform_indices = @transform_2, window_bounds = array<i64: 1, 10>}, {transform_indices = @transform_3, window_bounds = array<i64: 128, 10>}]} {
    %c0 = arith.constant 0 : index
    %c0_0 = arith.constant 0 : index
    %0 = vector.load %arg1[%c0, %c0_0] : memref<128x25xf32, #tpu.memory_space<vmem>>, vector<128x25xf32>
    %c0_1 = arith.constant 0 : index
    %c0_2 = arith.constant 0 : index
    %1 = vector.load %arg2[%c0_1, %c0_2] : memref<25x10xf32, #tpu.memory_space<vmem>>, vector<25x10xf32>
    %cst = arith.constant dense<0.000000e+00> : vector<128x10xf32>
    %2 = tpu.matmul %0, %1, %cst {dimension_numbers = #tpu.dot_dimension_numbers<[1], [0], [0], [1], [0, 0, 1, 1], [], []>} : vector<128x25xf32>, vector<25x10xf32>, vector<128x10xf32> -> vector<128x10xf32>
    %c0_3 = arith.constant 0 : index
    %c0_4 = arith.constant 0 : index
    %3 = vector.load %arg3[%c0_3, %c0_4] : memref<1x10xf32, #tpu.memory_space<vmem>>, vector<1x10xf32>
    %4 = vector.broadcast %3 : vector<1x10xf32> to vector<128x10xf32>
    %5 = arith.addf %2, %4 : vector<128x10xf32>
    %cst_5 = arith.constant 0.000000e+00 : f32
    %6 = vector.broadcast %cst_5 : f32 to vector<128x10xf32>
    %7 = arith.maximumf %5, %6 : vector<128x10xf32>
    %c0_6 = arith.constant 0 : index
    %c0_7 = arith.constant 0 : index
    %8 = vector.load %arg4[%c0_6, %c0_7] : memref<128x10xf32, #tpu.memory_space<vmem>>, vector<128x10xf32>
    tpu.vector_store %arg4[%c0_6, %c0_7], %7 {strides = array<i32>} : memref<128x10xf32, #tpu.memory_space<vmem>>, vector<128x10xf32>,
    return
  }
  func.func @transform_0(%arg0: i32) -> (i32, i32) {
    %c0_i32 = arith.constant 0 : i32
    %c0_i32_0 = arith.constant 0 : i32
    return %arg0, %c0_i32 : i32, i32
  }
  func.func @transform_1(%arg0: i32) -> (i32, i32) {
    %c0_i32 = arith.constant 0 : i32
    %c0_i32_0 = arith.constant 0 : i32
    %c0_i32_1 = arith.constant 0 : i32
    return %c0_i32, %c0_i32_0 : i32, i32
  }
  func.func @transform_2(%arg0: i32) -> (i32, i32) {
    %c0_i32 = arith.constant 0 : i32
    %c0_i32_0 = arith.constant 0 : i32
    %c0_i32_1 = arith.constant 0 : i32
    return %c0_i32, %c0_i32_0 : i32, i32
  }
  func.func @transform_3(%arg0: i32) -> (i32, i32) {
    %c0_i32 = arith.constant 0 : i32
    %c0_i32_0 = arith.constant 0 : i32
    return %arg0, %c0_i32 : i32, i32
  }
}

module attributes {stable_mosaic.version = 11 : i64} {
  func.func @_matmul_bias_kernel(%arg0: i32, %arg1: memref<96x90xf32, #tpu.memory_space<vmem>>, %arg2: memref<90x16xf32, #tpu.memory_space<vmem>>, %arg3: memref<1x16xf32, #tpu.memory_space<vmem>>, %arg4: memref<96x16xf32, #tpu.memory_space<vmem>>) attributes {dimension_semantics = [#tpu.dimension_semantics<parallel>], iteration_bounds = array<i64: 3>, scalar_prefetch = 0 : i64, scratch_operands = 0 : i64, tpu.core_type = #tpu.core_type<tc>, window_params = [{transform_indices = @transform_0, window_bounds = array<i64: 96, 90>}, {pipeline_mode = #tpu.pipeline_mode<synchronous>, transform_indices = @transform_1, window_bounds = array<i64: 90, 16>}, {pipeline_mode = #tpu.pipeline_mode<synchronous>, transform_indices = @transform_2, window_bounds = array<i64: 1, 16>}, {transform_indices = @transform_3, window_bounds = array<i64: 96, 16>}]} {
    %c0 = arith.constant 0 : index
    %c0_0 = arith.constant 0 : index
    %0 = vector.load %arg1[%c0, %c0_0] : memref<96x90xf32, #tpu.memory_space<vmem>>, vector<96x90xf32>
    %c0_1 = arith.constant 0 : index
    %c0_2 = arith.constant 0 : index
    %1 = vector.load %arg2[%c0_1, %c0_2] : memref<90x16xf32, #tpu.memory_space<vmem>>, vector<90x16xf32>
    %cst = arith.constant dense<0.000000e+00> : vector<96x16xf32>
    %2 = tpu.matmul %0, %1, %cst {dimension_numbers = #tpu.dot_dimension_numbers<[1], [0], [0], [1], [0, 0, 1, 1], [], []>} : vector<96x90xf32>, vector<90x16xf32>, vector<96x16xf32> -> vector<96x16xf32>
    %c0_3 = arith.constant 0 : index
    %c0_4 = arith.constant 0 : index
    %3 = vector.load %arg3[%c0_3, %c0_4] : memref<1x16xf32, #tpu.memory_space<vmem>>, vector<1x16xf32>
    %4 = vector.broadcast %3 : vector<1x16xf32> to vector<96x16xf32>
    %5 = arith.addf %2, %4 : vector<96x16xf32>
    %c0_5 = arith.constant 0 : index
    %c0_6 = arith.constant 0 : index
    %6 = vector.load %arg4[%c0_5, %c0_6] : memref<96x16xf32, #tpu.memory_space<vmem>>, vector<96x16xf32>
    tpu.vector_store %arg4[%c0_5, %c0_6], %5 {strides = array<i32>} : memref<96x16xf32, #tpu.memory_space<vmem>>, vector<96x16xf32>,
    return
  }
  func.func @transform_0(%arg0: i32) -> (i32, i32) {
    %c0_i32 = arith.constant 0 : i32
    %c0_i32_0 = arith.constant 0 : i32
    return %arg0, %c0_i32 : i32, i32
  }
  func.func @transform_1(%arg0: i32) -> (i32, i32) {
    %c0_i32 = arith.constant 0 : i32
    %c0_i32_0 = arith.constant 0 : i32
    %c0_i32_1 = arith.constant 0 : i32
    return %c0_i32, %c0_i32_0 : i32, i32
  }
  func.func @transform_2(%arg0: i32) -> (i32, i32) {
    %c0_i32 = arith.constant 0 : i32
    %c0_i32_0 = arith.constant 0 : i32
    %c0_i32_1 = arith.constant 0 : i32
    return %c0_i32, %c0_i32_0 : i32, i32
  }
  func.func @transform_3(%arg0: i32) -> (i32, i32) {
    %c0_i32 = arith.constant 0 : i32
    %c0_i32_0 = arith.constant 0 : i32
    return %arg0, %c0_i32 : i32, i32
  }
}

module attributes {stable_mosaic.version = 11 : i64} {
  func.func @_matmul_bias_kernel(%arg0: i32, %arg1: memref<96x400xf32, #tpu.memory_space<vmem>>, %arg2: memref<400x24xf32, #tpu.memory_space<vmem>>, %arg3: memref<1x24xf32, #tpu.memory_space<vmem>>, %arg4: memref<96x24xf32, #tpu.memory_space<vmem>>) attributes {dimension_semantics = [#tpu.dimension_semantics<parallel>], iteration_bounds = array<i64: 3>, scalar_prefetch = 0 : i64, scratch_operands = 0 : i64, tpu.core_type = #tpu.core_type<tc>, window_params = [{transform_indices = @transform_0, window_bounds = array<i64: 96, 400>}, {pipeline_mode = #tpu.pipeline_mode<synchronous>, transform_indices = @transform_1, window_bounds = array<i64: 400, 24>}, {pipeline_mode = #tpu.pipeline_mode<synchronous>, transform_indices = @transform_2, window_bounds = array<i64: 1, 24>}, {transform_indices = @transform_3, window_bounds = array<i64: 96, 24>}]} {
    %c0 = arith.constant 0 : index
    %c0_0 = arith.constant 0 : index
    %0 = vector.load %arg1[%c0, %c0_0] : memref<96x400xf32, #tpu.memory_space<vmem>>, vector<96x400xf32>
    %c0_1 = arith.constant 0 : index
    %c0_2 = arith.constant 0 : index
    %1 = vector.load %arg2[%c0_1, %c0_2] : memref<400x24xf32, #tpu.memory_space<vmem>>, vector<400x24xf32>
    %cst = arith.constant dense<0.000000e+00> : vector<96x24xf32>
    %2 = tpu.matmul %0, %1, %cst {dimension_numbers = #tpu.dot_dimension_numbers<[1], [0], [0], [1], [0, 0, 1, 1], [], []>} : vector<96x400xf32>, vector<400x24xf32>, vector<96x24xf32> -> vector<96x24xf32>
    %c0_3 = arith.constant 0 : index
    %c0_4 = arith.constant 0 : index
    %3 = vector.load %arg3[%c0_3, %c0_4] : memref<1x24xf32, #tpu.memory_space<vmem>>, vector<1x24xf32>
    %4 = vector.broadcast %3 : vector<1x24xf32> to vector<96x24xf32>
    %5 = arith.addf %2, %4 : vector<96x24xf32>
    %c0_5 = arith.constant 0 : index
    %c0_6 = arith.constant 0 : index
    %6 = vector.load %arg4[%c0_5, %c0_6] : memref<96x24xf32, #tpu.memory_space<vmem>>, vector<96x24xf32>
    tpu.vector_store %arg4[%c0_5, %c0_6], %5 {strides = array<i32>} : memref<96x24xf32, #tpu.memory_space<vmem>>, vector<96x24xf32>,
    return
  }
  func.func @transform_0(%arg0: i32) -> (i32, i32) {
    %c0_i32 = arith.constant 0 : i32
    %c0_i32_0 = arith.constant 0 : i32
    return %arg0, %c0_i32 : i32, i32
  }
  func.func @transform_1(%arg0: i32) -> (i32, i32) {
    %c0_i32 = arith.constant 0 : i32
    %c0_i32_0 = arith.constant 0 : i32
    %c0_i32_1 = arith.constant 0 : i32
    return %c0_i32, %c0_i32_0 : i32, i32
  }
  func.func @transform_2(%arg0: i32) -> (i32, i32) {
    %c0_i32 = arith.constant 0 : i32
    %c0_i32_0 = arith.constant 0 : i32
    %c0_i32_1 = arith.constant 0 : i32
    return %c0_i32, %c0_i32_0 : i32, i32
  }
  func.func @transform_3(%arg0: i32) -> (i32, i32) {
    %c0_i32 = arith.constant 0 : i32
    %c0_i32_0 = arith.constant 0 : i32
    return %arg0, %c0_i32 : i32, i32
  }
}

module attributes {stable_mosaic.version = 11 : i64} {
  func.func @_matmul_bias_kernel(%arg0: i32, %arg1: memref<96x10xf32, #tpu.memory_space<vmem>>, %arg2: memref<10x56xf32, #tpu.memory_space<vmem>>, %arg3: memref<1x56xf32, #tpu.memory_space<vmem>>, %arg4: memref<96x56xf32, #tpu.memory_space<vmem>>) attributes {dimension_semantics = [#tpu.dimension_semantics<parallel>], iteration_bounds = array<i64: 3>, scalar_prefetch = 0 : i64, scratch_operands = 0 : i64, tpu.core_type = #tpu.core_type<tc>, window_params = [{transform_indices = @transform_0, window_bounds = array<i64: 96, 10>}, {pipeline_mode = #tpu.pipeline_mode<synchronous>, transform_indices = @transform_1, window_bounds = array<i64: 10, 56>}, {pipeline_mode = #tpu.pipeline_mode<synchronous>, transform_indices = @transform_2, window_bounds = array<i64: 1, 56>}, {transform_indices = @transform_3, window_bounds = array<i64: 96, 56>}]} {
    %c0 = arith.constant 0 : index
    %c0_0 = arith.constant 0 : index
    %0 = vector.load %arg1[%c0, %c0_0] : memref<96x10xf32, #tpu.memory_space<vmem>>, vector<96x10xf32>
    %c0_1 = arith.constant 0 : index
    %c0_2 = arith.constant 0 : index
    %1 = vector.load %arg2[%c0_1, %c0_2] : memref<10x56xf32, #tpu.memory_space<vmem>>, vector<10x56xf32>
    %cst = arith.constant dense<0.000000e+00> : vector<96x56xf32>
    %2 = tpu.matmul %0, %1, %cst {dimension_numbers = #tpu.dot_dimension_numbers<[1], [0], [0], [1], [0, 0, 1, 1], [], []>} : vector<96x10xf32>, vector<10x56xf32>, vector<96x56xf32> -> vector<96x56xf32>
    %c0_3 = arith.constant 0 : index
    %c0_4 = arith.constant 0 : index
    %3 = vector.load %arg3[%c0_3, %c0_4] : memref<1x56xf32, #tpu.memory_space<vmem>>, vector<1x56xf32>
    %4 = vector.broadcast %3 : vector<1x56xf32> to vector<96x56xf32>
    %5 = arith.addf %2, %4 : vector<96x56xf32>
    %c0_5 = arith.constant 0 : index
    %c0_6 = arith.constant 0 : index
    %6 = vector.load %arg4[%c0_5, %c0_6] : memref<96x56xf32, #tpu.memory_space<vmem>>, vector<96x56xf32>
    tpu.vector_store %arg4[%c0_5, %c0_6], %5 {strides = array<i32>} : memref<96x56xf32, #tpu.memory_space<vmem>>, vector<96x56xf32>,
    return
  }
  func.func @transform_0(%arg0: i32) -> (i32, i32) {
    %c0_i32 = arith.constant 0 : i32
    %c0_i32_0 = arith.constant 0 : i32
    return %arg0, %c0_i32 : i32, i32
  }
  func.func @transform_1(%arg0: i32) -> (i32, i32) {
    %c0_i32 = arith.constant 0 : i32
    %c0_i32_0 = arith.constant 0 : i32
    %c0_i32_1 = arith.constant 0 : i32
    return %c0_i32, %c0_i32_0 : i32, i32
  }
  func.func @transform_2(%arg0: i32) -> (i32, i32) {
    %c0_i32 = arith.constant 0 : i32
    %c0_i32_0 = arith.constant 0 : i32
    %c0_i32_1 = arith.constant 0 : i32
    return %c0_i32, %c0_i32_0 : i32, i32
  }
  func.func @transform_3(%arg0: i32) -> (i32, i32) {
    %c0_i32 = arith.constant 0 : i32
    %c0_i32_0 = arith.constant 0 : i32
    return %arg0, %c0_i32 : i32, i32
  }
}

module attributes {stable_mosaic.version = 11 : i64} {
  func.func @_matmul_bias_kernel(%arg0: i32, %arg1: memref<96x144xf32, #tpu.memory_space<vmem>>, %arg2: memref<144x24xf32, #tpu.memory_space<vmem>>, %arg3: memref<1x24xf32, #tpu.memory_space<vmem>>, %arg4: memref<96x24xf32, #tpu.memory_space<vmem>>) attributes {dimension_semantics = [#tpu.dimension_semantics<parallel>], iteration_bounds = array<i64: 3>, scalar_prefetch = 0 : i64, scratch_operands = 0 : i64, tpu.core_type = #tpu.core_type<tc>, window_params = [{transform_indices = @transform_0, window_bounds = array<i64: 96, 144>}, {pipeline_mode = #tpu.pipeline_mode<synchronous>, transform_indices = @transform_1, window_bounds = array<i64: 144, 24>}, {pipeline_mode = #tpu.pipeline_mode<synchronous>, transform_indices = @transform_2, window_bounds = array<i64: 1, 24>}, {transform_indices = @transform_3, window_bounds = array<i64: 96, 24>}]} {
    %c0 = arith.constant 0 : index
    %c0_0 = arith.constant 0 : index
    %0 = vector.load %arg1[%c0, %c0_0] : memref<96x144xf32, #tpu.memory_space<vmem>>, vector<96x144xf32>
    %c0_1 = arith.constant 0 : index
    %c0_2 = arith.constant 0 : index
    %1 = vector.load %arg2[%c0_1, %c0_2] : memref<144x24xf32, #tpu.memory_space<vmem>>, vector<144x24xf32>
    %cst = arith.constant dense<0.000000e+00> : vector<96x24xf32>
    %2 = tpu.matmul %0, %1, %cst {dimension_numbers = #tpu.dot_dimension_numbers<[1], [0], [0], [1], [0, 0, 1, 1], [], []>} : vector<96x144xf32>, vector<144x24xf32>, vector<96x24xf32> -> vector<96x24xf32>
    %c0_3 = arith.constant 0 : index
    %c0_4 = arith.constant 0 : index
    %3 = vector.load %arg3[%c0_3, %c0_4] : memref<1x24xf32, #tpu.memory_space<vmem>>, vector<1x24xf32>
    %4 = vector.broadcast %3 : vector<1x24xf32> to vector<96x24xf32>
    %5 = arith.addf %2, %4 : vector<96x24xf32>
    %c0_5 = arith.constant 0 : index
    %c0_6 = arith.constant 0 : index
    %6 = vector.load %arg4[%c0_5, %c0_6] : memref<96x24xf32, #tpu.memory_space<vmem>>, vector<96x24xf32>
    tpu.vector_store %arg4[%c0_5, %c0_6], %5 {strides = array<i32>} : memref<96x24xf32, #tpu.memory_space<vmem>>, vector<96x24xf32>,
    return
  }
  func.func @transform_0(%arg0: i32) -> (i32, i32) {
    %c0_i32 = arith.constant 0 : i32
    %c0_i32_0 = arith.constant 0 : i32
    return %arg0, %c0_i32 : i32, i32
  }
  func.func @transform_1(%arg0: i32) -> (i32, i32) {
    %c0_i32 = arith.constant 0 : i32
    %c0_i32_0 = arith.constant 0 : i32
    %c0_i32_1 = arith.constant 0 : i32
    return %c0_i32, %c0_i32_0 : i32, i32
  }
  func.func @transform_2(%arg0: i32) -> (i32, i32) {
    %c0_i32 = arith.constant 0 : i32
    %c0_i32_0 = arith.constant 0 : i32
    %c0_i32_1 = arith.constant 0 : i32
    return %c0_i32, %c0_i32_0 : i32, i32
  }
  func.func @transform_3(%arg0: i32) -> (i32, i32) {
    %c0_i32 = arith.constant 0 : i32
    %c0_i32_0 = arith.constant 0 : i32
    return %arg0, %c0_i32 : i32, i32
  }
}

module attributes {stable_mosaic.version = 11 : i64} {
  func.func @_matmul_bias_kernel(%arg0: i32, %arg1: memref<96x216xf32, #tpu.memory_space<vmem>>, %arg2: memref<216x24xf32, #tpu.memory_space<vmem>>, %arg3: memref<1x24xf32, #tpu.memory_space<vmem>>, %arg4: memref<96x24xf32, #tpu.memory_space<vmem>>) attributes {dimension_semantics = [#tpu.dimension_semantics<parallel>], iteration_bounds = array<i64: 3>, scalar_prefetch = 0 : i64, scratch_operands = 0 : i64, tpu.core_type = #tpu.core_type<tc>, window_params = [{transform_indices = @transform_0, window_bounds = array<i64: 96, 216>}, {pipeline_mode = #tpu.pipeline_mode<synchronous>, transform_indices = @transform_1, window_bounds = array<i64: 216, 24>}, {pipeline_mode = #tpu.pipeline_mode<synchronous>, transform_indices = @transform_2, window_bounds = array<i64: 1, 24>}, {transform_indices = @transform_3, window_bounds = array<i64: 96, 24>}]} {
    %c0 = arith.constant 0 : index
    %c0_0 = arith.constant 0 : index
    %0 = vector.load %arg1[%c0, %c0_0] : memref<96x216xf32, #tpu.memory_space<vmem>>, vector<96x216xf32>
    %c0_1 = arith.constant 0 : index
    %c0_2 = arith.constant 0 : index
    %1 = vector.load %arg2[%c0_1, %c0_2] : memref<216x24xf32, #tpu.memory_space<vmem>>, vector<216x24xf32>
    %cst = arith.constant dense<0.000000e+00> : vector<96x24xf32>
    %2 = tpu.matmul %0, %1, %cst {dimension_numbers = #tpu.dot_dimension_numbers<[1], [0], [0], [1], [0, 0, 1, 1], [], []>} : vector<96x216xf32>, vector<216x24xf32>, vector<96x24xf32> -> vector<96x24xf32>
    %c0_3 = arith.constant 0 : index
    %c0_4 = arith.constant 0 : index
    %3 = vector.load %arg3[%c0_3, %c0_4] : memref<1x24xf32, #tpu.memory_space<vmem>>, vector<1x24xf32>
    %4 = vector.broadcast %3 : vector<1x24xf32> to vector<96x24xf32>
    %5 = arith.addf %2, %4 : vector<96x24xf32>
    %c0_5 = arith.constant 0 : index
    %c0_6 = arith.constant 0 : index
    %6 = vector.load %arg4[%c0_5, %c0_6] : memref<96x24xf32, #tpu.memory_space<vmem>>, vector<96x24xf32>
    tpu.vector_store %arg4[%c0_5, %c0_6], %5 {strides = array<i32>} : memref<96x24xf32, #tpu.memory_space<vmem>>, vector<96x24xf32>,
    return
  }
  func.func @transform_0(%arg0: i32) -> (i32, i32) {
    %c0_i32 = arith.constant 0 : i32
    %c0_i32_0 = arith.constant 0 : i32
    return %arg0, %c0_i32 : i32, i32
  }
  func.func @transform_1(%arg0: i32) -> (i32, i32) {
    %c0_i32 = arith.constant 0 : i32
    %c0_i32_0 = arith.constant 0 : i32
    %c0_i32_1 = arith.constant 0 : i32
    return %c0_i32, %c0_i32_0 : i32, i32
  }
  func.func @transform_2(%arg0: i32) -> (i32, i32) {
    %c0_i32 = arith.constant 0 : i32
    %c0_i32_0 = arith.constant 0 : i32
    %c0_i32_1 = arith.constant 0 : i32
    return %c0_i32, %c0_i32_0 : i32, i32
  }
  func.func @transform_3(%arg0: i32) -> (i32, i32) {
    %c0_i32 = arith.constant 0 : i32
    %c0_i32_0 = arith.constant 0 : i32
    return %arg0, %c0_i32 : i32, i32
  }
}

module attributes {stable_mosaic.version = 11 : i64} {
  func.func @_matmul_bias_kernel(%arg0: i32, %arg1: memref<128x2200xf32, #tpu.memory_space<vmem>>, %arg2: memref<2200x20xf32, #tpu.memory_space<vmem>>, %arg3: memref<1x20xf32, #tpu.memory_space<vmem>>, %arg4: memref<128x20xf32, #tpu.memory_space<vmem>>) attributes {dimension_semantics = [#tpu.dimension_semantics<parallel>], iteration_bounds = array<i64: 1>, scalar_prefetch = 0 : i64, scratch_operands = 0 : i64, tpu.core_type = #tpu.core_type<tc>, window_params = [{transform_indices = @transform_0, window_bounds = array<i64: 128, 2200>}, {pipeline_mode = #tpu.pipeline_mode<synchronous>, transform_indices = @transform_1, window_bounds = array<i64: 2200, 20>}, {pipeline_mode = #tpu.pipeline_mode<synchronous>, transform_indices = @transform_2, window_bounds = array<i64: 1, 20>}, {transform_indices = @transform_3, window_bounds = array<i64: 128, 20>}]} {
    %c0 = arith.constant 0 : index
    %c0_0 = arith.constant 0 : index
    %0 = vector.load %arg1[%c0, %c0_0] : memref<128x2200xf32, #tpu.memory_space<vmem>>, vector<128x2200xf32>
    %c0_1 = arith.constant 0 : index
    %c0_2 = arith.constant 0 : index
    %1 = vector.load %arg2[%c0_1, %c0_2] : memref<2200x20xf32, #tpu.memory_space<vmem>>, vector<2200x20xf32>
    %cst = arith.constant dense<0.000000e+00> : vector<128x20xf32>
    %2 = tpu.matmul %0, %1, %cst {dimension_numbers = #tpu.dot_dimension_numbers<[1], [0], [0], [1], [0, 0, 1, 1], [], []>} : vector<128x2200xf32>, vector<2200x20xf32>, vector<128x20xf32> -> vector<128x20xf32>
    %c0_3 = arith.constant 0 : index
    %c0_4 = arith.constant 0 : index
    %3 = vector.load %arg3[%c0_3, %c0_4] : memref<1x20xf32, #tpu.memory_space<vmem>>, vector<1x20xf32>
    %4 = vector.broadcast %3 : vector<1x20xf32> to vector<128x20xf32>
    %5 = arith.addf %2, %4 : vector<128x20xf32>
    %cst_5 = arith.constant 0.000000e+00 : f32
    %6 = vector.broadcast %cst_5 : f32 to vector<128x20xf32>
    %7 = arith.maximumf %5, %6 : vector<128x20xf32>
    %c0_6 = arith.constant 0 : index
    %c0_7 = arith.constant 0 : index
    %8 = vector.load %arg4[%c0_6, %c0_7] : memref<128x20xf32, #tpu.memory_space<vmem>>, vector<128x20xf32>
    tpu.vector_store %arg4[%c0_6, %c0_7], %7 {strides = array<i32>} : memref<128x20xf32, #tpu.memory_space<vmem>>, vector<128x20xf32>,
    return
  }
  func.func @transform_0(%arg0: i32) -> (i32, i32) {
    %c0_i32 = arith.constant 0 : i32
    %c0_i32_0 = arith.constant 0 : i32
    return %arg0, %c0_i32 : i32, i32
  }
  func.func @transform_1(%arg0: i32) -> (i32, i32) {
    %c0_i32 = arith.constant 0 : i32
    %c0_i32_0 = arith.constant 0 : i32
    %c0_i32_1 = arith.constant 0 : i32
    return %c0_i32, %c0_i32_0 : i32, i32
  }
  func.func @transform_2(%arg0: i32) -> (i32, i32) {
    %c0_i32 = arith.constant 0 : i32
    %c0_i32_0 = arith.constant 0 : i32
    %c0_i32_1 = arith.constant 0 : i32
    return %c0_i32, %c0_i32_0 : i32, i32
  }
  func.func @transform_3(%arg0: i32) -> (i32, i32) {
    %c0_i32 = arith.constant 0 : i32
    %c0_i32_0 = arith.constant 0 : i32
    return %arg0, %c0_i32 : i32, i32
  }
}

module attributes {stable_mosaic.version = 11 : i64} {
  func.func @_matmul_bias_kernel(%arg0: i32, %arg1: memref<32x180xf32, #tpu.memory_space<vmem>>, %arg2: memref<180x16xf32, #tpu.memory_space<vmem>>, %arg3: memref<1x16xf32, #tpu.memory_space<vmem>>, %arg4: memref<32x16xf32, #tpu.memory_space<vmem>>) attributes {dimension_semantics = [#tpu.dimension_semantics<parallel>], iteration_bounds = array<i64: 1>, scalar_prefetch = 0 : i64, scratch_operands = 0 : i64, tpu.core_type = #tpu.core_type<tc>, window_params = [{transform_indices = @transform_0, window_bounds = array<i64: 32, 180>}, {pipeline_mode = #tpu.pipeline_mode<synchronous>, transform_indices = @transform_1, window_bounds = array<i64: 180, 16>}, {pipeline_mode = #tpu.pipeline_mode<synchronous>, transform_indices = @transform_2, window_bounds = array<i64: 1, 16>}, {transform_indices = @transform_3, window_bounds = array<i64: 32, 16>}]} {
    %c0 = arith.constant 0 : index
    %c0_0 = arith.constant 0 : index
    %0 = vector.load %arg1[%c0, %c0_0] : memref<32x180xf32, #tpu.memory_space<vmem>>, vector<32x180xf32>
    %c0_1 = arith.constant 0 : index
    %c0_2 = arith.constant 0 : index
    %1 = vector.load %arg2[%c0_1, %c0_2] : memref<180x16xf32, #tpu.memory_space<vmem>>, vector<180x16xf32>
    %cst = arith.constant dense<0.000000e+00> : vector<32x16xf32>
    %2 = tpu.matmul %0, %1, %cst {dimension_numbers = #tpu.dot_dimension_numbers<[1], [0], [0], [1], [0, 0, 1, 1], [], []>} : vector<32x180xf32>, vector<180x16xf32>, vector<32x16xf32> -> vector<32x16xf32>
    %c0_3 = arith.constant 0 : index
    %c0_4 = arith.constant 0 : index
    %3 = vector.load %arg3[%c0_3, %c0_4] : memref<1x16xf32, #tpu.memory_space<vmem>>, vector<1x16xf32>
    %4 = vector.broadcast %3 : vector<1x16xf32> to vector<32x16xf32>
    %5 = arith.addf %2, %4 : vector<32x16xf32>
    %c0_5 = arith.constant 0 : index
    %c0_6 = arith.constant 0 : index
    %6 = vector.load %arg4[%c0_5, %c0_6] : memref<32x16xf32, #tpu.memory_space<vmem>>, vector<32x16xf32>
    tpu.vector_store %arg4[%c0_5, %c0_6], %5 {strides = array<i32>} : memref<32x16xf32, #tpu.memory_space<vmem>>, vector<32x16xf32>,
    return
  }
  func.func @transform_0(%arg0: i32) -> (i32, i32) {
    %c0_i32 = arith.constant 0 : i32
    %c0_i32_0 = arith.constant 0 : i32
    return %arg0, %c0_i32 : i32, i32
  }
  func.func @transform_1(%arg0: i32) -> (i32, i32) {
    %c0_i32 = arith.constant 0 : i32
    %c0_i32_0 = arith.constant 0 : i32
    %c0_i32_1 = arith.constant 0 : i32
    return %c0_i32, %c0_i32_0 : i32, i32
  }
  func.func @transform_2(%arg0: i32) -> (i32, i32) {
    %c0_i32 = arith.constant 0 : i32
    %c0_i32_0 = arith.constant 0 : i32
    %c0_i32_1 = arith.constant 0 : i32
    return %c0_i32, %c0_i32_0 : i32, i32
  }
  func.func @transform_3(%arg0: i32) -> (i32, i32) {
    %c0_i32 = arith.constant 0 : i32
    %c0_i32_0 = arith.constant 0 : i32
    return %arg0, %c0_i32 : i32, i32
  }
}

module attributes {stable_mosaic.version = 11 : i64} {
  func.func @_matmul_bias_kernel(%arg0: i32, %arg1: memref<32x400xf32, #tpu.memory_space<vmem>>, %arg2: memref<400x24xf32, #tpu.memory_space<vmem>>, %arg3: memref<1x24xf32, #tpu.memory_space<vmem>>, %arg4: memref<32x24xf32, #tpu.memory_space<vmem>>) attributes {dimension_semantics = [#tpu.dimension_semantics<parallel>], iteration_bounds = array<i64: 1>, scalar_prefetch = 0 : i64, scratch_operands = 0 : i64, tpu.core_type = #tpu.core_type<tc>, window_params = [{transform_indices = @transform_0, window_bounds = array<i64: 32, 400>}, {pipeline_mode = #tpu.pipeline_mode<synchronous>, transform_indices = @transform_1, window_bounds = array<i64: 400, 24>}, {pipeline_mode = #tpu.pipeline_mode<synchronous>, transform_indices = @transform_2, window_bounds = array<i64: 1, 24>}, {transform_indices = @transform_3, window_bounds = array<i64: 32, 24>}]} {
    %c0 = arith.constant 0 : index
    %c0_0 = arith.constant 0 : index
    %0 = vector.load %arg1[%c0, %c0_0] : memref<32x400xf32, #tpu.memory_space<vmem>>, vector<32x400xf32>
    %c0_1 = arith.constant 0 : index
    %c0_2 = arith.constant 0 : index
    %1 = vector.load %arg2[%c0_1, %c0_2] : memref<400x24xf32, #tpu.memory_space<vmem>>, vector<400x24xf32>
    %cst = arith.constant dense<0.000000e+00> : vector<32x24xf32>
    %2 = tpu.matmul %0, %1, %cst {dimension_numbers = #tpu.dot_dimension_numbers<[1], [0], [0], [1], [0, 0, 1, 1], [], []>} : vector<32x400xf32>, vector<400x24xf32>, vector<32x24xf32> -> vector<32x24xf32>
    %c0_3 = arith.constant 0 : index
    %c0_4 = arith.constant 0 : index
    %3 = vector.load %arg3[%c0_3, %c0_4] : memref<1x24xf32, #tpu.memory_space<vmem>>, vector<1x24xf32>
    %4 = vector.broadcast %3 : vector<1x24xf32> to vector<32x24xf32>
    %5 = arith.addf %2, %4 : vector<32x24xf32>
    %c0_5 = arith.constant 0 : index
    %c0_6 = arith.constant 0 : index
    %6 = vector.load %arg4[%c0_5, %c0_6] : memref<32x24xf32, #tpu.memory_space<vmem>>, vector<32x24xf32>
    tpu.vector_store %arg4[%c0_5, %c0_6], %5 {strides = array<i32>} : memref<32x24xf32, #tpu.memory_space<vmem>>, vector<32x24xf32>,
    return
  }
  func.func @transform_0(%arg0: i32) -> (i32, i32) {
    %c0_i32 = arith.constant 0 : i32
    %c0_i32_0 = arith.constant 0 : i32
    return %arg0, %c0_i32 : i32, i32
  }
  func.func @transform_1(%arg0: i32) -> (i32, i32) {
    %c0_i32 = arith.constant 0 : i32
    %c0_i32_0 = arith.constant 0 : i32
    %c0_i32_1 = arith.constant 0 : i32
    return %c0_i32, %c0_i32_0 : i32, i32
  }
  func.func @transform_2(%arg0: i32) -> (i32, i32) {
    %c0_i32 = arith.constant 0 : i32
    %c0_i32_0 = arith.constant 0 : i32
    %c0_i32_1 = arith.constant 0 : i32
    return %c0_i32, %c0_i32_0 : i32, i32
  }
  func.func @transform_3(%arg0: i32) -> (i32, i32) {
    %c0_i32 = arith.constant 0 : i32
    %c0_i32_0 = arith.constant 0 : i32
    return %arg0, %c0_i32 : i32, i32
  }
}

module attributes {stable_mosaic.version = 11 : i64} {
  func.func @_matmul_bias_kernel(%arg0: i32, %arg1: memref<32x20xf32, #tpu.memory_space<vmem>>, %arg2: memref<20x56xf32, #tpu.memory_space<vmem>>, %arg3: memref<1x56xf32, #tpu.memory_space<vmem>>, %arg4: memref<32x56xf32, #tpu.memory_space<vmem>>) attributes {dimension_semantics = [#tpu.dimension_semantics<parallel>], iteration_bounds = array<i64: 1>, scalar_prefetch = 0 : i64, scratch_operands = 0 : i64, tpu.core_type = #tpu.core_type<tc>, window_params = [{transform_indices = @transform_0, window_bounds = array<i64: 32, 20>}, {pipeline_mode = #tpu.pipeline_mode<synchronous>, transform_indices = @transform_1, window_bounds = array<i64: 20, 56>}, {pipeline_mode = #tpu.pipeline_mode<synchronous>, transform_indices = @transform_2, window_bounds = array<i64: 1, 56>}, {transform_indices = @transform_3, window_bounds = array<i64: 32, 56>}]} {
    %c0 = arith.constant 0 : index
    %c0_0 = arith.constant 0 : index
    %0 = vector.load %arg1[%c0, %c0_0] : memref<32x20xf32, #tpu.memory_space<vmem>>, vector<32x20xf32>
    %c0_1 = arith.constant 0 : index
    %c0_2 = arith.constant 0 : index
    %1 = vector.load %arg2[%c0_1, %c0_2] : memref<20x56xf32, #tpu.memory_space<vmem>>, vector<20x56xf32>
    %cst = arith.constant dense<0.000000e+00> : vector<32x56xf32>
    %2 = tpu.matmul %0, %1, %cst {dimension_numbers = #tpu.dot_dimension_numbers<[1], [0], [0], [1], [0, 0, 1, 1], [], []>} : vector<32x20xf32>, vector<20x56xf32>, vector<32x56xf32> -> vector<32x56xf32>
    %c0_3 = arith.constant 0 : index
    %c0_4 = arith.constant 0 : index
    %3 = vector.load %arg3[%c0_3, %c0_4] : memref<1x56xf32, #tpu.memory_space<vmem>>, vector<1x56xf32>
    %4 = vector.broadcast %3 : vector<1x56xf32> to vector<32x56xf32>
    %5 = arith.addf %2, %4 : vector<32x56xf32>
    %c0_5 = arith.constant 0 : index
    %c0_6 = arith.constant 0 : index
    %6 = vector.load %arg4[%c0_5, %c0_6] : memref<32x56xf32, #tpu.memory_space<vmem>>, vector<32x56xf32>
    tpu.vector_store %arg4[%c0_5, %c0_6], %5 {strides = array<i32>} : memref<32x56xf32, #tpu.memory_space<vmem>>, vector<32x56xf32>,
    return
  }
  func.func @transform_0(%arg0: i32) -> (i32, i32) {
    %c0_i32 = arith.constant 0 : i32
    %c0_i32_0 = arith.constant 0 : i32
    return %arg0, %c0_i32 : i32, i32
  }
  func.func @transform_1(%arg0: i32) -> (i32, i32) {
    %c0_i32 = arith.constant 0 : i32
    %c0_i32_0 = arith.constant 0 : i32
    %c0_i32_1 = arith.constant 0 : i32
    return %c0_i32, %c0_i32_0 : i32, i32
  }
  func.func @transform_2(%arg0: i32) -> (i32, i32) {
    %c0_i32 = arith.constant 0 : i32
    %c0_i32_0 = arith.constant 0 : i32
    %c0_i32_1 = arith.constant 0 : i32
    return %c0_i32, %c0_i32_0 : i32, i32
  }
  func.func @transform_3(%arg0: i32) -> (i32, i32) {
    %c0_i32 = arith.constant 0 : i32
    %c0_i32_0 = arith.constant 0 : i32
    return %arg0, %c0_i32 : i32, i32
  }
}

module attributes {stable_mosaic.version = 11 : i64} {
  func.func @_matmul_bias_kernel(%arg0: i32, %arg1: memref<32x144xf32, #tpu.memory_space<vmem>>, %arg2: memref<144x24xf32, #tpu.memory_space<vmem>>, %arg3: memref<1x24xf32, #tpu.memory_space<vmem>>, %arg4: memref<32x24xf32, #tpu.memory_space<vmem>>) attributes {dimension_semantics = [#tpu.dimension_semantics<parallel>], iteration_bounds = array<i64: 1>, scalar_prefetch = 0 : i64, scratch_operands = 0 : i64, tpu.core_type = #tpu.core_type<tc>, window_params = [{transform_indices = @transform_0, window_bounds = array<i64: 32, 144>}, {pipeline_mode = #tpu.pipeline_mode<synchronous>, transform_indices = @transform_1, window_bounds = array<i64: 144, 24>}, {pipeline_mode = #tpu.pipeline_mode<synchronous>, transform_indices = @transform_2, window_bounds = array<i64: 1, 24>}, {transform_indices = @transform_3, window_bounds = array<i64: 32, 24>}]} {
    %c0 = arith.constant 0 : index
    %c0_0 = arith.constant 0 : index
    %0 = vector.load %arg1[%c0, %c0_0] : memref<32x144xf32, #tpu.memory_space<vmem>>, vector<32x144xf32>
    %c0_1 = arith.constant 0 : index
    %c0_2 = arith.constant 0 : index
    %1 = vector.load %arg2[%c0_1, %c0_2] : memref<144x24xf32, #tpu.memory_space<vmem>>, vector<144x24xf32>
    %cst = arith.constant dense<0.000000e+00> : vector<32x24xf32>
    %2 = tpu.matmul %0, %1, %cst {dimension_numbers = #tpu.dot_dimension_numbers<[1], [0], [0], [1], [0, 0, 1, 1], [], []>} : vector<32x144xf32>, vector<144x24xf32>, vector<32x24xf32> -> vector<32x24xf32>
    %c0_3 = arith.constant 0 : index
    %c0_4 = arith.constant 0 : index
    %3 = vector.load %arg3[%c0_3, %c0_4] : memref<1x24xf32, #tpu.memory_space<vmem>>, vector<1x24xf32>
    %4 = vector.broadcast %3 : vector<1x24xf32> to vector<32x24xf32>
    %5 = arith.addf %2, %4 : vector<32x24xf32>
    %c0_5 = arith.constant 0 : index
    %c0_6 = arith.constant 0 : index
    %6 = vector.load %arg4[%c0_5, %c0_6] : memref<32x24xf32, #tpu.memory_space<vmem>>, vector<32x24xf32>
    tpu.vector_store %arg4[%c0_5, %c0_6], %5 {strides = array<i32>} : memref<32x24xf32, #tpu.memory_space<vmem>>, vector<32x24xf32>,
    return
  }
  func.func @transform_0(%arg0: i32) -> (i32, i32) {
    %c0_i32 = arith.constant 0 : i32
    %c0_i32_0 = arith.constant 0 : i32
    return %arg0, %c0_i32 : i32, i32
  }
  func.func @transform_1(%arg0: i32) -> (i32, i32) {
    %c0_i32 = arith.constant 0 : i32
    %c0_i32_0 = arith.constant 0 : i32
    %c0_i32_1 = arith.constant 0 : i32
    return %c0_i32, %c0_i32_0 : i32, i32
  }
  func.func @transform_2(%arg0: i32) -> (i32, i32) {
    %c0_i32 = arith.constant 0 : i32
    %c0_i32_0 = arith.constant 0 : i32
    %c0_i32_1 = arith.constant 0 : i32
    return %c0_i32, %c0_i32_0 : i32, i32
  }
  func.func @transform_3(%arg0: i32) -> (i32, i32) {
    %c0_i32 = arith.constant 0 : i32
    %c0_i32_0 = arith.constant 0 : i32
    return %arg0, %c0_i32 : i32, i32
  }
}

module attributes {stable_mosaic.version = 11 : i64} {
  func.func @_matmul_bias_kernel(%arg0: i32, %arg1: memref<32x216xf32, #tpu.memory_space<vmem>>, %arg2: memref<216x24xf32, #tpu.memory_space<vmem>>, %arg3: memref<1x24xf32, #tpu.memory_space<vmem>>, %arg4: memref<32x24xf32, #tpu.memory_space<vmem>>) attributes {dimension_semantics = [#tpu.dimension_semantics<parallel>], iteration_bounds = array<i64: 1>, scalar_prefetch = 0 : i64, scratch_operands = 0 : i64, tpu.core_type = #tpu.core_type<tc>, window_params = [{transform_indices = @transform_0, window_bounds = array<i64: 32, 216>}, {pipeline_mode = #tpu.pipeline_mode<synchronous>, transform_indices = @transform_1, window_bounds = array<i64: 216, 24>}, {pipeline_mode = #tpu.pipeline_mode<synchronous>, transform_indices = @transform_2, window_bounds = array<i64: 1, 24>}, {transform_indices = @transform_3, window_bounds = array<i64: 32, 24>}]} {
    %c0 = arith.constant 0 : index
    %c0_0 = arith.constant 0 : index
    %0 = vector.load %arg1[%c0, %c0_0] : memref<32x216xf32, #tpu.memory_space<vmem>>, vector<32x216xf32>
    %c0_1 = arith.constant 0 : index
    %c0_2 = arith.constant 0 : index
    %1 = vector.load %arg2[%c0_1, %c0_2] : memref<216x24xf32, #tpu.memory_space<vmem>>, vector<216x24xf32>
    %cst = arith.constant dense<0.000000e+00> : vector<32x24xf32>
    %2 = tpu.matmul %0, %1, %cst {dimension_numbers = #tpu.dot_dimension_numbers<[1], [0], [0], [1], [0, 0, 1, 1], [], []>} : vector<32x216xf32>, vector<216x24xf32>, vector<32x24xf32> -> vector<32x24xf32>
    %c0_3 = arith.constant 0 : index
    %c0_4 = arith.constant 0 : index
    %3 = vector.load %arg3[%c0_3, %c0_4] : memref<1x24xf32, #tpu.memory_space<vmem>>, vector<1x24xf32>
    %4 = vector.broadcast %3 : vector<1x24xf32> to vector<32x24xf32>
    %5 = arith.addf %2, %4 : vector<32x24xf32>
    %c0_5 = arith.constant 0 : index
    %c0_6 = arith.constant 0 : index
    %6 = vector.load %arg4[%c0_5, %c0_6] : memref<32x24xf32, #tpu.memory_space<vmem>>, vector<32x24xf32>
    tpu.vector_store %arg4[%c0_5, %c0_6], %5 {strides = array<i32>} : memref<32x24xf32, #tpu.memory_space<vmem>>, vector<32x24xf32>,
    return
  }
  func.func @transform_0(%arg0: i32) -> (i32, i32) {
    %c0_i32 = arith.constant 0 : i32
    %c0_i32_0 = arith.constant 0 : i32
    return %arg0, %c0_i32 : i32, i32
  }
  func.func @transform_1(%arg0: i32) -> (i32, i32) {
    %c0_i32 = arith.constant 0 : i32
    %c0_i32_0 = arith.constant 0 : i32
    %c0_i32_1 = arith.constant 0 : i32
    return %c0_i32, %c0_i32_0 : i32, i32
  }
  func.func @transform_2(%arg0: i32) -> (i32, i32) {
    %c0_i32 = arith.constant 0 : i32
    %c0_i32_0 = arith.constant 0 : i32
    %c0_i32_1 = arith.constant 0 : i32
    return %c0_i32, %c0_i32_0 : i32, i32
  }
  func.func @transform_3(%arg0: i32) -> (i32, i32) {
    %c0_i32 = arith.constant 0 : i32
    %c0_i32_0 = arith.constant 0 : i32
    return %arg0, %c0_i32 : i32, i32
  }
}

module attributes {stable_mosaic.version = 11 : i64} {
  func.func @_matmul_bias_kernel(%arg0: i32, %arg1: memref<2x1408xf32, #tpu.memory_space<vmem>>, %arg2: memref<1408x10xf32, #tpu.memory_space<vmem>>, %arg3: memref<1x10xf32, #tpu.memory_space<vmem>>, %arg4: memref<2x10xf32, #tpu.memory_space<vmem>>) attributes {dimension_semantics = [#tpu.dimension_semantics<parallel>], iteration_bounds = array<i64: 1>, scalar_prefetch = 0 : i64, scratch_operands = 0 : i64, tpu.core_type = #tpu.core_type<tc>, window_params = [{transform_indices = @transform_0, window_bounds = array<i64: 2, 1408>}, {pipeline_mode = #tpu.pipeline_mode<synchronous>, transform_indices = @transform_1, window_bounds = array<i64: 1408, 10>}, {pipeline_mode = #tpu.pipeline_mode<synchronous>, transform_indices = @transform_2, window_bounds = array<i64: 1, 10>}, {transform_indices = @transform_3, window_bounds = array<i64: 2, 10>}]} {
    %c0 = arith.constant 0 : index
    %c0_0 = arith.constant 0 : index
    %0 = vector.load %arg1[%c0, %c0_0] : memref<2x1408xf32, #tpu.memory_space<vmem>>, vector<2x1408xf32>
    %c0_1 = arith.constant 0 : index
    %c0_2 = arith.constant 0 : index
    %1 = vector.load %arg2[%c0_1, %c0_2] : memref<1408x10xf32, #tpu.memory_space<vmem>>, vector<1408x10xf32>
    %cst = arith.constant dense<0.000000e+00> : vector<2x10xf32>
    %2 = tpu.matmul %0, %1, %cst {dimension_numbers = #tpu.dot_dimension_numbers<[1], [0], [0], [1], [0, 0, 1, 1], [], []>} : vector<2x1408xf32>, vector<1408x10xf32>, vector<2x10xf32> -> vector<2x10xf32>
    %c0_3 = arith.constant 0 : index
    %c0_4 = arith.constant 0 : index
    %3 = vector.load %arg3[%c0_3, %c0_4] : memref<1x10xf32, #tpu.memory_space<vmem>>, vector<1x10xf32>
    %4 = vector.broadcast %3 : vector<1x10xf32> to vector<2x10xf32>
    %5 = arith.addf %2, %4 : vector<2x10xf32>
    %c0_5 = arith.constant 0 : index
    %c0_6 = arith.constant 0 : index
    %6 = vector.load %arg4[%c0_5, %c0_6] : memref<2x10xf32, #tpu.memory_space<vmem>>, vector<2x10xf32>
    tpu.vector_store %arg4[%c0_5, %c0_6], %5 {strides = array<i32>} : memref<2x10xf32, #tpu.memory_space<vmem>>, vector<2x10xf32>,
    return
  }
  func.func @transform_0(%arg0: i32) -> (i32, i32) {
    %c0_i32 = arith.constant 0 : i32
    %c0_i32_0 = arith.constant 0 : i32
    return %arg0, %c0_i32 : i32, i32
  }
  func.func @transform_1(%arg0: i32) -> (i32, i32) {
    %c0_i32 = arith.constant 0 : i32
    %c0_i32_0 = arith.constant 0 : i32
    %c0_i32_1 = arith.constant 0 : i32
    return %c0_i32, %c0_i32_0 : i32, i32
  }
  func.func @transform_2(%arg0: i32) -> (i32, i32) {
    %c0_i32 = arith.constant 0 : i32
    %c0_i32_0 = arith.constant 0 : i32
    %c0_i32_1 = arith.constant 0 : i32
    return %c0_i32, %c0_i32_0 : i32, i32
  }
  func.func @transform_3(%arg0: i32) -> (i32, i32) {
    %c0_i32 = arith.constant 0 : i32
    %c0_i32_0 = arith.constant 0 : i32
    return %arg0, %c0_i32 : i32, i32
  }
}

</mosaic_0001>

<llo_original>
// kernel: net_forward.13
$region0: #{net_forward.13}
  #allocation0 [shape = 'u32[]', space=smem, size = 0x4, offset = 0x4, fixed_abs, tag = 'smem constant byte address 0x4 - core index']
  #allocation1 [shape = 'u32[72,128]{1,0:T(1,128)}', space=vmem, size = 0x9000, scoped, tag = 'internal scratch']
  %s0 = inlined_call_operand.vmem [shape: f32[1152,25], index: 0, kind: input, shape index: {}]
  %s1 = inlined_call_operand.vmem [shape: f32[25,10], index: 1, kind: input, shape index: {}]
  %s2 = inlined_call_operand.vmem [shape: f32[1,10], index: 2, kind: input, shape index: {}]
  %s3 = inlined_call_operand.vmem [shape: f32[1152,10], index: 3, kind: output, shape index: {}]
  %s4 = sld [smem:[#allocation0]]
  $region45: #{net_forward.13} parent=0
    _
  %s6 = ssub.s32 1, %s4
  %s7 = scalar_select 0, %s6, %s4
  loop: start=0, step=1, limit=11
  $region2: #{net_forward.13} parent=0 // loop_pre_header
    _
  $region3: #{net_forward.13} parent=0 // loop_header
    %s9 = sphi 0, %s13
    %p10 = scmp.ge.s32.totalorder %s9, 11
    %s19 = sphi 0, %s21
    %s22 = sphi 0, %s19
    %s23 = sphi 0, %s22
    %s39 = sphi 0, %s23
    %s43 = sphi 0, %s43
    %s45 = sphi 0, %s43
    %s46 = sphi 0, %s45
    %s60 = sphi 0, %s46
    %s64 = sphi 0, %s64
    %s66 = sphi 0, %s64
    %s67 = sphi 0, %s66
    %s81 = sphi 0, %s67
    %s87 = sphi 0, %s89
    %s90 = sphi 0, %s87
    %s91 = sphi 0, %s90
    %s107 = sphi 0, %s91
  $region4: #{net_forward.13} parent=0 // loop_header_branch
    %12 = sbr.rel (%p10) target = $region8
  $region5: #{net_forward.13} parent=0 // loop_body
    %s14 = ssub.s32 %s9, 1
    %s15 = ssub.s32 %s9, 2
    %s16 = sadd.s32 %s9, 1
    %s17 = ssub.s32 %s9, %s16
    %p18 = scmp.eq.s32.totalorder %s17, 0
    %s20 = sadd.s32 %s19, 1
    %s21 = scalar_select %p18, %s19, %s20
    %p24 = pneg %p18
    %p25 = scmp.eq.s32.totalorder %s9, 8
    %p26 = por %p24, %p25
    %p27 = scmp.ne.s32.totalorder %s19, %s22
    %p28 = scmp.eq.s32.totalorder %s9, 0
    %p29 = por %p27, %p28
    %p30 = scmp.ne.s32.totalorder %s19, %s22
    %p31 = scmp.eq.s32.totalorder %s14, 8
    %p32 = por %p30, %p31
    %p33 = scmp.ne.s32.totalorder %s22, %s23
    %p34 = scmp.eq.s32.totalorder %s14, 0
    %p35 = por %p33, %p34
    %p36 = scmp.ne.s32.totalorder %s22, %s23
    %p37 = scmp.eq.s32.totalorder %s15, 8
    %p38 = por %p36, %p37
    %p40 = scmp.ne.s32.totalorder %s23, %s39
    %p41 = scmp.eq.s32.totalorder %s15, 0
    %p42 = por %p40, %p41
    %s44 = sadd.s32 %s43, 1
    %p47 = scmp.eq.s32.totalorder %s9, 8
    %p48 = scmp.ne.s32.totalorder %s43, %s45
    %p49 = scmp.eq.s32.totalorder %s9, 0
    %p50 = por %p48, %p49
    %p51 = scmp.ne.s32.totalorder %s43, %s45
    %p52 = scmp.eq.s32.totalorder %s14, 8
    %p53 = por %p51, %p52
    %p54 = scmp.ne.s32.totalorder %s45, %s46
    %p55 = scmp.eq.s32.totalorder %s14, 0
    %p56 = por %p54, %p55
    %p57 = scmp.ne.s32.totalorder %s45, %s46
    %p58 = scmp.eq.s32.totalorder %s15, 8
    %p59 = por %p57, %p58
    %p61 = scmp.ne.s32.totalorder %s46, %s60
    %p62 = scmp.eq.s32.totalorder %s15, 0
    %p63 = por %p61, %p62
    %s65 = sadd.s32 %s64, 1
    %p68 = scmp.eq.s32.totalorder %s9, 8
    %p69 = scmp.ne.s32.totalorder %s64, %s66
    %p70 = scmp.eq.s32.totalorder %s9, 0
    %p71 = por %p69, %p70
    %p72 = scmp.ne.s32.totalorder %s64, %s66
    %p73 = scmp.eq.s32.totalorder %s14, 8
    %p74 = por %p72, %p73
    %p75 = scmp.ne.s32.totalorder %s66, %s67
    %p76 = scmp.eq.s32.totalorder %s14, 0
    %p77 = por %p75, %p76
    %p78 = scmp.ne.s32.totalorder %s66, %s67
    %p79 = scmp.eq.s32.totalorder %s15, 8
    %p80 = por %p78, %p79
    %p82 = scmp.ne.s32.totalorder %s67, %s81
    %p83 = scmp.eq.s32.totalorder %s15, 0
    %p84 = por %p82, %p83
    %s85 = ssub.s32 %s9, %s16
    %p86 = scmp.eq.s32.totalorder %s85, 0
    %s88 = sadd.s32 %s87, 1
    %s89 = scalar_select %p86, %s87, %s88
    %p92 = pneg %p86
    %p93 = scmp.eq.s32.totalorder %s9, 8
    %p94 = por %p92, %p93
    %p95 = scmp.ne.s32.totalorder %s87, %s90
    %p96 = scmp.eq.s32.totalorder %s9, 0
    %p97 = por %p95, %p96
    %p98 = scmp.ne.s32.totalorder %s87, %s90
    %p99 = scmp.eq.s32.totalorder %s14, 8
    %p100 = por %p98, %p99
    %p101 = scmp.ne.s32.totalorder %s90, %s91
    %p102 = scmp.eq.s32.totalorder %s14, 0
    %p103 = por %p101, %p102
    %p104 = scmp.ne.s32.totalorder %s90, %s91
    %p105 = scmp.eq.s32.totalorder %s15, 8
    %p106 = por %p104, %p105
    %p108 = scmp.ne.s32.totalorder %s91, %s107
    %p109 = scmp.eq.s32.totalorder %s15, 0
    %p110 = por %p108, %p109
    %p111 = scmp.le.s32.totalorder 1, %s9
    %p112 = scmp.lt.s32.totalorder %s9, 10
    %p113 = pnand %p111, %p112
    %p114 = pneg %p113
    // Predicated region
    $region9: #{net_forward.13} parent=5 // pred_check
      _
    $region10: #{net_forward.13} parent=5 // pred_check_branch
      %116 = sbr.rel (%p113) target = $region12
    $region11: #{net_forward.13} parent=5 // pred_region
      %s117 = ssub.s32 %s9, 1
      // Predicated region
      $region13: #{net_forward.13} parent=11 // pred_check
        %p118 = pneg %p56
      $region14: #{net_forward.13} parent=11 // pred_check_branch
        %120 = sbr.rel (%p118) target = $region16
      $region15: #{net_forward.13} parent=11 // pred_region
        _
      $region16: #{net_forward.13} parent=11 // pred_fallthru
        _
      // Predicated region
      $region17: #{net_forward.13} parent=11 // pred_check
        %p121 = pneg %p77
      $region18: #{net_forward.13} parent=11 // pred_check_branch
        %123 = sbr.rel (%p121) target = $region20
      $region19: #{net_forward.13} parent=11 // pred_region
        _
      $region20: #{net_forward.13} parent=11 // pred_fallthru
        _
    $region12: #{net_forward.13} parent=5 // pred_fallthru
      _
    %p124 = scmp.lt.s32.totalorder %s9, 9
    // Predicated region
    $region21: #{net_forward.13} parent=5 // pred_check
      %p125 = pneg %p124
    $region22: #{net_forward.13} parent=5 // pred_check_branch
      %127 = sbr.rel (%p125) target = $region24
    $region23: #{net_forward.13} parent=5 // pred_region
      // Predicated region
      $region25: #{net_forward.13} parent=23 // pred_check
        %p128 = pneg %p29
      $region26: #{net_forward.13} parent=23 // pred_check_branch
        %130 = sbr.rel (%p128) target = $region28
      $region27: #{net_forward.13} parent=23 // pred_region
        %s131 = smul.u32 16, %s9
        %p132 = scmp.lt.s32.totalorder %s131, 143
        %s133 = scalar_select %p132, %s131, 143
        %s134 = smul.addr %s133, 8
        %s135 = scalar_lea.vmem %s0, %s134
        %s136 = smul.u32 16, %s9
      $region28: #{net_forward.13} parent=23 // pred_fallthru
        _
    $region24: #{net_forward.13} parent=5 // pred_fallthru
      _
    %p137 = scmp.le.s32.totalorder 1, %s9
    %p138 = scmp.lt.s32.totalorder %s9, 10
    %p139 = pnand %p137, %p138
    %p140 = pneg %p139
    // Predicated region
    $region29: #{net_forward.13} parent=5 // pred_check
      _
    $region30: #{net_forward.13} parent=5 // pred_check_branch
      %142 = sbr.rel (%p139) target = $region32
    $region31: #{net_forward.13} parent=5 // pred_region
      %s143 = ssub.s32 %s9, 1
      %s144 = smul.u32 16, %s14
      %p145 = scmp.lt.s32.totalorder %s144, 143
      %s146 = scalar_select %p145, %s144, 143
      %s147 = smul.addr %s146, 8
      %s148 = scalar_lea.vmem %s0, %s147
      %p149 = pneg %p35
      %p150 = pneg %p32
      %p151 = pneg %p56
      %p152 = pneg %p53
      %p153 = pneg %p77
      %p154 = pneg %p74
      %p155 = pneg %p103
      %p156 = pneg %p100
      %s157 = smul.u32 16, %s14
      %p158 = scmp.lt.s32.totalorder %s157, 143
      %s159 = scalar_select %p158, %s157, 143
      %s160 = smul.addr %s159, 8
      %s161 = scalar_lea.vmem %s3, %s160
      %s162 = smul.u32 16, %s14
      %p163 = scmp.lt.s32.totalorder %s162, 143
      %s164 = scalar_select %p163, %s162, 143
      %s165 = smul.addr %s164, 8
      %s166 = scalar_lea.vmem %s0, %s165
      %s167 = smul.u32 16, %s14
      %s168 = smul.u32 16, %s14
      %p169 = scmp.lt.s32.totalorder %s168, 143
      %s170 = scalar_select %p169, %s168, 143
      %s171 = smul.addr %s170, 8
      %s172 = scalar_lea.vmem %s3, %s171
      %s173 = smul.u32 16, %s14
      %v174 = vld [vmem:[%s166] sm:$0xff]
      %v175 = vld [vmem:[%s166 + $0x8] sm:$0xff]
      %v176 = vld [vmem:[%s166 + $0x10] sm:$0xff]
      %v177 = vld [vmem:[%s166 + $0x18] sm:$0xff]
      %v178 = vld [vmem:[%s166 + $0x20] sm:$0xff]
      %v179 = vld [vmem:[%s166 + $0x28] sm:$0xff]
      %v180 = vld [vmem:[%s166 + $0x30] sm:$0xff]
      %v181 = vld [vmem:[%s166 + $0x38] sm:$0xff]
      %v182 = vld [vmem:[%s166 + $0x40] sm:$0xff]
      %v183 = vld [vmem:[%s166 + $0x48] sm:$0xff]
      %v184 = vld [vmem:[%s166 + $0x50] sm:$0xff]
      %v185 = vld [vmem:[%s166 + $0x58] sm:$0xff]
      %v186 = vld [vmem:[%s166 + $0x60] sm:$0xff]
      %v187 = vld [vmem:[%s166 + $0x68] sm:$0xff]
      %v188 = vld [vmem:[%s166 + $0x70] sm:$0xff]
      %v189 = vld [vmem:[%s166 + $0x78] sm:$0xff]
      %v190 = vld [vmem:[%s1] sm:$0xff]
      %v191 = vld [vmem:[%s1 + $0x8] sm:$0xff]
      %v192 = vld [vmem:[%s1 + $0x10] sm:$0xff]
      %v193 = vld [vmem:[%s1 + $0x18] sm:$0x1]
      %v194 = vld [vmem:[%s2] sm:$0x1]
      %v196 = vperm.slane %v194, 0
      %vm198 = vcmask 203776
      %v200 = vsel %vm198, %v174, 0
      %v203 = vsel %vm198, %v175, 0
      %v206 = vsel %vm198, %v176, 0
      %v209 = vsel %vm198, %v177, 0
      %v212 = vsel %vm198, %v178, 0
      %v215 = vsel %vm198, %v179, 0
      %v218 = vsel %vm198, %v180, 0
      %v221 = vsel %vm198, %v181, 0
      %v224 = vsel %vm198, %v182, 0
      %v227 = vsel %vm198, %v183, 0
      %v230 = vsel %vm198, %v184, 0
      %v233 = vsel %vm198, %v185, 0
      %v236 = vsel %vm198, %v186, 0
      %v239 = vsel %vm198, %v187, 0
      %v242 = vsel %vm198, %v188, 0
      %v245 = vsel %vm198, %v189, 0
      %vm247 = vcmask 1040384
      %v249 = vsel %vm247, %v193, 0
      %251 = vmatpush.msra.mxu0 0.0
      %252 = vmatpush.msra.mxu0 0.0
      %253 = vmatpush.msra.mxu0 0.0
      %254 = vmatpush.msra.mxu0 0.0
      %255 = vmatpush.msra.mxu0 0.0
      %256 = vmatpush.msra.mxu0 0.0
      %257 = vmatpush.msra.mxu0 0.0
      %258 = vmatpush.msra.mxu0 0.0
      %259 = vmatpush.msra.mxu0 0.0
      %260 = vmatpush.msra.mxu0 0.0
      %261 = vmatpush.msra.mxu0 0.0
      %262 = vmatpush.msra.mxu0 0.0
      %263 = vmatpush.msra.mxu0 %v249
      %264 = vmatpush.msra.mxu0 %v192
      %265 = vmatpush.msra.mxu0 %v191
      %266 = vmatpush.msra.mxu0 %v190
      %267 = vmatmul.f32.gmra.mxu0 %v200
      %v268 = vpop.f32.mrf.mxu0
      %v269 = vadd.f32 %v196, %v268
      %270 = vmatmul.f32.gmra.mxu0 %v203
      %v271 = vpop.f32.mrf.mxu0
      %v272 = vadd.f32 %v196, %v271
      %273 = vmatmul.f32.gmra.mxu0 %v206
      %v274 = vpop.f32.mrf.mxu0
      %v275 = vadd.f32 %v196, %v274
      %276 = vmatmul.f32.gmra.mxu0 %v209
      %v277 = vpop.f32.mrf.mxu0
      %v278 = vadd.f32 %v196, %v277
      %279 = vmatmul.f32.gmra.mxu0 %v212
      %v280 = vpop.f32.mrf.mxu0
      %v281 = vadd.f32 %v196, %v280
      %282 = vmatmul.f32.gmra.mxu0 %v215
      %v283 = vpop.f32.mrf.mxu0
      %v284 = vadd.f32 %v196, %v283
      %285 = vmatmul.f32.gmra.mxu0 %v218
      %v286 = vpop.f32.mrf.mxu0
      %v287 = vadd.f32 %v196, %v286
      %288 = vmatmul.f32.gmra.mxu0 %v221
      %v289 = vpop.f32.mrf.mxu0
      %v290 = vadd.f32 %v196, %v289
      %291 = vmatmul.f32.gmra.mxu0 %v224
      %v292 = vpop.f32.mrf.mxu0
      %v293 = vadd.f32 %v196, %v292
      %294 = vmatmul.f32.gmra.mxu0 %v227
      %v295 = vpop.f32.mrf.mxu0
      %v296 = vadd.f32 %v196, %v295
      %297 = vmatmul.f32.gmra.mxu0 %v230
      %v298 = vpop.f32.mrf.mxu0
      %v299 = vadd.f32 %v196, %v298
      %300 = vmatmul.f32.gmra.mxu0 %v233
      %v301 = vpop.f32.mrf.mxu0
      %v302 = vadd.f32 %v196, %v301
      %303 = vmatmul.f32.gmra.mxu0 %v236
      %v304 = vpop.f32.mrf.mxu0
      %v305 = vadd.f32 %v196, %v304
      %306 = vmatmul.f32.gmra.mxu0 %v239
      %v307 = vpop.f32.mrf.mxu0
      %v308 = vadd.f32 %v196, %v307
      %309 = vmatmul.f32.gmra.mxu0 %v242
      %v310 = vpop.f32.mrf.mxu0
      %v311 = vadd.f32 %v196, %v310
      %312 = vmatmul.f32.gmra.mxu0 %v245
      %v313 = vpop.f32.mrf.mxu0
      %v314 = vadd.f32 %v196, %v313
      %315 = vdwg.mxu0
      %v316 = vmax.f32 %v269, 0.0
      %v317 = vmax.f32 %v272, 0.0
      %v318 = vmax.f32 %v275, 0.0
      %v319 = vmax.f32 %v278, 0.0
      %v320 = vmax.f32 %v281, 0.0
      %v321 = vmax.f32 %v284, 0.0
      %v322 = vmax.f32 %v287, 0.0
      %v323 = vmax.f32 %v290, 0.0
      %v324 = vmax.f32 %v293, 0.0
      %v325 = vmax.f32 %v296, 0.0
      %v326 = vmax.f32 %v299, 0.0
      %v327 = vmax.f32 %v302, 0.0
      %v328 = vmax.f32 %v305, 0.0
      %v329 = vmax.f32 %v308, 0.0
      %v330 = vmax.f32 %v311, 0.0
      %v331 = vmax.f32 %v314, 0.0
      %vm332 = vcmask 80896
      %333 = vst.msk [vmem:[%s172] sm:$0xff] %vm332, %v316
      %334 = vst.msk [vmem:[%s172 + $0x8] sm:$0xff] %vm332, %v317
      %335 = vst.msk [vmem:[%s172 + $0x10] sm:$0xff] %vm332, %v318
      %336 = vst.msk [vmem:[%s172 + $0x18] sm:$0xff] %vm332, %v319
      %337 = vst.msk [vmem:[%s172 + $0x20] sm:$0xff] %vm332, %v320
      %338 = vst.msk [vmem:[%s172 + $0x28] sm:$0xff] %vm332, %v321
      %339 = vst.msk [vmem:[%s172 + $0x30] sm:$0xff] %vm332, %v322
      %340 = vst.msk [vmem:[%s172 + $0x38] sm:$0xff] %vm332, %v323
      %341 = vst.msk [vmem:[%s172 + $0x40] sm:$0xff] %vm332, %v324
      %342 = vst.msk [vmem:[%s172 + $0x48] sm:$0xff] %vm332, %v325
      %343 = vst.msk [vmem:[%s172 + $0x50] sm:$0xff] %vm332, %v326
      %344 = vst.msk [vmem:[%s172 + $0x58] sm:$0xff] %vm332, %v327
      %345 = vst.msk [vmem:[%s172 + $0x60] sm:$0xff] %vm332, %v328
      %346 = vst.msk [vmem:[%s172 + $0x68] sm:$0xff] %vm332, %v329
      %347 = vst.msk [vmem:[%s172 + $0x70] sm:$0xff] %vm332, %v330
      %348 = vst.msk [vmem:[%s172 + $0x78] sm:$0xff] %vm332, %v331
      %s349 = smul.u32 16, %s14
      %p350 = scmp.lt.s32.totalorder %s349, 143
      %s351 = scalar_select %p350, %s349, 143
      %s352 = smul.addr %s351, 8
      %s353 = scalar_lea.vmem %s3, %s352
      // Predicated region
      $region33: #{net_forward.13} parent=31 // pred_check
        %p354 = pneg %p100
      $region34: #{net_forward.13} parent=31 // pred_check_branch
        %356 = sbr.rel (%p354) target = $region36
      $region35: #{net_forward.13} parent=31 // pred_region
        %s357 = smul.u32 16, %s14
      $region36: #{net_forward.13} parent=31 // pred_fallthru
        _
    $region32: #{net_forward.13} parent=5 // pred_fallthru
      _
    %p358 = scmp.le.s32.totalorder 2, %s9
    // Predicated region
    $region37: #{net_forward.13} parent=5 // pred_check
      %p359 = pneg %p358
    $region38: #{net_forward.13} parent=5 // pred_check_branch
      %361 = sbr.rel (%p359) target = $region40
    $region39: #{net_forward.13} parent=5 // pred_region
      %s362 = ssub.s32 %s9, 2
      // Predicated region
      $region41: #{net_forward.13} parent=39 // pred_check
        %p363 = pneg %p106
      $region42: #{net_forward.13} parent=39 // pred_check_branch
        %365 = sbr.rel (%p363) target = $region44
      $region43: #{net_forward.13} parent=39 // pred_region
        %s366 = smul.u32 16, %s15
        %p367 = scmp.lt.s32.totalorder %s366, 143
        %s368 = scalar_select %p367, %s366, 143
        %s369 = smul.addr %s368, 8
        %s370 = scalar_lea.vmem %s3, %s369
      $region44: #{net_forward.13} parent=39 // pred_fallthru
        _
    $region40: #{net_forward.13} parent=5 // pred_fallthru
      _
  $region6: #{net_forward.13} parent=0 // loop_footer
    %s13 = sadd.s32 1, %s9
  $region7: #{net_forward.13} parent=0 // loop_footer_branch
    %8 = sbr.rel target = $region3
  $region8: #{net_forward.13} parent=0 // loop_exit
    _

// kernel: net_forward.15
$region0: #{net_forward.15}
  #allocation0 [shape = 'u32[]', space=smem, size = 0x4, offset = 0x4, fixed_abs, tag = 'smem constant byte address 0x4 - core index']
  #allocation1 [shape = 'u32[72,128]{1,0:T(1,128)}', space=vmem, size = 0x9000, scoped, tag = 'internal scratch']
  %s0 = inlined_call_operand.vmem [shape: f32[288,90], index: 0, kind: input, shape index: {}]
  %s1 = inlined_call_operand.vmem [shape: f32[90,16], index: 1, kind: input, shape index: {}]
  %s2 = inlined_call_operand.vmem [shape: f32[1,16], index: 2, kind: input, shape index: {}]
  %s3 = inlined_call_operand.vmem [shape: f32[288,16], index: 3, kind: output, shape index: {}]
  %s4 = sld [smem:[#allocation0]]
  $region45: #{net_forward.15} parent=0
    _
  %s6 = ssub.s32 1, %s4
  %s7 = scalar_select 0, %s6, %s4
  loop: start=0, step=1, limit=5
  $region2: #{net_forward.15} parent=0 // loop_pre_header
    _
  $region3: #{net_forward.15} parent=0 // loop_header
    %s9 = sphi 0, %s13
    %p10 = scmp.ge.s32.totalorder %s9, 5
    %s19 = sphi 0, %s21
    %s22 = sphi 0, %s19
    %s23 = sphi 0, %s22
    %s39 = sphi 0, %s23
    %s43 = sphi 0, %s43
    %s45 = sphi 0, %s43
    %s46 = sphi 0, %s45
    %s60 = sphi 0, %s46
    %s64 = sphi 0, %s64
    %s66 = sphi 0, %s64
    %s67 = sphi 0, %s66
    %s81 = sphi 0, %s67
    %s87 = sphi 0, %s89
    %s90 = sphi 0, %s87
    %s91 = sphi 0, %s90
    %s107 = sphi 0, %s91
  $region4: #{net_forward.15} parent=0 // loop_header_branch
    %12 = sbr.rel (%p10) target = $region8
  $region5: #{net_forward.15} parent=0 // loop_body
    %s14 = ssub.s32 %s9, 1
    %s15 = ssub.s32 %s9, 2
    %s16 = sadd.s32 %s9, 1
    %s17 = ssub.s32 %s9, %s16
    %p18 = scmp.eq.s32.totalorder %s17, 0
    %s20 = sadd.s32 %s19, 1
    %s21 = scalar_select %p18, %s19, %s20
    %p24 = pneg %p18
    %p25 = scmp.eq.s32.totalorder %s9, 2
    %p26 = por %p24, %p25
    %p27 = scmp.ne.s32.totalorder %s19, %s22
    %p28 = scmp.eq.s32.totalorder %s9, 0
    %p29 = por %p27, %p28
    %p30 = scmp.ne.s32.totalorder %s19, %s22
    %p31 = scmp.eq.s32.totalorder %s14, 2
    %p32 = por %p30, %p31
    %p33 = scmp.ne.s32.totalorder %s22, %s23
    %p34 = scmp.eq.s32.totalorder %s14, 0
    %p35 = por %p33, %p34
    %p36 = scmp.ne.s32.totalorder %s22, %s23
    %p37 = scmp.eq.s32.totalorder %s15, 2
    %p38 = por %p36, %p37
    %p40 = scmp.ne.s32.totalorder %s23, %s39
    %p41 = scmp.eq.s32.totalorder %s15, 0
    %p42 = por %p40, %p41
    %s44 = sadd.s32 %s43, 1
    %p47 = scmp.eq.s32.totalorder %s9, 2
    %p48 = scmp.ne.s32.totalorder %s43, %s45
    %p49 = scmp.eq.s32.totalorder %s9, 0
    %p50 = por %p48, %p49
    %p51 = scmp.ne.s32.totalorder %s43, %s45
    %p52 = scmp.eq.s32.totalorder %s14, 2
    %p53 = por %p51, %p52
    %p54 = scmp.ne.s32.totalorder %s45, %s46
    %p55 = scmp.eq.s32.totalorder %s14, 0
    %p56 = por %p54, %p55
    %p57 = scmp.ne.s32.totalorder %s45, %s46
    %p58 = scmp.eq.s32.totalorder %s15, 2
    %p59 = por %p57, %p58
    %p61 = scmp.ne.s32.totalorder %s46, %s60
    %p62 = scmp.eq.s32.totalorder %s15, 0
    %p63 = por %p61, %p62
    %s65 = sadd.s32 %s64, 1
    %p68 = scmp.eq.s32.totalorder %s9, 2
    %p69 = scmp.ne.s32.totalorder %s64, %s66
    %p70 = scmp.eq.s32.totalorder %s9, 0
    %p71 = por %p69, %p70
    %p72 = scmp.ne.s32.totalorder %s64, %s66
    %p73 = scmp.eq.s32.totalorder %s14, 2
    %p74 = por %p72, %p73
    %p75 = scmp.ne.s32.totalorder %s66, %s67
    %p76 = scmp.eq.s32.totalorder %s14, 0
    %p77 = por %p75, %p76
    %p78 = scmp.ne.s32.totalorder %s66, %s67
    %p79 = scmp.eq.s32.totalorder %s15, 2
    %p80 = por %p78, %p79
    %p82 = scmp.ne.s32.totalorder %s67, %s81
    %p83 = scmp.eq.s32.totalorder %s15, 0
    %p84 = por %p82, %p83
    %s85 = ssub.s32 %s9, %s16
    %p86 = scmp.eq.s32.totalorder %s85, 0
    %s88 = sadd.s32 %s87, 1
    %s89 = scalar_select %p86, %s87, %s88
    %p92 = pneg %p86
    %p93 = scmp.eq.s32.totalorder %s9, 2
    %p94 = por %p92, %p93
    %p95 = scmp.ne.s32.totalorder %s87, %s90
    %p96 = scmp.eq.s32.totalorder %s9, 0
    %p97 = por %p95, %p96
    %p98 = scmp.ne.s32.totalorder %s87, %s90
    %p99 = scmp.eq.s32.totalorder %s14, 2
    %p100 = por %p98, %p99
    %p101 = scmp.ne.s32.totalorder %s90, %s91
    %p102 = scmp.eq.s32.totalorder %s14, 0
    %p103 = por %p101, %p102
    %p104 = scmp.ne.s32.totalorder %s90, %s91
    %p105 = scmp.eq.s32.totalorder %s15, 2
    %p106 = por %p104, %p105
    %p108 = scmp.ne.s32.totalorder %s91, %s107
    %p109 = scmp.eq.s32.totalorder %s15, 0
    %p110 = por %p108, %p109
    %p111 = scmp.le.s32.totalorder 1, %s9
    %p112 = scmp.lt.s32.totalorder %s9, 4
    %p113 = pnand %p111, %p112
    %p114 = pneg %p113
    // Predicated region
    $region9: #{net_forward.15} parent=5 // pred_check
      _
    $region10: #{net_forward.15} parent=5 // pred_check_branch
      %116 = sbr.rel (%p113) target = $region12
    $region11: #{net_forward.15} parent=5 // pred_region
      %s117 = ssub.s32 %s9, 1
      // Predicated region
      $region13: #{net_forward.15} parent=11 // pred_check
        %p118 = pneg %p56
      $region14: #{net_forward.15} parent=11 // pred_check_branch
        %120 = sbr.rel (%p118) target = $region16
      $region15: #{net_forward.15} parent=11 // pred_region
        _
      $region16: #{net_forward.15} parent=11 // pred_fallthru
        _
      // Predicated region
      $region17: #{net_forward.15} parent=11 // pred_check
        %p121 = pneg %p77
      $region18: #{net_forward.15} parent=11 // pred_check_branch
        %123 = sbr.rel (%p121) target = $region20
      $region19: #{net_forward.15} parent=11 // pred_region
        _
      $region20: #{net_forward.15} parent=11 // pred_fallthru
        _
    $region12: #{net_forward.15} parent=5 // pred_fallthru
      _
    %p124 = scmp.lt.s32.totalorder %s9, 3
    // Predicated region
    $region21: #{net_forward.15} parent=5 // pred_check
      %p125 = pneg %p124
    $region22: #{net_forward.15} parent=5 // pred_check_branch
      %127 = sbr.rel (%p125) target = $region24
    $region23: #{net_forward.15} parent=5 // pred_region
      // Predicated region
      $region25: #{net_forward.15} parent=23 // pred_check
        %p128 = pneg %p29
      $region26: #{net_forward.15} parent=23 // pred_check_branch
        %130 = sbr.rel (%p128) target = $region28
      $region27: #{net_forward.15} parent=23 // pred_region
        %s131 = smul.u32 12, %s9
        %p132 = scmp.lt.s32.totalorder %s131, 35
        %s133 = scalar_select %p132, %s131, 35
        %s134 = smul.addr %s133, 8
        %s135 = scalar_lea.vmem %s0, %s134
        %s136 = smul.u32 12, %s9
      $region28: #{net_forward.15} parent=23 // pred_fallthru
        _
    $region24: #{net_forward.15} parent=5 // pred_fallthru
      _
    %p137 = scmp.le.s32.totalorder 1, %s9
    %p138 = scmp.lt.s32.totalorder %s9, 4
    %p139 = pnand %p137, %p138
    %p140 = pneg %p139
    // Predicated region
    $region29: #{net_forward.15} parent=5 // pred_check
      _
    $region30: #{net_forward.15} parent=5 // pred_check_branch
      %142 = sbr.rel (%p139) target = $region32
    $region31: #{net_forward.15} parent=5 // pred_region
      %s143 = ssub.s32 %s9, 1
      %s144 = smul.u32 12, %s14
      %p145 = scmp.lt.s32.totalorder %s144, 35
      %s146 = scalar_select %p145, %s144, 35
      %s147 = smul.addr %s146, 8
      %s148 = scalar_lea.vmem %s0, %s147
      %p149 = pneg %p35
      %p150 = pneg %p32
      %p151 = pneg %p56
      %p152 = pneg %p53
      %p153 = pneg %p77
      %p154 = pneg %p74
      %p155 = pneg %p103
      %p156 = pneg %p100
      %s157 = smul.u32 12, %s14
      %p158 = scmp.lt.s32.totalorder %s157, 35
      %s159 = scalar_select %p158, %s157, 35
      %s160 = smul.addr %s159, 8
      %s161 = scalar_lea.vmem %s3, %s160
      %s162 = smul.u32 12, %s14
      %p163 = scmp.lt.s32.totalorder %s162, 35
      %s164 = scalar_select %p163, %s162, 35
      %s165 = smul.addr %s164, 8
      %s166 = scalar_lea.vmem %s0, %s165
      %s167 = smul.u32 12, %s14
      %s168 = smul.u32 12, %s14
      %p169 = scmp.lt.s32.totalorder %s168, 35
      %s170 = scalar_select %p169, %s168, 35
      %s171 = smul.addr %s170, 8
      %s172 = scalar_lea.vmem %s3, %s171
      %s173 = smul.u32 12, %s14
      %v174 = vld [vmem:[%s166] sm:$0xff]
      %v175 = vld [vmem:[%s166 + $0x8] sm:$0xff]
      %v176 = vld [vmem:[%s166 + $0x10] sm:$0xff]
      %v177 = vld [vmem:[%s166 + $0x18] sm:$0xff]
      %v178 = vld [vmem:[%s166 + $0x20] sm:$0xff]
      %v179 = vld [vmem:[%s166 + $0x28] sm:$0xff]
      %v180 = vld [vmem:[%s166 + $0x30] sm:$0xff]
      %v181 = vld [vmem:[%s166 + $0x38] sm:$0xff]
      %v182 = vld [vmem:[%s166 + $0x40] sm:$0xff]
      %v183 = vld [vmem:[%s166 + $0x48] sm:$0xff]
      %v184 = vld [vmem:[%s166 + $0x50] sm:$0xff]
      %v185 = vld [vmem:[%s166 + $0x58] sm:$0xff]
      %v186 = vld [vmem:[%s1] sm:$0xff]
      %v187 = vld [vmem:[%s1 + $0x8] sm:$0xff]
      %v188 = vld [vmem:[%s1 + $0x10] sm:$0xff]
      %v189 = vld [vmem:[%s1 + $0x18] sm:$0xff]
      %v190 = vld [vmem:[%s1 + $0x20] sm:$0xff]
      %v191 = vld [vmem:[%s1 + $0x28] sm:$0xff]
      %v192 = vld [vmem:[%s1 + $0x30] sm:$0xff]
      %v193 = vld [vmem:[%s1 + $0x38] sm:$0xff]
      %v194 = vld [vmem:[%s1 + $0x40] sm:$0xff]
      %v195 = vld [vmem:[%s1 + $0x48] sm:$0xff]
      %v196 = vld [vmem:[%s1 + $0x50] sm:$0xff]
      %v197 = vld [vmem:[%s1 + $0x58] sm:$0x3]
      %v198 = vld [vmem:[%s2] sm:$0x1]
      %v200 = vperm.slane %v198, 0
      %vm202 = vcmask 736256
      %v204 = vsel %vm202, %v174, 0
      %v207 = vsel %vm202, %v175, 0
      %v210 = vsel %vm202, %v176, 0
      %v213 = vsel %vm202, %v177, 0
      %v216 = vsel %vm202, %v178, 0
      %v219 = vsel %vm202, %v179, 0
      %v222 = vsel %vm202, %v180, 0
      %v225 = vsel %vm202, %v181, 0
      %v228 = vsel %vm202, %v182, 0
      %v231 = vsel %vm202, %v183, 0
      %v234 = vsel %vm202, %v184, 0
      %v237 = vsel %vm202, %v185, 0
      %vm239 = vcmask 1041408
      %v241 = vsel %vm239, %v197, 0
      %243 = vmatpush.msra.mxu0 0.0
      %244 = vmatpush.msra.mxu0 0.0
      %245 = vmatpush.msra.mxu0 0.0
      %246 = vmatpush.msra.mxu0 0.0
      %247 = vmatpush.msra.mxu0 %v241
      %248 = vmatpush.msra.mxu0 %v196
      %249 = vmatpush.msra.mxu0 %v195
      %250 = vmatpush.msra.mxu0 %v194
      %251 = vmatpush.msra.mxu0 %v193
      %252 = vmatpush.msra.mxu0 %v192
      %253 = vmatpush.msra.mxu0 %v191
      %254 = vmatpush.msra.mxu0 %v190
      %255 = vmatpush.msra.mxu0 %v189
      %256 = vmatpush.msra.mxu0 %v188
      %257 = vmatpush.msra.mxu0 %v187
      %258 = vmatpush.msra.mxu0 %v186
      %259 = vmatmul.f32.gmra.mxu0 %v204
      %v260 = vpop.f32.mrf.mxu0
      %v261 = vadd.f32 %v200, %v260
      %262 = vmatmul.f32.gmra.mxu0 %v207
      %v263 = vpop.f32.mrf.mxu0
      %v264 = vadd.f32 %v200, %v263
      %265 = vmatmul.f32.gmra.mxu0 %v210
      %v266 = vpop.f32.mrf.mxu0
      %v267 = vadd.f32 %v200, %v266
      %268 = vmatmul.f32.gmra.mxu0 %v213
      %v269 = vpop.f32.mrf.mxu0
      %v270 = vadd.f32 %v200, %v269
      %271 = vmatmul.f32.gmra.mxu0 %v216
      %v272 = vpop.f32.mrf.mxu0
      %v273 = vadd.f32 %v200, %v272
      %274 = vmatmul.f32.gmra.mxu0 %v219
      %v275 = vpop.f32.mrf.mxu0
      %v276 = vadd.f32 %v200, %v275
      %277 = vmatmul.f32.gmra.mxu0 %v222
      %v278 = vpop.f32.mrf.mxu0
      %v279 = vadd.f32 %v200, %v278
      %280 = vmatmul.f32.gmra.mxu0 %v225
      %v281 = vpop.f32.mrf.mxu0
      %v282 = vadd.f32 %v200, %v281
      %283 = vmatmul.f32.gmra.mxu0 %v228
      %v284 = vpop.f32.mrf.mxu0
      %v285 = vadd.f32 %v200, %v284
      %286 = vmatmul.f32.gmra.mxu0 %v231
      %v287 = vpop.f32.mrf.mxu0
      %v288 = vadd.f32 %v200, %v287
      %289 = vmatmul.f32.gmra.mxu0 %v234
      %v290 = vpop.f32.mrf.mxu0
      %v291 = vadd.f32 %v200, %v290
      %292 = vmatmul.f32.gmra.mxu0 %v237
      %v293 = vpop.f32.mrf.mxu0
      %v294 = vadd.f32 %v200, %v293
      %295 = vdwg.mxu0
      %vm296 = vcmask 130048
      %297 = vst.msk [vmem:[%s172] sm:$0xff] %vm296, %v261
      %298 = vst.msk [vmem:[%s172 + $0x8] sm:$0xff] %vm296, %v264
      %299 = vst.msk [vmem:[%s172 + $0x10] sm:$0xff] %vm296, %v267
      %300 = vst.msk [vmem:[%s172 + $0x18] sm:$0xff] %vm296, %v270
      %301 = vst.msk [vmem:[%s172 + $0x20] sm:$0xff] %vm296, %v273
      %302 = vst.msk [vmem:[%s172 + $0x28] sm:$0xff] %vm296, %v276
      %303 = vst.msk [vmem:[%s172 + $0x30] sm:$0xff] %vm296, %v279
      %304 = vst.msk [vmem:[%s172 + $0x38] sm:$0xff] %vm296, %v282
      %305 = vst.msk [vmem:[%s172 + $0x40] sm:$0xff] %vm296, %v285
      %306 = vst.msk [vmem:[%s172 + $0x48] sm:$0xff] %vm296, %v288
      %307 = vst.msk [vmem:[%s172 + $0x50] sm:$0xff] %vm296, %v291
      %308 = vst.msk [vmem:[%s172 + $0x58] sm:$0xff] %vm296, %v294
      %s309 = smul.u32 12, %s14
      %p310 = scmp.lt.s32.totalorder %s309, 35
      %s311 = scalar_select %p310, %s309, 35
      %s312 = smul.addr %s311, 8
      %s313 = scalar_lea.vmem %s3, %s312
      // Predicated region
      $region33: #{net_forward.15} parent=31 // pred_check
        %p314 = pneg %p100
      $region34: #{net_forward.15} parent=31 // pred_check_branch
        %316 = sbr.rel (%p314) target = $region36
      $region35: #{net_forward.15} parent=31 // pred_region
        %s317 = smul.u32 12, %s14
      $region36: #{net_forward.15} parent=31 // pred_fallthru
        _
    $region32: #{net_forward.15} parent=5 // pred_fallthru
      _
    %p318 = scmp.le.s32.totalorder 2, %s9
    // Predicated region
    $region37: #{net_forward.15} parent=5 // pred_check
      %p319 = pneg %p318
    $region38: #{net_forward.15} parent=5 // pred_check_branch
      %321 = sbr.rel (%p319) target = $region40
    $region39: #{net_forward.15} parent=5 // pred_region
      %s322 = ssub.s32 %s9, 2
      // Predicated region
      $region41: #{net_forward.15} parent=39 // pred_check
        %p323 = pneg %p106
      $region42: #{net_forward.15} parent=39 // pred_check_branch
        %325 = sbr.rel (%p323) target = $region44
      $region43: #{net_forward.15} parent=39 // pred_region
        %s326 = smul.u32 12, %s15
        %p327 = scmp.lt.s32.totalorder %s326, 35
        %s328 = scalar_select %p327, %s326, 35
        %s329 = smul.addr %s328, 8
        %s330 = scalar_lea.vmem %s3, %s329
      $region44: #{net_forward.15} parent=39 // pred_fallthru
        _
    $region40: #{net_forward.15} parent=5 // pred_fallthru
      _
  $region6: #{net_forward.15} parent=0 // loop_footer
    %s13 = sadd.s32 1, %s9
  $region7: #{net_forward.15} parent=0 // loop_footer_branch
    %8 = sbr.rel target = $region3
  $region8: #{net_forward.15} parent=0 // loop_exit
    _

// kernel: net_forward.16
$region0: #{net_forward.16}
  #allocation0 [shape = 'u32[]', space=smem, size = 0x4, offset = 0x4, fixed_abs, tag = 'smem constant byte address 0x4 - core index']
  #allocation1 [shape = 'u32[72,128]{1,0:T(1,128)}', space=vmem, size = 0x9000, scoped, tag = 'internal scratch']
  %s0 = inlined_call_operand.vmem [shape: f32[288,400], index: 0, kind: input, shape index: {}]
  %s1 = inlined_call_operand.vmem [shape: f32[400,24], index: 1, kind: input, shape index: {}]
  %s2 = inlined_call_operand.vmem [shape: f32[1,24], index: 2, kind: input, shape index: {}]
  %s3 = inlined_call_operand.vmem [shape: f32[288,24], index: 3, kind: output, shape index: {}]
  %s4 = sld [smem:[#allocation0]]
  $region45: #{net_forward.16} parent=0
    _
  %s6 = ssub.s32 1, %s4
  %s7 = scalar_select 0, %s6, %s4
  loop: start=0, step=1, limit=5
  $region2: #{net_forward.16} parent=0 // loop_pre_header
    _
  $region3: #{net_forward.16} parent=0 // loop_header
    %s9 = sphi 0, %s13
    %p10 = scmp.ge.s32.totalorder %s9, 5
    %s19 = sphi 0, %s21
    %s22 = sphi 0, %s19
    %s23 = sphi 0, %s22
    %s39 = sphi 0, %s23
    %s43 = sphi 0, %s43
    %s45 = sphi 0, %s43
    %s46 = sphi 0, %s45
    %s60 = sphi 0, %s46
    %s64 = sphi 0, %s64
    %s66 = sphi 0, %s64
    %s67 = sphi 0, %s66
    %s81 = sphi 0, %s67
    %s87 = sphi 0, %s89
    %s90 = sphi 0, %s87
    %s91 = sphi 0, %s90
    %s107 = sphi 0, %s91
  $region4: #{net_forward.16} parent=0 // loop_header_branch
    %12 = sbr.rel (%p10) target = $region8
  $region5: #{net_forward.16} parent=0 // loop_body
    %s14 = ssub.s32 %s9, 1
    %s15 = ssub.s32 %s9, 2
    %s16 = sadd.s32 %s9, 1
    %s17 = ssub.s32 %s9, %s16
    %p18 = scmp.eq.s32.totalorder %s17, 0
    %s20 = sadd.s32 %s19, 1
    %s21 = scalar_select %p18, %s19, %s20
    %p24 = pneg %p18
    %p25 = scmp.eq.s32.totalorder %s9, 2
    %p26 = por %p24, %p25
    %p27 = scmp.ne.s32.totalorder %s19, %s22
    %p28 = scmp.eq.s32.totalorder %s9, 0
    %p29 = por %p27, %p28
    %p30 = scmp.ne.s32.totalorder %s19, %s22
    %p31 = scmp.eq.s32.totalorder %s14, 2
    %p32 = por %p30, %p31
    %p33 = scmp.ne.s32.totalorder %s22, %s23
    %p34 = scmp.eq.s32.totalorder %s14, 0
    %p35 = por %p33, %p34
    %p36 = scmp.ne.s32.totalorder %s22, %s23
    %p37 = scmp.eq.s32.totalorder %s15, 2
    %p38 = por %p36, %p37
    %p40 = scmp.ne.s32.totalorder %s23, %s39
    %p41 = scmp.eq.s32.totalorder %s15, 0
    %p42 = por %p40, %p41
    %s44 = sadd.s32 %s43, 1
    %p47 = scmp.eq.s32.totalorder %s9, 2
    %p48 = scmp.ne.s32.totalorder %s43, %s45
    %p49 = scmp.eq.s32.totalorder %s9, 0
    %p50 = por %p48, %p49
    %p51 = scmp.ne.s32.totalorder %s43, %s45
    %p52 = scmp.eq.s32.totalorder %s14, 2
    %p53 = por %p51, %p52
    %p54 = scmp.ne.s32.totalorder %s45, %s46
    %p55 = scmp.eq.s32.totalorder %s14, 0
    %p56 = por %p54, %p55
    %p57 = scmp.ne.s32.totalorder %s45, %s46
    %p58 = scmp.eq.s32.totalorder %s15, 2
    %p59 = por %p57, %p58
    %p61 = scmp.ne.s32.totalorder %s46, %s60
    %p62 = scmp.eq.s32.totalorder %s15, 0
    %p63 = por %p61, %p62
    %s65 = sadd.s32 %s64, 1
    %p68 = scmp.eq.s32.totalorder %s9, 2
    %p69 = scmp.ne.s32.totalorder %s64, %s66
    %p70 = scmp.eq.s32.totalorder %s9, 0
    %p71 = por %p69, %p70
    %p72 = scmp.ne.s32.totalorder %s64, %s66
    %p73 = scmp.eq.s32.totalorder %s14, 2
    %p74 = por %p72, %p73
    %p75 = scmp.ne.s32.totalorder %s66, %s67
    %p76 = scmp.eq.s32.totalorder %s14, 0
    %p77 = por %p75, %p76
    %p78 = scmp.ne.s32.totalorder %s66, %s67
    %p79 = scmp.eq.s32.totalorder %s15, 2
    %p80 = por %p78, %p79
    %p82 = scmp.ne.s32.totalorder %s67, %s81
    %p83 = scmp.eq.s32.totalorder %s15, 0
    %p84 = por %p82, %p83
    %s85 = ssub.s32 %s9, %s16
    %p86 = scmp.eq.s32.totalorder %s85, 0
    %s88 = sadd.s32 %s87, 1
    %s89 = scalar_select %p86, %s87, %s88
    %p92 = pneg %p86
    %p93 = scmp.eq.s32.totalorder %s9, 2
    %p94 = por %p92, %p93
    %p95 = scmp.ne.s32.totalorder %s87, %s90
    %p96 = scmp.eq.s32.totalorder %s9, 0
    %p97 = por %p95, %p96
    %p98 = scmp.ne.s32.totalorder %s87, %s90
    %p99 = scmp.eq.s32.totalorder %s14, 2
    %p100 = por %p98, %p99
    %p101 = scmp.ne.s32.totalorder %s90, %s91
    %p102 = scmp.eq.s32.totalorder %s14, 0
    %p103 = por %p101, %p102
    %p104 = scmp.ne.s32.totalorder %s90, %s91
    %p105 = scmp.eq.s32.totalorder %s15, 2
    %p106 = por %p104, %p105
    %p108 = scmp.ne.s32.totalorder %s91, %s107
    %p109 = scmp.eq.s32.totalorder %s15, 0
    %p110 = por %p108, %p109
    %p111 = scmp.le.s32.totalorder 1, %s9
    %p112 = scmp.lt.s32.totalorder %s9, 4
    %p113 = pnand %p111, %p112
    %p114 = pneg %p113
    // Predicated region
    $region9: #{net_forward.16} parent=5 // pred_check
      _
    $region10: #{net_forward.16} parent=5 // pred_check_branch
      %116 = sbr.rel (%p113) target = $region12
    $region11: #{net_forward.16} parent=5 // pred_region
      %s117 = ssub.s32 %s9, 1
      // Predicated region
      $region13: #{net_forward.16} parent=11 // pred_check
        %p118 = pneg %p56
      $region14: #{net_forward.16} parent=11 // pred_check_branch
        %120 = sbr.rel (%p118) target = $region16
      $region15: #{net_forward.16} parent=11 // pred_region
        _
      $region16: #{net_forward.16} parent=11 // pred_fallthru
        _
      // Predicated region
      $region17: #{net_forward.16} parent=11 // pred_check
        %p121 = pneg %p77
      $region18: #{net_forward.16} parent=11 // pred_check_branch
        %123 = sbr.rel (%p121) target = $region20
      $region19: #{net_forward.16} parent=11 // pred_region
        _
      $region20: #{net_forward.16} parent=11 // pred_fallthru
        _
    $region12: #{net_forward.16} parent=5 // pred_fallthru
      _
    %p124 = scmp.lt.s32.totalorder %s9, 3
    // Predicated region
    $region21: #{net_forward.16} parent=5 // pred_check
      %p125 = pneg %p124
    $region22: #{net_forward.16} parent=5 // pred_check_branch
      %127 = sbr.rel (%p125) target = $region24
    $region23: #{net_forward.16} parent=5 // pred_region
      // Predicated region
      $region25: #{net_forward.16} parent=23 // pred_check
        %p128 = pneg %p29
      $region26: #{net_forward.16} parent=23 // pred_check_branch
        %130 = sbr.rel (%p128) target = $region28
      $region27: #{net_forward.16} parent=23 // pred_region
        %s131 = smul.u32 12, %s9
        %p132 = scmp.lt.s32.totalorder %s131, 35
        %s133 = scalar_select %p132, %s131, 35
        %s134 = smul.addr %s133, 4
        %s135 = smul.addr %s134, 8
        %s136 = scalar_lea.vmem %s0, %s135
        %s137 = smul.u32 12, %s9
      $region28: #{net_forward.16} parent=23 // pred_fallthru
        _
    $region24: #{net_forward.16} parent=5 // pred_fallthru
      _
    %p138 = scmp.le.s32.totalorder 1, %s9
    %p139 = scmp.lt.s32.totalorder %s9, 4
    %p140 = pnand %p138, %p139
    %p141 = pneg %p140
    // Predicated region
    $region29: #{net_forward.16} parent=5 // pred_check
      _
    $region30: #{net_forward.16} parent=5 // pred_check_branch
      %143 = sbr.rel (%p140) target = $region32
    $region31: #{net_forward.16} parent=5 // pred_region
      %s144 = ssub.s32 %s9, 1
      %s145 = smul.u32 12, %s14
      %p146 = scmp.lt.s32.totalorder %s145, 35
      %s147 = scalar_select %p146, %s145, 35
      %s148 = smul.addr %s147, 4
      %s149 = smul.addr %s148, 8
      %s150 = scalar_lea.vmem %s0, %s149
      %p151 = pneg %p35
      %p152 = pneg %p32
      %p153 = pneg %p56
      %p154 = pneg %p53
      %p155 = pneg %p77
      %p156 = pneg %p74
      %p157 = pneg %p103
      %p158 = pneg %p100
      %s159 = smul.u32 12, %s14
      %p160 = scmp.lt.s32.totalorder %s159, 35
      %s161 = scalar_select %p160, %s159, 35
      %s162 = smul.addr %s161, 8
      %s163 = scalar_lea.vmem %s3, %s162
      %s164 = smul.u32 12, %s14
      %p165 = scmp.lt.s32.totalorder %s164, 35
      %s166 = scalar_select %p165, %s164, 35
      %s167 = smul.addr %s166, 4
      %s168 = smul.addr %s167, 8
      %s169 = scalar_lea.vmem %s0, %s168
      %s170 = smul.u32 12, %s14
      %s171 = smul.u32 12, %s14
      %p172 = scmp.lt.s32.totalorder %s171, 35
      %s173 = scalar_select %p172, %s171, 35
      %s174 = smul.addr %s173, 8
      %s175 = scalar_lea.vmem %s3, %s174
      %s176 = smul.u32 12, %s14
      %v177 = vld [vmem:[%s169] sm:$0xff]
      %v178 = vld [vmem:[%s169 + $0x8] sm:$0xff]
      %v179 = vld [vmem:[%s169 + $0x10] sm:$0xff]
      %v180 = vld [vmem:[%s169 + $0x18] sm:$0xff]
      %v181 = vld [vmem:[%s169 + $0x20] sm:$0xff]
      %v182 = vld [vmem:[%s169 + $0x28] sm:$0xff]
      %v183 = vld [vmem:[%s169 + $0x30] sm:$0xff]
      %v184 = vld [vmem:[%s169 + $0x38] sm:$0xff]
      %v185 = vld [vmem:[%s169 + $0x40] sm:$0xff]
      %v186 = vld [vmem:[%s169 + $0x48] sm:$0xff]
      %v187 = vld [vmem:[%s169 + $0x50] sm:$0xff]
      %v188 = vld [vmem:[%s169 + $0x58] sm:$0xff]
      %v189 = vld [vmem:[%s169 + $0x60] sm:$0xff]
      %v190 = vld [vmem:[%s169 + $0x68] sm:$0xff]
      %v191 = vld [vmem:[%s169 + $0x70] sm:$0xff]
      %v192 = vld [vmem:[%s169 + $0x78] sm:$0xff]
      %v193 = vld [vmem:[%s169 + $0x80] sm:$0xff]
      %v194 = vld [vmem:[%s169 + $0x88] sm:$0xff]
      %v195 = vld [vmem:[%s169 + $0x90] sm:$0xff]
      %v196 = vld [vmem:[%s169 + $0x98] sm:$0xff]
      %v197 = vld [vmem:[%s169 + $0xa0] sm:$0xff]
      %v198 = vld [vmem:[%s169 + $0xa8] sm:$0xff]
      %v199 = vld [vmem:[%s169 + $0xb0] sm:$0xff]
      %v200 = vld [vmem:[%s169 + $0xb8] sm:$0xff]
      %v201 = vld [vmem:[%s169 + $0xc0] sm:$0xff]
      %v202 = vld [vmem:[%s169 + $0xc8] sm:$0xff]
      %v203 = vld [vmem:[%s169 + $0xd0] sm:$0xff]
      %v204 = vld [vmem:[%s169 + $0xd8] sm:$0xff]
      %v205 = vld [vmem:[%s169 + $0xe0] sm:$0xff]
      %v206 = vld [vmem:[%s169 + $0xe8] sm:$0xff]
      %v207 = vld [vmem:[%s169 + $0xf0] sm:$0xff]
      %v208 = vld [vmem:[%s169 + $0xf8] sm:$0xff]
      %v209 = vld [vmem:[%s169 + $0x100] sm:$0xff]
      %v210 = vld [vmem:[%s169 + $0x108] sm:$0xff]
      %v211 = vld [vmem:[%s169 + $0x110] sm:$0xff]
      %v212 = vld [vmem:[%s169 + $0x118] sm:$0xff]
      %v213 = vld [vmem:[%s169 + $0x120] sm:$0xff]
      %v214 = vld [vmem:[%s169 + $0x128] sm:$0xff]
      %v215 = vld [vmem:[%s169 + $0x130] sm:$0xff]
      %v216 = vld [vmem:[%s169 + $0x138] sm:$0xff]
      %v217 = vld [vmem:[%s169 + $0x140] sm:$0xff]
      %v218 = vld [vmem:[%s169 + $0x148] sm:$0xff]
      %v219 = vld [vmem:[%s169 + $0x150] sm:$0xff]
      %v220 = vld [vmem:[%s169 + $0x158] sm:$0xff]
      %v221 = vld [vmem:[%s169 + $0x160] sm:$0xff]
      %v222 = vld [vmem:[%s169 + $0x168] sm:$0xff]
      %v223 = vld [vmem:[%s169 + $0x170] sm:$0xff]
      %v224 = vld [vmem:[%s169 + $0x178] sm:$0xff]
      %v225 = vld [vmem:[%s1] sm:$0xff]
      %v226 = vld [vmem:[%s1 + $0x8] sm:$0xff]
      %v227 = vld [vmem:[%s1 + $0x10] sm:$0xff]
      %v228 = vld [vmem:[%s1 + $0x18] sm:$0xff]
      %v229 = vld [vmem:[%s1 + $0x20] sm:$0xff]
      %v230 = vld [vmem:[%s1 + $0x28] sm:$0xff]
      %v231 = vld [vmem:[%s1 + $0x30] sm:$0xff]
      %v232 = vld [vmem:[%s1 + $0x38] sm:$0xff]
      %v233 = vld [vmem:[%s1 + $0x40] sm:$0xff]
      %v234 = vld [vmem:[%s1 + $0x48] sm:$0xff]
      %v235 = vld [vmem:[%s1 + $0x50] sm:$0xff]
      %v236 = vld [vmem:[%s1 + $0x58] sm:$0xff]
      %v237 = vld [vmem:[%s1 + $0x60] sm:$0xff]
      %v238 = vld [vmem:[%s1 + $0x68] sm:$0xff]
      %v239 = vld [vmem:[%s1 + $0x70] sm:$0xff]
      %v240 = vld [vmem:[%s1 + $0x78] sm:$0xff]
      %v241 = vld [vmem:[%s1 + $0x80] sm:$0xff]
      %v242 = vld [vmem:[%s1 + $0x88] sm:$0xff]
      %v243 = vld [vmem:[%s1 + $0x90] sm:$0xff]
      %v244 = vld [vmem:[%s1 + $0x98] sm:$0xff]
      %v245 = vld [vmem:[%s1 + $0xa0] sm:$0xff]
      %v246 = vld [vmem:[%s1 + $0xa8] sm:$0xff]
      %v247 = vld [vmem:[%s1 + $0xb0] sm:$0xff]
      %v248 = vld [vmem:[%s1 + $0xb8] sm:$0xff]
      %v249 = vld [vmem:[%s1 + $0xc0] sm:$0xff]
      %v250 = vld [vmem:[%s1 + $0xc8] sm:$0xff]
      %v251 = vld [vmem:[%s1 + $0xd0] sm:$0xff]
      %v252 = vld [vmem:[%s1 + $0xd8] sm:$0xff]
      %v253 = vld [vmem:[%s1 + $0xe0] sm:$0xff]
      %v254 = vld [vmem:[%s1 + $0xe8] sm:$0xff]
      %v255 = vld [vmem:[%s1 + $0xf0] sm:$0xff]
      %v256 = vld [vmem:[%s1 + $0xf8] sm:$0xff]
      %v257 = vld [vmem:[%s1 + $0x100] sm:$0xff]
      %v258 = vld [vmem:[%s1 + $0x108] sm:$0xff]
      %v259 = vld [vmem:[%s1 + $0x110] sm:$0xff]
      %v260 = vld [vmem:[%s1 + $0x118] sm:$0xff]
      %v261 = vld [vmem:[%s1 + $0x120] sm:$0xff]
      %v262 = vld [vmem:[%s1 + $0x128] sm:$0xff]
      %v263 = vld [vmem:[%s1 + $0x130] sm:$0xff]
      %v264 = vld [vmem:[%s1 + $0x138] sm:$0xff]
      %v265 = vld [vmem:[%s1 + $0x140] sm:$0xff]
      %v266 = vld [vmem:[%s1 + $0x148] sm:$0xff]
      %v267 = vld [vmem:[%s1 + $0x150] sm:$0xff]
      %v268 = vld [vmem:[%s1 + $0x158] sm:$0xff]
      %v269 = vld [vmem:[%s1 + $0x160] sm:$0xff]
      %v270 = vld [vmem:[%s1 + $0x168] sm:$0xff]
      %v271 = vld [vmem:[%s1 + $0x170] sm:$0xff]
      %v272 = vld [vmem:[%s1 + $0x178] sm:$0xff]
      %v273 = vld [vmem:[%s1 + $0x180] sm:$0xff]
      %v274 = vld [vmem:[%s1 + $0x188] sm:$0xff]
      %v275 = vld [vmem:[%s2] sm:$0x1]
      %v277 = vperm.slane %v275, 0
      %vm279 = vcmask 130048
      %v281 = vsel %vm279, %v180, 0
      %v284 = vsel %vm279, %v184, 0
      %v287 = vsel %vm279, %v188, 0
      %v290 = vsel %vm279, %v192, 0
      %v293 = vsel %vm279, %v196, 0
      %v296 = vsel %vm279, %v200, 0
      %v299 = vsel %vm279, %v204, 0
      %v302 = vsel %vm279, %v208, 0
      %v305 = vsel %vm279, %v212, 0
      %v308 = vsel %vm279, %v216, 0
      %v311 = vsel %vm279, %v220, 0
      %v314 = vsel %vm279, %v224, 0
      %316 = vmatpush.msra.mxu0 %v240
      %317 = vmatpush.msra.mxu0 %v239
      %318 = vmatpush.msra.mxu0 %v238
      %319 = vmatpush.msra.mxu0 %v237
      %320 = vmatpush.msra.mxu0 %v236
      %321 = vmatpush.msra.mxu0 %v235
      %322 = vmatpush.msra.mxu0 %v234
      %323 = vmatpush.msra.mxu0 %v233
      %324 = vmatpush.msra.mxu0 %v232
      %325 = vmatpush.msra.mxu0 %v231
      %326 = vmatpush.msra.mxu0 %v230
      %327 = vmatpush.msra.mxu0 %v229
      %328 = vmatpush.msra.mxu0 %v228
      %329 = vmatpush.msra.mxu0 %v227
      %330 = vmatpush.msra.mxu0 %v226
      %331 = vmatpush.msra.mxu0 %v225
      %332 = vmatmul.f32.gmra.mxu0 %v177
      %v333 = vpop.f32.mrf.mxu0
      %v334 = vadd.f32 %v277, %v333
      %335 = vmatmul.f32.gmra.mxu0 %v181
      %v336 = vpop.f32.mrf.mxu0
      %v337 = vadd.f32 %v277, %v336
      %338 = vmatmul.f32.gmra.mxu0 %v185
      %v339 = vpop.f32.mrf.mxu0
      %v340 = vadd.f32 %v277, %v339
      %341 = vmatmul.f32.gmra.mxu0 %v189
      %v342 = vpop.f32.mrf.mxu0
      %v343 = vadd.f32 %v277, %v342
      %344 = vmatmul.f32.gmra.mxu0 %v193
      %v345 = vpop.f32.mrf.mxu0
      %v346 = vadd.f32 %v277, %v345
      %347 = vmatmul.f32.gmra.mxu0 %v197
      %v348 = vpop.f32.mrf.mxu0
      %v349 = vadd.f32 %v277, %v348
      %350 = vmatmul.f32.gmra.mxu0 %v201
      %v351 = vpop.f32.mrf.mxu0
      %v352 = vadd.f32 %v277, %v351
      %353 = vmatmul.f32.gmra.mxu0 %v205
      %v354 = vpop.f32.mrf.mxu0
      %v355 = vadd.f32 %v277, %v354
      %356 = vmatmul.f32.gmra.mxu0 %v209
      %v357 = vpop.f32.mrf.mxu0
      %v358 = vadd.f32 %v277, %v357
      %359 = vmatmul.f32.gmra.mxu0 %v213
      %v360 = vpop.f32.mrf.mxu0
      %v361 = vadd.f32 %v277, %v360
      %362 = vmatmul.f32.gmra.mxu0 %v217
      %v363 = vpop.f32.mrf.mxu0
      %v364 = vadd.f32 %v277, %v363
      %365 = vmatmul.f32.gmra.mxu0 %v221
      %v366 = vpop.f32.mrf.mxu0
      %v367 = vadd.f32 %v277, %v366
      %368 = vdwg.mxu0
      %369 = vmatpush.msra.mxu0 %v256
      %370 = vmatpush.msra.mxu0 %v255
      %371 = vmatpush.msra.mxu0 %v254
      %372 = vmatpush.msra.mxu0 %v253
      %373 = vmatpush.msra.mxu0 %v252
      %374 = vmatpush.msra.mxu0 %v251
      %375 = vmatpush.msra.mxu0 %v250
      %376 = vmatpush.msra.mxu0 %v249
      %377 = vmatpush.msra.mxu0 %v248
      %378 = vmatpush.msra.mxu0 %v247
      %379 = vmatpush.msra.mxu0 %v246
      %380 = vmatpush.msra.mxu0 %v245
      %381 = vmatpush.msra.mxu0 %v244
      %382 = vmatpush.msra.mxu0 %v243
      %383 = vmatpush.msra.mxu0 %v242
      %384 = vmatpush.msra.mxu0 %v241
      %385 = vmatmul.f32.gmra.mxu0 %v178
      %v386 = vpop.f32.mrf.mxu0
      %v387 = vadd.f32 %v334, %v386
      %388 = vmatmul.f32.gmra.mxu0 %v182
      %v389 = vpop.f32.mrf.mxu0
      %v390 = vadd.f32 %v337, %v389
      %391 = vmatmul.f32.gmra.mxu0 %v186
      %v392 = vpop.f32.mrf.mxu0
      %v393 = vadd.f32 %v340, %v392
      %394 = vmatmul.f32.gmra.mxu0 %v190
      %v395 = vpop.f32.mrf.mxu0
      %v396 = vadd.f32 %v343, %v395
      %397 = vmatmul.f32.gmra.mxu0 %v194
      %v398 = vpop.f32.mrf.mxu0
      %v399 = vadd.f32 %v346, %v398
      %400 = vmatmul.f32.gmra.mxu0 %v198
      %v401 = vpop.f32.mrf.mxu0
      %v402 = vadd.f32 %v349, %v401
      %403 = vmatmul.f32.gmra.mxu0 %v202
      %v404 = vpop.f32.mrf.mxu0
      %v405 = vadd.f32 %v352, %v404
      %406 = vmatmul.f32.gmra.mxu0 %v206
      %v407 = vpop.f32.mrf.mxu0
      %v408 = vadd.f32 %v355, %v407
      %409 = vmatmul.f32.gmra.mxu0 %v210
      %v410 = vpop.f32.mrf.mxu0
      %v411 = vadd.f32 %v358, %v410
      %412 = vmatmul.f32.gmra.mxu0 %v214
      %v413 = vpop.f32.mrf.mxu0
      %v414 = vadd.f32 %v361, %v413
      %415 = vmatmul.f32.gmra.mxu0 %v218
      %v416 = vpop.f32.mrf.mxu0
      %v417 = vadd.f32 %v364, %v416
      %418 = vmatmul.f32.gmra.mxu0 %v222
      %v419 = vpop.f32.mrf.mxu0
      %v420 = vadd.f32 %v367, %v419
      %421 = vdwg.mxu0
      %422 = vmatpush.msra.mxu0 %v272
      %423 = vmatpush.msra.mxu0 %v271
      %424 = vmatpush.msra.mxu0 %v270
      %425 = vmatpush.msra.mxu0 %v269
      %426 = vmatpush.msra.mxu0 %v268
      %427 = vmatpush.msra.mxu0 %v267
      %428 = vmatpush.msra.mxu0 %v266
      %429 = vmatpush.msra.mxu0 %v265
      %430 = vmatpush.msra.mxu0 %v264
      %431 = vmatpush.msra.mxu0 %v263
      %432 = vmatpush.msra.mxu0 %v262
      %433 = vmatpush.msra.mxu0 %v261
      %434 = vmatpush.msra.mxu0 %v260
      %435 = vmatpush.msra.mxu0 %v259
      %436 = vmatpush.msra.mxu0 %v258
      %437 = vmatpush.msra.mxu0 %v257
      %438 = vmatmul.f32.gmra.mxu0 %v179
      %v439 = vpop.f32.mrf.mxu0
      %v440 = vadd.f32 %v387, %v439
      %441 = vmatmul.f32.gmra.mxu0 %v183
      %v442 = vpop.f32.mrf.mxu0
      %v443 = vadd.f32 %v390, %v442
      %444 = vmatmul.f32.gmra.mxu0 %v187
      %v445 = vpop.f32.mrf.mxu0
      %v446 = vadd.f32 %v393, %v445
      %447 = vmatmul.f32.gmra.mxu0 %v191
      %v448 = vpop.f32.mrf.mxu0
      %v449 = vadd.f32 %v396, %v448
      %450 = vmatmul.f32.gmra.mxu0 %v195
      %v451 = vpop.f32.mrf.mxu0
      %v452 = vadd.f32 %v399, %v451
      %453 = vmatmul.f32.gmra.mxu0 %v199
      %v454 = vpop.f32.mrf.mxu0
      %v455 = vadd.f32 %v402, %v454
      %456 = vmatmul.f32.gmra.mxu0 %v203
      %v457 = vpop.f32.mrf.mxu0
      %v458 = vadd.f32 %v405, %v457
      %459 = vmatmul.f32.gmra.mxu0 %v207
      %v460 = vpop.f32.mrf.mxu0
      %v461 = vadd.f32 %v408, %v460
      %462 = vmatmul.f32.gmra.mxu0 %v211
      %v463 = vpop.f32.mrf.mxu0
      %v464 = vadd.f32 %v411, %v463
      %465 = vmatmul.f32.gmra.mxu0 %v215
      %v466 = vpop.f32.mrf.mxu0
      %v467 = vadd.f32 %v414, %v466
      %468 = vmatmul.f32.gmra.mxu0 %v219
      %v469 = vpop.f32.mrf.mxu0
      %v470 = vadd.f32 %v417, %v469
      %471 = vmatmul.f32.gmra.mxu0 %v223
      %v472 = vpop.f32.mrf.mxu0
      %v473 = vadd.f32 %v420, %v472
      %474 = vdwg.mxu0
      %475 = vmatpush.msra.mxu0 0.0
      %476 = vmatpush.msra.mxu0 0.0
      %477 = vmatpush.msra.mxu0 0.0
      %478 = vmatpush.msra.mxu0 0.0
      %479 = vmatpush.msra.mxu0 0.0
      %480 = vmatpush.msra.mxu0 0.0
      %481 = vmatpush.msra.mxu0 0.0
      %482 = vmatpush.msra.mxu0 0.0
      %483 = vmatpush.msra.mxu0 0.0
      %484 = vmatpush.msra.mxu0 0.0
      %485 = vmatpush.msra.mxu0 0.0
      %486 = vmatpush.msra.mxu0 0.0
      %487 = vmatpush.msra.mxu0 0.0
      %488 = vmatpush.msra.mxu0 0.0
      %489 = vmatpush.msra.mxu0 %v274
      %490 = vmatpush.msra.mxu0 %v273
      %491 = vmatmul.f32.gmra.mxu0 %v281
      %v492 = vpop.f32.mrf.mxu0
      %v493 = vadd.f32 %v440, %v492
      %494 = vmatmul.f32.gmra.mxu0 %v284
      %v495 = vpop.f32.mrf.mxu0
      %v496 = vadd.f32 %v443, %v495
      %497 = vmatmul.f32.gmra.mxu0 %v287
      %v498 = vpop.f32.mrf.mxu0
      %v499 = vadd.f32 %v446, %v498
      %500 = vmatmul.f32.gmra.mxu0 %v290
      %v501 = vpop.f32.mrf.mxu0
      %v502 = vadd.f32 %v449, %v501
      %503 = vmatmul.f32.gmra.mxu0 %v293
      %v504 = vpop.f32.mrf.mxu0
      %v505 = vadd.f32 %v452, %v504
      %506 = vmatmul.f32.gmra.mxu0 %v296
      %v507 = vpop.f32.mrf.mxu0
      %v508 = vadd.f32 %v455, %v507
      %509 = vmatmul.f32.gmra.mxu0 %v299
      %v510 = vpop.f32.mrf.mxu0
      %v511 = vadd.f32 %v458, %v510
      %512 = vmatmul.f32.gmra.mxu0 %v302
      %v513 = vpop.f32.mrf.mxu0
      %v514 = vadd.f32 %v461, %v513
      %515 = vmatmul.f32.gmra.mxu0 %v305
      %v516 = vpop.f32.mrf.mxu0
      %v517 = vadd.f32 %v464, %v516
      %518 = vmatmul.f32.gmra.mxu0 %v308
      %v519 = vpop.f32.mrf.mxu0
      %v520 = vadd.f32 %v467, %v519
      %521 = vmatmul.f32.gmra.mxu0 %v311
      %v522 = vpop.f32.mrf.mxu0
      %v523 = vadd.f32 %v470, %v522
      %524 = vmatmul.f32.gmra.mxu0 %v314
      %v525 = vpop.f32.mrf.mxu0
      %v526 = vadd.f32 %v473, %v525
      %527 = vdwg.mxu0
      %vm528 = vcmask 195584
      %529 = vst.msk [vmem:[%s175] sm:$0xff] %vm528, %v493
      %530 = vst.msk [vmem:[%s175 + $0x8] sm:$0xff] %vm528, %v496
      %531 = vst.msk [vmem:[%s175 + $0x10] sm:$0xff] %vm528, %v499
      %532 = vst.msk [vmem:[%s175 + $0x18] sm:$0xff] %vm528, %v502
      %533 = vst.msk [vmem:[%s175 + $0x20] sm:$0xff] %vm528, %v505
      %534 = vst.msk [vmem:[%s175 + $0x28] sm:$0xff] %vm528, %v508
      %535 = vst.msk [vmem:[%s175 + $0x30] sm:$0xff] %vm528, %v511
      %536 = vst.msk [vmem:[%s175 + $0x38] sm:$0xff] %vm528, %v514
      %537 = vst.msk [vmem:[%s175 + $0x40] sm:$0xff] %vm528, %v517
      %538 = vst.msk [vmem:[%s175 + $0x48] sm:$0xff] %vm528, %v520
      %539 = vst.msk [vmem:[%s175 + $0x50] sm:$0xff] %vm528, %v523
      %540 = vst.msk [vmem:[%s175 + $0x58] sm:$0xff] %vm528, %v526
      %s541 = smul.u32 12, %s14
      %p542 = scmp.lt.s32.totalorder %s541, 35
      %s543 = scalar_select %p542, %s541, 35
      %s544 = smul.addr %s543, 8
      %s545 = scalar_lea.vmem %s3, %s544
      // Predicated region
      $region33: #{net_forward.16} parent=31 // pred_check
        %p546 = pneg %p100
      $region34: #{net_forward.16} parent=31 // pred_check_branch
        %548 = sbr.rel (%p546) target = $region36
      $region35: #{net_forward.16} parent=31 // pred_region
        %s549 = smul.u32 12, %s14
      $region36: #{net_forward.16} parent=31 // pred_fallthru
        _
    $region32: #{net_forward.16} parent=5 // pred_fallthru
      _
    %p550 = scmp.le.s32.totalorder 2, %s9
    // Predicated region
    $region37: #{net_forward.16} parent=5 // pred_check
      %p551 = pneg %p550
    $region38: #{net_forward.16} parent=5 // pred_check_branch
      %553 = sbr.rel (%p551) target = $region40
    $region39: #{net_forward.16} parent=5 // pred_region
      %s554 = ssub.s32 %s9, 2
      // Predicated region
      $region41: #{net_forward.16} parent=39 // pred_check
        %p555 = pneg %p106
      $region42: #{net_forward.16} parent=39 // pred_check_branch
        %557 = sbr.rel (%p555) target = $region44
      $region43: #{net_forward.16} parent=39 // pred_region
        %s558 = smul.u32 12, %s15
        %p559 = scmp.lt.s32.totalorder %s558, 35
        %s560 = scalar_select %p559, %s558, 35
        %s561 = smul.addr %s560, 8
        %s562 = scalar_lea.vmem %s3, %s561
      $region44: #{net_forward.16} parent=39 // pred_fallthru
        _
    $region40: #{net_forward.16} parent=5 // pred_fallthru
      _
  $region6: #{net_forward.16} parent=0 // loop_footer
    %s13 = sadd.s32 1, %s9
  $region7: #{net_forward.16} parent=0 // loop_footer_branch
    %8 = sbr.rel target = $region3
  $region8: #{net_forward.16} parent=0 // loop_exit
    _

// kernel: net_forward.14
$region0: #{net_forward.14}
  #allocation0 [shape = 'u32[]', space=smem, size = 0x4, offset = 0x4, fixed_abs, tag = 'smem constant byte address 0x4 - core index']
  #allocation1 [shape = 'u32[72,128]{1,0:T(1,128)}', space=vmem, size = 0x9000, scoped, tag = 'internal scratch']
  %s0 = inlined_call_operand.vmem [shape: f32[288,10], index: 0, kind: input, shape index: {}]
  %s1 = inlined_call_operand.vmem [shape: f32[10,56], index: 1, kind: input, shape index: {}]
  %s2 = inlined_call_operand.vmem [shape: f32[1,56], index: 2, kind: input, shape index: {}]
  %s3 = inlined_call_operand.vmem [shape: f32[288,56], index: 3, kind: output, shape index: {}]
  %s4 = sld [smem:[#allocation0]]
  $region45: #{net_forward.14} parent=0
    _
  %s6 = ssub.s32 1, %s4
  %s7 = scalar_select 0, %s6, %s4
  loop: start=0, step=1, limit=5
  $region2: #{net_forward.14} parent=0 // loop_pre_header
    _
  $region3: #{net_forward.14} parent=0 // loop_header
    %s9 = sphi 0, %s13
    %p10 = scmp.ge.s32.totalorder %s9, 5
    %s19 = sphi 0, %s21
    %s22 = sphi 0, %s19
    %s23 = sphi 0, %s22
    %s39 = sphi 0, %s23
    %s43 = sphi 0, %s43
    %s45 = sphi 0, %s43
    %s46 = sphi 0, %s45
    %s60 = sphi 0, %s46
    %s64 = sphi 0, %s64
    %s66 = sphi 0, %s64
    %s67 = sphi 0, %s66
    %s81 = sphi 0, %s67
    %s87 = sphi 0, %s89
    %s90 = sphi 0, %s87
    %s91 = sphi 0, %s90
    %s107 = sphi 0, %s91
  $region4: #{net_forward.14} parent=0 // loop_header_branch
    %12 = sbr.rel (%p10) target = $region8
  $region5: #{net_forward.14} parent=0 // loop_body
    %s14 = ssub.s32 %s9, 1
    %s15 = ssub.s32 %s9, 2
    %s16 = sadd.s32 %s9, 1
    %s17 = ssub.s32 %s9, %s16
    %p18 = scmp.eq.s32.totalorder %s17, 0
    %s20 = sadd.s32 %s19, 1
    %s21 = scalar_select %p18, %s19, %s20
    %p24 = pneg %p18
    %p25 = scmp.eq.s32.totalorder %s9, 2
    %p26 = por %p24, %p25
    %p27 = scmp.ne.s32.totalorder %s19, %s22
    %p28 = scmp.eq.s32.totalorder %s9, 0
    %p29 = por %p27, %p28
    %p30 = scmp.ne.s32.totalorder %s19, %s22
    %p31 = scmp.eq.s32.totalorder %s14, 2
    %p32 = por %p30, %p31
    %p33 = scmp.ne.s32.totalorder %s22, %s23
    %p34 = scmp.eq.s32.totalorder %s14, 0
    %p35 = por %p33, %p34
    %p36 = scmp.ne.s32.totalorder %s22, %s23
    %p37 = scmp.eq.s32.totalorder %s15, 2
    %p38 = por %p36, %p37
    %p40 = scmp.ne.s32.totalorder %s23, %s39
    %p41 = scmp.eq.s32.totalorder %s15, 0
    %p42 = por %p40, %p41
    %s44 = sadd.s32 %s43, 1
    %p47 = scmp.eq.s32.totalorder %s9, 2
    %p48 = scmp.ne.s32.totalorder %s43, %s45
    %p49 = scmp.eq.s32.totalorder %s9, 0
    %p50 = por %p48, %p49
    %p51 = scmp.ne.s32.totalorder %s43, %s45
    %p52 = scmp.eq.s32.totalorder %s14, 2
    %p53 = por %p51, %p52
    %p54 = scmp.ne.s32.totalorder %s45, %s46
    %p55 = scmp.eq.s32.totalorder %s14, 0
    %p56 = por %p54, %p55
    %p57 = scmp.ne.s32.totalorder %s45, %s46
    %p58 = scmp.eq.s32.totalorder %s15, 2
    %p59 = por %p57, %p58
    %p61 = scmp.ne.s32.totalorder %s46, %s60
    %p62 = scmp.eq.s32.totalorder %s15, 0
    %p63 = por %p61, %p62
    %s65 = sadd.s32 %s64, 1
    %p68 = scmp.eq.s32.totalorder %s9, 2
    %p69 = scmp.ne.s32.totalorder %s64, %s66
    %p70 = scmp.eq.s32.totalorder %s9, 0
    %p71 = por %p69, %p70
    %p72 = scmp.ne.s32.totalorder %s64, %s66
    %p73 = scmp.eq.s32.totalorder %s14, 2
    %p74 = por %p72, %p73
    %p75 = scmp.ne.s32.totalorder %s66, %s67
    %p76 = scmp.eq.s32.totalorder %s14, 0
    %p77 = por %p75, %p76
    %p78 = scmp.ne.s32.totalorder %s66, %s67
    %p79 = scmp.eq.s32.totalorder %s15, 2
    %p80 = por %p78, %p79
    %p82 = scmp.ne.s32.totalorder %s67, %s81
    %p83 = scmp.eq.s32.totalorder %s15, 0
    %p84 = por %p82, %p83
    %s85 = ssub.s32 %s9, %s16
    %p86 = scmp.eq.s32.totalorder %s85, 0
    %s88 = sadd.s32 %s87, 1
    %s89 = scalar_select %p86, %s87, %s88
    %p92 = pneg %p86
    %p93 = scmp.eq.s32.totalorder %s9, 2
    %p94 = por %p92, %p93
    %p95 = scmp.ne.s32.totalorder %s87, %s90
    %p96 = scmp.eq.s32.totalorder %s9, 0
    %p97 = por %p95, %p96
    %p98 = scmp.ne.s32.totalorder %s87, %s90
    %p99 = scmp.eq.s32.totalorder %s14, 2
    %p100 = por %p98, %p99
    %p101 = scmp.ne.s32.totalorder %s90, %s91
    %p102 = scmp.eq.s32.totalorder %s14, 0
    %p103 = por %p101, %p102
    %p104 = scmp.ne.s32.totalorder %s90, %s91
    %p105 = scmp.eq.s32.totalorder %s15, 2
    %p106 = por %p104, %p105
    %p108 = scmp.ne.s32.totalorder %s91, %s107
    %p109 = scmp.eq.s32.totalorder %s15, 0
    %p110 = por %p108, %p109
    %p111 = scmp.le.s32.totalorder 1, %s9
    %p112 = scmp.lt.s32.totalorder %s9, 4
    %p113 = pnand %p111, %p112
    %p114 = pneg %p113
    // Predicated region
    $region9: #{net_forward.14} parent=5 // pred_check
      _
    $region10: #{net_forward.14} parent=5 // pred_check_branch
      %116 = sbr.rel (%p113) target = $region12
    $region11: #{net_forward.14} parent=5 // pred_region
      %s117 = ssub.s32 %s9, 1
      // Predicated region
      $region13: #{net_forward.14} parent=11 // pred_check
        %p118 = pneg %p56
      $region14: #{net_forward.14} parent=11 // pred_check_branch
        %120 = sbr.rel (%p118) target = $region16
      $region15: #{net_forward.14} parent=11 // pred_region
        _
      $region16: #{net_forward.14} parent=11 // pred_fallthru
        _
      // Predicated region
      $region17: #{net_forward.14} parent=11 // pred_check
        %p121 = pneg %p77
      $region18: #{net_forward.14} parent=11 // pred_check_branch
        %123 = sbr.rel (%p121) target = $region20
      $region19: #{net_forward.14} parent=11 // pred_region
        _
      $region20: #{net_forward.14} parent=11 // pred_fallthru
        _
    $region12: #{net_forward.14} parent=5 // pred_fallthru
      _
    %p124 = scmp.lt.s32.totalorder %s9, 3
    // Predicated region
    $region21: #{net_forward.14} parent=5 // pred_check
      %p125 = pneg %p124
    $region22: #{net_forward.14} parent=5 // pred_check_branch
      %127 = sbr.rel (%p125) target = $region24
    $region23: #{net_forward.14} parent=5 // pred_region
      // Predicated region
      $region25: #{net_forward.14} parent=23 // pred_check
        %p128 = pneg %p29
      $region26: #{net_forward.14} parent=23 // pred_check_branch
        %130 = sbr.rel (%p128) target = $region28
      $region27: #{net_forward.14} parent=23 // pred_region
        %s131 = smul.u32 12, %s9
        %p132 = scmp.lt.s32.totalorder %s131, 35
        %s133 = scalar_select %p132, %s131, 35
        %s134 = smul.addr %s133, 8
        %s135 = scalar_lea.vmem %s0, %s134
        %s136 = smul.u32 12, %s9
      $region28: #{net_forward.14} parent=23 // pred_fallthru
        _
    $region24: #{net_forward.14} parent=5 // pred_fallthru
      _
    %p137 = scmp.le.s32.totalorder 1, %s9
    %p138 = scmp.lt.s32.totalorder %s9, 4
    %p139 = pnand %p137, %p138
    %p140 = pneg %p139
    // Predicated region
    $region29: #{net_forward.14} parent=5 // pred_check
      _
    $region30: #{net_forward.14} parent=5 // pred_check_branch
      %142 = sbr.rel (%p139) target = $region32
    $region31: #{net_forward.14} parent=5 // pred_region
      %s143 = ssub.s32 %s9, 1
      %s144 = smul.u32 12, %s14
      %p145 = scmp.lt.s32.totalorder %s144, 35
      %s146 = scalar_select %p145, %s144, 35
      %s147 = smul.addr %s146, 8
      %s148 = scalar_lea.vmem %s0, %s147
      %p149 = pneg %p35
      %p150 = pneg %p32
      %p151 = pneg %p56
      %p152 = pneg %p53
      %p153 = pneg %p77
      %p154 = pneg %p74
      %p155 = pneg %p103
      %p156 = pneg %p100
      %s157 = smul.u32 12, %s14
      %p158 = scmp.lt.s32.totalorder %s157, 35
      %s159 = scalar_select %p158, %s157, 35
      %s160 = smul.addr %s159, 8
      %s161 = scalar_lea.vmem %s3, %s160
      %s162 = smul.u32 12, %s14
      %p163 = scmp.lt.s32.totalorder %s162, 35
      %s164 = scalar_select %p163, %s162, 35
      %s165 = smul.addr %s164, 8
      %s166 = scalar_lea.vmem %s0, %s165
      %s167 = smul.u32 12, %s14
      %s168 = smul.u32 12, %s14
      %p169 = scmp.lt.s32.totalorder %s168, 35
      %s170 = scalar_select %p169, %s168, 35
      %s171 = smul.addr %s170, 8
      %s172 = scalar_lea.vmem %s3, %s171
      %s173 = smul.u32 12, %s14
      %v174 = vld [vmem:[%s166] sm:$0xff]
      %v175 = vld [vmem:[%s166 + $0x8] sm:$0xff]
      %v176 = vld [vmem:[%s166 + $0x10] sm:$0xff]
      %v177 = vld [vmem:[%s166 + $0x18] sm:$0xff]
      %v178 = vld [vmem:[%s166 + $0x20] sm:$0xff]
      %v179 = vld [vmem:[%s166 + $0x28] sm:$0xff]
      %v180 = vld [vmem:[%s166 + $0x30] sm:$0xff]
      %v181 = vld [vmem:[%s166 + $0x38] sm:$0xff]
      %v182 = vld [vmem:[%s166 + $0x40] sm:$0xff]
      %v183 = vld [vmem:[%s166 + $0x48] sm:$0xff]
      %v184 = vld [vmem:[%s166 + $0x50] sm:$0xff]
      %v185 = vld [vmem:[%s166 + $0x58] sm:$0xff]
      %v186 = vld [vmem:[%s1] sm:$0xff]
      %v187 = vld [vmem:[%s1 + $0x8] sm:$0x3]
      %v188 = vld [vmem:[%s2] sm:$0x1]
      %v190 = vperm.slane %v188, 0
      %vm192 = vcmask 80896
      %v194 = vsel %vm192, %v174, 0
      %v197 = vsel %vm192, %v175, 0
      %v200 = vsel %vm192, %v176, 0
      %v203 = vsel %vm192, %v177, 0
      %v206 = vsel %vm192, %v178, 0
      %v209 = vsel %vm192, %v179, 0
      %v212 = vsel %vm192, %v180, 0
      %v215 = vsel %vm192, %v181, 0
      %v218 = vsel %vm192, %v182, 0
      %v221 = vsel %vm192, %v183, 0
      %v224 = vsel %vm192, %v184, 0
      %v227 = vsel %vm192, %v185, 0
      %vm229 = vcmask 1041408
      %v231 = vsel %vm229, %v187, 0
      %233 = vmatpush.msra.mxu0 0.0
      %234 = vmatpush.msra.mxu0 0.0
      %235 = vmatpush.msra.mxu0 0.0
      %236 = vmatpush.msra.mxu0 0.0
      %237 = vmatpush.msra.mxu0 0.0
      %238 = vmatpush.msra.mxu0 0.0
      %239 = vmatpush.msra.mxu0 0.0
      %240 = vmatpush.msra.mxu0 0.0
      %241 = vmatpush.msra.mxu0 0.0
      %242 = vmatpush.msra.mxu0 0.0
      %243 = vmatpush.msra.mxu0 0.0
      %244 = vmatpush.msra.mxu0 0.0
      %245 = vmatpush.msra.mxu0 0.0
      %246 = vmatpush.msra.mxu0 0.0
      %247 = vmatpush.msra.mxu0 %v231
      %248 = vmatpush.msra.mxu0 %v186
      %249 = vmatmul.f32.gmra.mxu0 %v194
      %v250 = vpop.f32.mrf.mxu0
      %v251 = vadd.f32 %v190, %v250
      %252 = vmatmul.f32.gmra.mxu0 %v197
      %v253 = vpop.f32.mrf.mxu0
      %v254 = vadd.f32 %v190, %v253
      %255 = vmatmul.f32.gmra.mxu0 %v200
      %v256 = vpop.f32.mrf.mxu0
      %v257 = vadd.f32 %v190, %v256
      %258 = vmatmul.f32.gmra.mxu0 %v203
      %v259 = vpop.f32.mrf.mxu0
      %v260 = vadd.f32 %v190, %v259
      %261 = vmatmul.f32.gmra.mxu0 %v206
      %v262 = vpop.f32.mrf.mxu0
      %v263 = vadd.f32 %v190, %v262
      %264 = vmatmul.f32.gmra.mxu0 %v209
      %v265 = vpop.f32.mrf.mxu0
      %v266 = vadd.f32 %v190, %v265
      %267 = vmatmul.f32.gmra.mxu0 %v212
      %v268 = vpop.f32.mrf.mxu0
      %v269 = vadd.f32 %v190, %v268
      %270 = vmatmul.f32.gmra.mxu0 %v215
      %v271 = vpop.f32.mrf.mxu0
      %v272 = vadd.f32 %v190, %v271
      %273 = vmatmul.f32.gmra.mxu0 %v218
      %v274 = vpop.f32.mrf.mxu0
      %v275 = vadd.f32 %v190, %v274
      %276 = vmatmul.f32.gmra.mxu0 %v221
      %v277 = vpop.f32.mrf.mxu0
      %v278 = vadd.f32 %v190, %v277
      %279 = vmatmul.f32.gmra.mxu0 %v224
      %v280 = vpop.f32.mrf.mxu0
      %v281 = vadd.f32 %v190, %v280
      %282 = vmatmul.f32.gmra.mxu0 %v227
      %v283 = vpop.f32.mrf.mxu0
      %v284 = vadd.f32 %v190, %v283
      %285 = vdwg.mxu0
      %vm286 = vcmask 457728
      %287 = vst.msk [vmem:[%s172] sm:$0xff] %vm286, %v251
      %288 = vst.msk [vmem:[%s172 + $0x8] sm:$0xff] %vm286, %v254
      %289 = vst.msk [vmem:[%s172 + $0x10] sm:$0xff] %vm286, %v257
      %290 = vst.msk [vmem:[%s172 + $0x18] sm:$0xff] %vm286, %v260
      %291 = vst.msk [vmem:[%s172 + $0x20] sm:$0xff] %vm286, %v263
      %292 = vst.msk [vmem:[%s172 + $0x28] sm:$0xff] %vm286, %v266
      %293 = vst.msk [vmem:[%s172 + $0x30] sm:$0xff] %vm286, %v269
      %294 = vst.msk [vmem:[%s172 + $0x38] sm:$0xff] %vm286, %v272
      %295 = vst.msk [vmem:[%s172 + $0x40] sm:$0xff] %vm286, %v275
      %296 = vst.msk [vmem:[%s172 + $0x48] sm:$0xff] %vm286, %v278
      %297 = vst.msk [vmem:[%s172 + $0x50] sm:$0xff] %vm286, %v281
      %298 = vst.msk [vmem:[%s172 + $0x58] sm:$0xff] %vm286, %v284
      %s299 = smul.u32 12, %s14
      %p300 = scmp.lt.s32.totalorder %s299, 35
      %s301 = scalar_select %p300, %s299, 35
      %s302 = smul.addr %s301, 8
      %s303 = scalar_lea.vmem %s3, %s302
      // Predicated region
      $region33: #{net_forward.14} parent=31 // pred_check
        %p304 = pneg %p100
      $region34: #{net_forward.14} parent=31 // pred_check_branch
        %306 = sbr.rel (%p304) target = $region36
      $region35: #{net_forward.14} parent=31 // pred_region
        %s307 = smul.u32 12, %s14
      $region36: #{net_forward.14} parent=31 // pred_fallthru
        _
    $region32: #{net_forward.14} parent=5 // pred_fallthru
      _
    %p308 = scmp.le.s32.totalorder 2, %s9
    // Predicated region
    $region37: #{net_forward.14} parent=5 // pred_check
      %p309 = pneg %p308
    $region38: #{net_forward.14} parent=5 // pred_check_branch
      %311 = sbr.rel (%p309) target = $region40
    $region39: #{net_forward.14} parent=5 // pred_region
      %s312 = ssub.s32 %s9, 2
      // Predicated region
      $region41: #{net_forward.14} parent=39 // pred_check
        %p313 = pneg %p106
      $region42: #{net_forward.14} parent=39 // pred_check_branch
        %315 = sbr.rel (%p313) target = $region44
      $region43: #{net_forward.14} parent=39 // pred_region
        %s316 = smul.u32 12, %s15
        %p317 = scmp.lt.s32.totalorder %s316, 35
        %s318 = scalar_select %p317, %s316, 35
        %s319 = smul.addr %s318, 8
        %s320 = scalar_lea.vmem %s3, %s319
      $region44: #{net_forward.14} parent=39 // pred_fallthru
        _
    $region40: #{net_forward.14} parent=5 // pred_fallthru
      _
  $region6: #{net_forward.14} parent=0 // loop_footer
    %s13 = sadd.s32 1, %s9
  $region7: #{net_forward.14} parent=0 // loop_footer_branch
    %8 = sbr.rel target = $region3
  $region8: #{net_forward.14} parent=0 // loop_exit
    _

// kernel: net_forward.17
$region0: #{net_forward.17}
  #allocation0 [shape = 'u32[]', space=smem, size = 0x4, offset = 0x4, fixed_abs, tag = 'smem constant byte address 0x4 - core index']
  #allocation1 [shape = 'u32[72,128]{1,0:T(1,128)}', space=vmem, size = 0x9000, scoped, tag = 'internal scratch']
  %s0 = inlined_call_operand.vmem [shape: f32[288,144], index: 0, kind: input, shape index: {}]
  %s1 = inlined_call_operand.vmem [shape: f32[144,24], index: 1, kind: input, shape index: {}]
  %s2 = inlined_call_operand.vmem [shape: f32[1,24], index: 2, kind: input, shape index: {}]
  %s3 = inlined_call_operand.vmem [shape: f32[288,24], index: 3, kind: output, shape index: {}]
  %s4 = sld [smem:[#allocation0]]
  $region45: #{net_forward.17} parent=0
    _
  %s6 = ssub.s32 1, %s4
  %s7 = scalar_select 0, %s6, %s4
  loop: start=0, step=1, limit=5
  $region2: #{net_forward.17} parent=0 // loop_pre_header
    _
  $region3: #{net_forward.17} parent=0 // loop_header
    %s9 = sphi 0, %s13
    %p10 = scmp.ge.s32.totalorder %s9, 5
    %s19 = sphi 0, %s21
    %s22 = sphi 0, %s19
    %s23 = sphi 0, %s22
    %s39 = sphi 0, %s23
    %s43 = sphi 0, %s43
    %s45 = sphi 0, %s43
    %s46 = sphi 0, %s45
    %s60 = sphi 0, %s46
    %s64 = sphi 0, %s64
    %s66 = sphi 0, %s64
    %s67 = sphi 0, %s66
    %s81 = sphi 0, %s67
    %s87 = sphi 0, %s89
    %s90 = sphi 0, %s87
    %s91 = sphi 0, %s90
    %s107 = sphi 0, %s91
  $region4: #{net_forward.17} parent=0 // loop_header_branch
    %12 = sbr.rel (%p10) target = $region8
  $region5: #{net_forward.17} parent=0 // loop_body
    %s14 = ssub.s32 %s9, 1
    %s15 = ssub.s32 %s9, 2
    %s16 = sadd.s32 %s9, 1
    %s17 = ssub.s32 %s9, %s16
    %p18 = scmp.eq.s32.totalorder %s17, 0
    %s20 = sadd.s32 %s19, 1
    %s21 = scalar_select %p18, %s19, %s20
    %p24 = pneg %p18
    %p25 = scmp.eq.s32.totalorder %s9, 2
    %p26 = por %p24, %p25
    %p27 = scmp.ne.s32.totalorder %s19, %s22
    %p28 = scmp.eq.s32.totalorder %s9, 0
    %p29 = por %p27, %p28
    %p30 = scmp.ne.s32.totalorder %s19, %s22
    %p31 = scmp.eq.s32.totalorder %s14, 2
    %p32 = por %p30, %p31
    %p33 = scmp.ne.s32.totalorder %s22, %s23
    %p34 = scmp.eq.s32.totalorder %s14, 0
    %p35 = por %p33, %p34
    %p36 = scmp.ne.s32.totalorder %s22, %s23
    %p37 = scmp.eq.s32.totalorder %s15, 2
    %p38 = por %p36, %p37
    %p40 = scmp.ne.s32.totalorder %s23, %s39
    %p41 = scmp.eq.s32.totalorder %s15, 0
    %p42 = por %p40, %p41
    %s44 = sadd.s32 %s43, 1
    %p47 = scmp.eq.s32.totalorder %s9, 2
    %p48 = scmp.ne.s32.totalorder %s43, %s45
    %p49 = scmp.eq.s32.totalorder %s9, 0
    %p50 = por %p48, %p49
    %p51 = scmp.ne.s32.totalorder %s43, %s45
    %p52 = scmp.eq.s32.totalorder %s14, 2
    %p53 = por %p51, %p52
    %p54 = scmp.ne.s32.totalorder %s45, %s46
    %p55 = scmp.eq.s32.totalorder %s14, 0
    %p56 = por %p54, %p55
    %p57 = scmp.ne.s32.totalorder %s45, %s46
    %p58 = scmp.eq.s32.totalorder %s15, 2
    %p59 = por %p57, %p58
    %p61 = scmp.ne.s32.totalorder %s46, %s60
    %p62 = scmp.eq.s32.totalorder %s15, 0
    %p63 = por %p61, %p62
    %s65 = sadd.s32 %s64, 1
    %p68 = scmp.eq.s32.totalorder %s9, 2
    %p69 = scmp.ne.s32.totalorder %s64, %s66
    %p70 = scmp.eq.s32.totalorder %s9, 0
    %p71 = por %p69, %p70
    %p72 = scmp.ne.s32.totalorder %s64, %s66
    %p73 = scmp.eq.s32.totalorder %s14, 2
    %p74 = por %p72, %p73
    %p75 = scmp.ne.s32.totalorder %s66, %s67
    %p76 = scmp.eq.s32.totalorder %s14, 0
    %p77 = por %p75, %p76
    %p78 = scmp.ne.s32.totalorder %s66, %s67
    %p79 = scmp.eq.s32.totalorder %s15, 2
    %p80 = por %p78, %p79
    %p82 = scmp.ne.s32.totalorder %s67, %s81
    %p83 = scmp.eq.s32.totalorder %s15, 0
    %p84 = por %p82, %p83
    %s85 = ssub.s32 %s9, %s16
    %p86 = scmp.eq.s32.totalorder %s85, 0
    %s88 = sadd.s32 %s87, 1
    %s89 = scalar_select %p86, %s87, %s88
    %p92 = pneg %p86
    %p93 = scmp.eq.s32.totalorder %s9, 2
    %p94 = por %p92, %p93
    %p95 = scmp.ne.s32.totalorder %s87, %s90
    %p96 = scmp.eq.s32.totalorder %s9, 0
    %p97 = por %p95, %p96
    %p98 = scmp.ne.s32.totalorder %s87, %s90
    %p99 = scmp.eq.s32.totalorder %s14, 2
    %p100 = por %p98, %p99
    %p101 = scmp.ne.s32.totalorder %s90, %s91
    %p102 = scmp.eq.s32.totalorder %s14, 0
    %p103 = por %p101, %p102
    %p104 = scmp.ne.s32.totalorder %s90, %s91
    %p105 = scmp.eq.s32.totalorder %s15, 2
    %p106 = por %p104, %p105
    %p108 = scmp.ne.s32.totalorder %s91, %s107
    %p109 = scmp.eq.s32.totalorder %s15, 0
    %p110 = por %p108, %p109
    %p111 = scmp.le.s32.totalorder 1, %s9
    %p112 = scmp.lt.s32.totalorder %s9, 4
    %p113 = pnand %p111, %p112
    %p114 = pneg %p113
    // Predicated region
    $region9: #{net_forward.17} parent=5 // pred_check
      _
    $region10: #{net_forward.17} parent=5 // pred_check_branch
      %116 = sbr.rel (%p113) target = $region12
    $region11: #{net_forward.17} parent=5 // pred_region
      %s117 = ssub.s32 %s9, 1
      // Predicated region
      $region13: #{net_forward.17} parent=11 // pred_check
        %p118 = pneg %p56
      $region14: #{net_forward.17} parent=11 // pred_check_branch
        %120 = sbr.rel (%p118) target = $region16
      $region15: #{net_forward.17} parent=11 // pred_region
        _
      $region16: #{net_forward.17} parent=11 // pred_fallthru
        _
      // Predicated region
      $region17: #{net_forward.17} parent=11 // pred_check
        %p121 = pneg %p77
      $region18: #{net_forward.17} parent=11 // pred_check_branch
        %123 = sbr.rel (%p121) target = $region20
      $region19: #{net_forward.17} parent=11 // pred_region
        _
      $region20: #{net_forward.17} parent=11 // pred_fallthru
        _
    $region12: #{net_forward.17} parent=5 // pred_fallthru
      _
    %p124 = scmp.lt.s32.totalorder %s9, 3
    // Predicated region
    $region21: #{net_forward.17} parent=5 // pred_check
      %p125 = pneg %p124
    $region22: #{net_forward.17} parent=5 // pred_check_branch
      %127 = sbr.rel (%p125) target = $region24
    $region23: #{net_forward.17} parent=5 // pred_region
      // Predicated region
      $region25: #{net_forward.17} parent=23 // pred_check
        %p128 = pneg %p29
      $region26: #{net_forward.17} parent=23 // pred_check_branch
        %130 = sbr.rel (%p128) target = $region28
      $region27: #{net_forward.17} parent=23 // pred_region
        %s131 = smul.u32 12, %s9
        %p132 = scmp.lt.s32.totalorder %s131, 35
        %s133 = scalar_select %p132, %s131, 35
        %s134 = smul.addr %s133, 2
        %s135 = smul.addr %s134, 8
        %s136 = scalar_lea.vmem %s0, %s135
        %s137 = smul.u32 12, %s9
      $region28: #{net_forward.17} parent=23 // pred_fallthru
        _
    $region24: #{net_forward.17} parent=5 // pred_fallthru
      _
    %p138 = scmp.le.s32.totalorder 1, %s9
    %p139 = scmp.lt.s32.totalorder %s9, 4
    %p140 = pnand %p138, %p139
    %p141 = pneg %p140
    // Predicated region
    $region29: #{net_forward.17} parent=5 // pred_check
      _
    $region30: #{net_forward.17} parent=5 // pred_check_branch
      %143 = sbr.rel (%p140) target = $region32
    $region31: #{net_forward.17} parent=5 // pred_region
      %s144 = ssub.s32 %s9, 1
      %s145 = smul.u32 12, %s14
      %p146 = scmp.lt.s32.totalorder %s145, 35
      %s147 = scalar_select %p146, %s145, 35
      %s148 = smul.addr %s147, 2
      %s149 = smul.addr %s148, 8
      %s150 = scalar_lea.vmem %s0, %s149
      %p151 = pneg %p35
      %p152 = pneg %p32
      %p153 = pneg %p56
      %p154 = pneg %p53
      %p155 = pneg %p77
      %p156 = pneg %p74
      %p157 = pneg %p103
      %p158 = pneg %p100
      %s159 = smul.u32 12, %s14
      %p160 = scmp.lt.s32.totalorder %s159, 35
      %s161 = scalar_select %p160, %s159, 35
      %s162 = smul.addr %s161, 8
      %s163 = scalar_lea.vmem %s3, %s162
      %s164 = smul.u32 12, %s14
      %p165 = scmp.lt.s32.totalorder %s164, 35
      %s166 = scalar_select %p165, %s164, 35
      %s167 = smul.addr %s166, 2
      %s168 = smul.addr %s167, 8
      %s169 = scalar_lea.vmem %s0, %s168
      %s170 = smul.u32 12, %s14
      %s171 = smul.u32 12, %s14
      %p172 = scmp.lt.s32.totalorder %s171, 35
      %s173 = scalar_select %p172, %s171, 35
      %s174 = smul.addr %s173, 8
      %s175 = scalar_lea.vmem %s3, %s174
      %s176 = smul.u32 12, %s14
      %v177 = vld [vmem:[%s169] sm:$0xff]
      %v178 = vld [vmem:[%s169 + $0x8] sm:$0xff]
      %v179 = vld [vmem:[%s169 + $0x10] sm:$0xff]
      %v180 = vld [vmem:[%s169 + $0x18] sm:$0xff]
      %v181 = vld [vmem:[%s169 + $0x20] sm:$0xff]
      %v182 = vld [vmem:[%s169 + $0x28] sm:$0xff]
      %v183 = vld [vmem:[%s169 + $0x30] sm:$0xff]
      %v184 = vld [vmem:[%s169 + $0x38] sm:$0xff]
      %v185 = vld [vmem:[%s169 + $0x40] sm:$0xff]
      %v186 = vld [vmem:[%s169 + $0x48] sm:$0xff]
      %v187 = vld [vmem:[%s169 + $0x50] sm:$0xff]
      %v188 = vld [vmem:[%s169 + $0x58] sm:$0xff]
      %v189 = vld [vmem:[%s169 + $0x60] sm:$0xff]
      %v190 = vld [vmem:[%s169 + $0x68] sm:$0xff]
      %v191 = vld [vmem:[%s169 + $0x70] sm:$0xff]
      %v192 = vld [vmem:[%s169 + $0x78] sm:$0xff]
      %v193 = vld [vmem:[%s169 + $0x80] sm:$0xff]
      %v194 = vld [vmem:[%s169 + $0x88] sm:$0xff]
      %v195 = vld [vmem:[%s169 + $0x90] sm:$0xff]
      %v196 = vld [vmem:[%s169 + $0x98] sm:$0xff]
      %v197 = vld [vmem:[%s169 + $0xa0] sm:$0xff]
      %v198 = vld [vmem:[%s169 + $0xa8] sm:$0xff]
      %v199 = vld [vmem:[%s169 + $0xb0] sm:$0xff]
      %v200 = vld [vmem:[%s169 + $0xb8] sm:$0xff]
      %v201 = vld [vmem:[%s1] sm:$0xff]
      %v202 = vld [vmem:[%s1 + $0x8] sm:$0xff]
      %v203 = vld [vmem:[%s1 + $0x10] sm:$0xff]
      %v204 = vld [vmem:[%s1 + $0x18] sm:$0xff]
      %v205 = vld [vmem:[%s1 + $0x20] sm:$0xff]
      %v206 = vld [vmem:[%s1 + $0x28] sm:$0xff]
      %v207 = vld [vmem:[%s1 + $0x30] sm:$0xff]
      %v208 = vld [vmem:[%s1 + $0x38] sm:$0xff]
      %v209 = vld [vmem:[%s1 + $0x40] sm:$0xff]
      %v210 = vld [vmem:[%s1 + $0x48] sm:$0xff]
      %v211 = vld [vmem:[%s1 + $0x50] sm:$0xff]
      %v212 = vld [vmem:[%s1 + $0x58] sm:$0xff]
      %v213 = vld [vmem:[%s1 + $0x60] sm:$0xff]
      %v214 = vld [vmem:[%s1 + $0x68] sm:$0xff]
      %v215 = vld [vmem:[%s1 + $0x70] sm:$0xff]
      %v216 = vld [vmem:[%s1 + $0x78] sm:$0xff]
      %v217 = vld [vmem:[%s1 + $0x80] sm:$0xff]
      %v218 = vld [vmem:[%s1 + $0x88] sm:$0xff]
      %v219 = vld [vmem:[%s2] sm:$0x1]
      %v221 = vperm.slane %v219, 0
      %vm223 = vcmask 130048
      %v225 = vsel %vm223, %v178, 0
      %v228 = vsel %vm223, %v180, 0
      %v231 = vsel %vm223, %v182, 0
      %v234 = vsel %vm223, %v184, 0
      %v237 = vsel %vm223, %v186, 0
      %v240 = vsel %vm223, %v188, 0
      %v243 = vsel %vm223, %v190, 0
      %v246 = vsel %vm223, %v192, 0
      %v249 = vsel %vm223, %v194, 0
      %v252 = vsel %vm223, %v196, 0
      %v255 = vsel %vm223, %v198, 0
      %v258 = vsel %vm223, %v200, 0
      %260 = vmatpush.msra.mxu0 %v216
      %261 = vmatpush.msra.mxu0 %v215
      %262 = vmatpush.msra.mxu0 %v214
      %263 = vmatpush.msra.mxu0 %v213
      %264 = vmatpush.msra.mxu0 %v212
      %265 = vmatpush.msra.mxu0 %v211
      %266 = vmatpush.msra.mxu0 %v210
      %267 = vmatpush.msra.mxu0 %v209
      %268 = vmatpush.msra.mxu0 %v208
      %269 = vmatpush.msra.mxu0 %v207
      %270 = vmatpush.msra.mxu0 %v206
      %271 = vmatpush.msra.mxu0 %v205
      %272 = vmatpush.msra.mxu0 %v204
      %273 = vmatpush.msra.mxu0 %v203
      %274 = vmatpush.msra.mxu0 %v202
      %275 = vmatpush.msra.mxu0 %v201
      %276 = vmatmul.f32.gmra.mxu0 %v177
      %v277 = vpop.f32.mrf.mxu0
      %v278 = vadd.f32 %v221, %v277
      %279 = vmatmul.f32.gmra.mxu0 %v179
      %v280 = vpop.f32.mrf.mxu0
      %v281 = vadd.f32 %v221, %v280
      %282 = vmatmul.f32.gmra.mxu0 %v181
      %v283 = vpop.f32.mrf.mxu0
      %v284 = vadd.f32 %v221, %v283
      %285 = vmatmul.f32.gmra.mxu0 %v183
      %v286 = vpop.f32.mrf.mxu0
      %v287 = vadd.f32 %v221, %v286
      %288 = vmatmul.f32.gmra.mxu0 %v185
      %v289 = vpop.f32.mrf.mxu0
      %v290 = vadd.f32 %v221, %v289
      %291 = vmatmul.f32.gmra.mxu0 %v187
      %v292 = vpop.f32.mrf.mxu0
      %v293 = vadd.f32 %v221, %v292
      %294 = vmatmul.f32.gmra.mxu0 %v189
      %v295 = vpop.f32.mrf.mxu0
      %v296 = vadd.f32 %v221, %v295
      %297 = vmatmul.f32.gmra.mxu0 %v191
      %v298 = vpop.f32.mrf.mxu0
      %v299 = vadd.f32 %v221, %v298
      %300 = vmatmul.f32.gmra.mxu0 %v193
      %v301 = vpop.f32.mrf.mxu0
      %v302 = vadd.f32 %v221, %v301
      %303 = vmatmul.f32.gmra.mxu0 %v195
      %v304 = vpop.f32.mrf.mxu0
      %v305 = vadd.f32 %v221, %v304
      %306 = vmatmul.f32.gmra.mxu0 %v197
      %v307 = vpop.f32.mrf.mxu0
      %v308 = vadd.f32 %v221, %v307
      %309 = vmatmul.f32.gmra.mxu0 %v199
      %v310 = vpop.f32.mrf.mxu0
      %v311 = vadd.f32 %v221, %v310
      %312 = vdwg.mxu0
      %313 = vmatpush.msra.mxu0 0.0
      %314 = vmatpush.msra.mxu0 0.0
      %315 = vmatpush.msra.mxu0 0.0
      %316 = vmatpush.msra.mxu0 0.0
      %317 = vmatpush.msra.mxu0 0.0
      %318 = vmatpush.msra.mxu0 0.0
      %319 = vmatpush.msra.mxu0 0.0
      %320 = vmatpush.msra.mxu0 0.0
      %321 = vmatpush.msra.mxu0 0.0
      %322 = vmatpush.msra.mxu0 0.0
      %323 = vmatpush.msra.mxu0 0.0
      %324 = vmatpush.msra.mxu0 0.0
      %325 = vmatpush.msra.mxu0 0.0
      %326 = vmatpush.msra.mxu0 0.0
      %327 = vmatpush.msra.mxu0 %v218
      %328 = vmatpush.msra.mxu0 %v217
      %329 = vmatmul.f32.gmra.mxu0 %v225
      %v330 = vpop.f32.mrf.mxu0
      %v331 = vadd.f32 %v278, %v330
      %332 = vmatmul.f32.gmra.mxu0 %v228
      %v333 = vpop.f32.mrf.mxu0
      %v334 = vadd.f32 %v281, %v333
      %335 = vmatmul.f32.gmra.mxu0 %v231
      %v336 = vpop.f32.mrf.mxu0
      %v337 = vadd.f32 %v284, %v336
      %338 = vmatmul.f32.gmra.mxu0 %v234
      %v339 = vpop.f32.mrf.mxu0
      %v340 = vadd.f32 %v287, %v339
      %341 = vmatmul.f32.gmra.mxu0 %v237
      %v342 = vpop.f32.mrf.mxu0
      %v343 = vadd.f32 %v290, %v342
      %344 = vmatmul.f32.gmra.mxu0 %v240
      %v345 = vpop.f32.mrf.mxu0
      %v346 = vadd.f32 %v293, %v345
      %347 = vmatmul.f32.gmra.mxu0 %v243
      %v348 = vpop.f32.mrf.mxu0
      %v349 = vadd.f32 %v296, %v348
      %350 = vmatmul.f32.gmra.mxu0 %v246
      %v351 = vpop.f32.mrf.mxu0
      %v352 = vadd.f32 %v299, %v351
      %353 = vmatmul.f32.gmra.mxu0 %v249
      %v354 = vpop.f32.mrf.mxu0
      %v355 = vadd.f32 %v302, %v354
      %356 = vmatmul.f32.gmra.mxu0 %v252
      %v357 = vpop.f32.mrf.mxu0
      %v358 = vadd.f32 %v305, %v357
      %359 = vmatmul.f32.gmra.mxu0 %v255
      %v360 = vpop.f32.mrf.mxu0
      %v361 = vadd.f32 %v308, %v360
      %362 = vmatmul.f32.gmra.mxu0 %v258
      %v363 = vpop.f32.mrf.mxu0
      %v364 = vadd.f32 %v311, %v363
      %365 = vdwg.mxu0
      %vm366 = vcmask 195584
      %367 = vst.msk [vmem:[%s175] sm:$0xff] %vm366, %v331
      %368 = vst.msk [vmem:[%s175 + $0x8] sm:$0xff] %vm366, %v334
      %369 = vst.msk [vmem:[%s175 + $0x10] sm:$0xff] %vm366, %v337
      %370 = vst.msk [vmem:[%s175 + $0x18] sm:$0xff] %vm366, %v340
      %371 = vst.msk [vmem:[%s175 + $0x20] sm:$0xff] %vm366, %v343
      %372 = vst.msk [vmem:[%s175 + $0x28] sm:$0xff] %vm366, %v346
      %373 = vst.msk [vmem:[%s175 + $0x30] sm:$0xff] %vm366, %v349
      %374 = vst.msk [vmem:[%s175 + $0x38] sm:$0xff] %vm366, %v352
      %375 = vst.msk [vmem:[%s175 + $0x40] sm:$0xff] %vm366, %v355
      %376 = vst.msk [vmem:[%s175 + $0x48] sm:$0xff] %vm366, %v358
      %377 = vst.msk [vmem:[%s175 + $0x50] sm:$0xff] %vm366, %v361
      %378 = vst.msk [vmem:[%s175 + $0x58] sm:$0xff] %vm366, %v364
      %s379 = smul.u32 12, %s14
      %p380 = scmp.lt.s32.totalorder %s379, 35
      %s381 = scalar_select %p380, %s379, 35
      %s382 = smul.addr %s381, 8
      %s383 = scalar_lea.vmem %s3, %s382
      // Predicated region
      $region33: #{net_forward.17} parent=31 // pred_check
        %p384 = pneg %p100
      $region34: #{net_forward.17} parent=31 // pred_check_branch
        %386 = sbr.rel (%p384) target = $region36
      $region35: #{net_forward.17} parent=31 // pred_region
        %s387 = smul.u32 12, %s14
      $region36: #{net_forward.17} parent=31 // pred_fallthru
        _
    $region32: #{net_forward.17} parent=5 // pred_fallthru
      _
    %p388 = scmp.le.s32.totalorder 2, %s9
    // Predicated region
    $region37: #{net_forward.17} parent=5 // pred_check
      %p389 = pneg %p388
    $region38: #{net_forward.17} parent=5 // pred_check_branch
      %391 = sbr.rel (%p389) target = $region40
    $region39: #{net_forward.17} parent=5 // pred_region
      %s392 = ssub.s32 %s9, 2
      // Predicated region
      $region41: #{net_forward.17} parent=39 // pred_check
        %p393 = pneg %p106
      $region42: #{net_forward.17} parent=39 // pred_check_branch
        %395 = sbr.rel (%p393) target = $region44
      $region43: #{net_forward.17} parent=39 // pred_region
        %s396 = smul.u32 12, %s15
        %p397 = scmp.lt.s32.totalorder %s396, 35
        %s398 = scalar_select %p397, %s396, 35
        %s399 = smul.addr %s398, 8
        %s400 = scalar_lea.vmem %s3, %s399
      $region44: #{net_forward.17} parent=39 // pred_fallthru
        _
    $region40: #{net_forward.17} parent=5 // pred_fallthru
      _
  $region6: #{net_forward.17} parent=0 // loop_footer
    %s13 = sadd.s32 1, %s9
  $region7: #{net_forward.17} parent=0 // loop_footer_branch
    %8 = sbr.rel target = $region3
  $region8: #{net_forward.17} parent=0 // loop_exit
    _

// kernel: net_forward.18
$region0: #{net_forward.18}
  #allocation0 [shape = 'u32[]', space=smem, size = 0x4, offset = 0x4, fixed_abs, tag = 'smem constant byte address 0x4 - core index']
  #allocation1 [shape = 'u32[72,128]{1,0:T(1,128)}', space=vmem, size = 0x9000, scoped, tag = 'internal scratch']
  %s0 = inlined_call_operand.vmem [shape: f32[288,216], index: 0, kind: input, shape index: {}]
  %s1 = inlined_call_operand.vmem [shape: f32[216,24], index: 1, kind: input, shape index: {}]
  %s2 = inlined_call_operand.vmem [shape: f32[1,24], index: 2, kind: input, shape index: {}]
  %s3 = inlined_call_operand.vmem [shape: f32[288,24], index: 3, kind: output, shape index: {}]
  %s4 = sld [smem:[#allocation0]]
  $region45: #{net_forward.18} parent=0
    _
  %s6 = ssub.s32 1, %s4
  %s7 = scalar_select 0, %s6, %s4
  loop: start=0, step=1, limit=5
  $region2: #{net_forward.18} parent=0 // loop_pre_header
    _
  $region3: #{net_forward.18} parent=0 // loop_header
    %s9 = sphi 0, %s13
    %p10 = scmp.ge.s32.totalorder %s9, 5
    %s19 = sphi 0, %s21
    %s22 = sphi 0, %s19
    %s23 = sphi 0, %s22
    %s39 = sphi 0, %s23
    %s43 = sphi 0, %s43
    %s45 = sphi 0, %s43
    %s46 = sphi 0, %s45
    %s60 = sphi 0, %s46
    %s64 = sphi 0, %s64
    %s66 = sphi 0, %s64
    %s67 = sphi 0, %s66
    %s81 = sphi 0, %s67
    %s87 = sphi 0, %s89
    %s90 = sphi 0, %s87
    %s91 = sphi 0, %s90
    %s107 = sphi 0, %s91
  $region4: #{net_forward.18} parent=0 // loop_header_branch
    %12 = sbr.rel (%p10) target = $region8
  $region5: #{net_forward.18} parent=0 // loop_body
    %s14 = ssub.s32 %s9, 1
    %s15 = ssub.s32 %s9, 2
    %s16 = sadd.s32 %s9, 1
    %s17 = ssub.s32 %s9, %s16
    %p18 = scmp.eq.s32.totalorder %s17, 0
    %s20 = sadd.s32 %s19, 1
    %s21 = scalar_select %p18, %s19, %s20
    %p24 = pneg %p18
    %p25 = scmp.eq.s32.totalorder %s9, 2
    %p26 = por %p24, %p25
    %p27 = scmp.ne.s32.totalorder %s19, %s22
    %p28 = scmp.eq.s32.totalorder %s9, 0
    %p29 = por %p27, %p28
    %p30 = scmp.ne.s32.totalorder %s19, %s22
    %p31 = scmp.eq.s32.totalorder %s14, 2
    %p32 = por %p30, %p31
    %p33 = scmp.ne.s32.totalorder %s22, %s23
    %p34 = scmp.eq.s32.totalorder %s14, 0
    %p35 = por %p33, %p34
    %p36 = scmp.ne.s32.totalorder %s22, %s23
    %p37 = scmp.eq.s32.totalorder %s15, 2
    %p38 = por %p36, %p37
    %p40 = scmp.ne.s32.totalorder %s23, %s39
    %p41 = scmp.eq.s32.totalorder %s15, 0
    %p42 = por %p40, %p41
    %s44 = sadd.s32 %s43, 1
    %p47 = scmp.eq.s32.totalorder %s9, 2
    %p48 = scmp.ne.s32.totalorder %s43, %s45
    %p49 = scmp.eq.s32.totalorder %s9, 0
    %p50 = por %p48, %p49
    %p51 = scmp.ne.s32.totalorder %s43, %s45
    %p52 = scmp.eq.s32.totalorder %s14, 2
    %p53 = por %p51, %p52
    %p54 = scmp.ne.s32.totalorder %s45, %s46
    %p55 = scmp.eq.s32.totalorder %s14, 0
    %p56 = por %p54, %p55
    %p57 = scmp.ne.s32.totalorder %s45, %s46
    %p58 = scmp.eq.s32.totalorder %s15, 2
    %p59 = por %p57, %p58
    %p61 = scmp.ne.s32.totalorder %s46, %s60
    %p62 = scmp.eq.s32.totalorder %s15, 0
    %p63 = por %p61, %p62
    %s65 = sadd.s32 %s64, 1
    %p68 = scmp.eq.s32.totalorder %s9, 2
    %p69 = scmp.ne.s32.totalorder %s64, %s66
    %p70 = scmp.eq.s32.totalorder %s9, 0
    %p71 = por %p69, %p70
    %p72 = scmp.ne.s32.totalorder %s64, %s66
    %p73 = scmp.eq.s32.totalorder %s14, 2
    %p74 = por %p72, %p73
    %p75 = scmp.ne.s32.totalorder %s66, %s67
    %p76 = scmp.eq.s32.totalorder %s14, 0
    %p77 = por %p75, %p76
    %p78 = scmp.ne.s32.totalorder %s66, %s67
    %p79 = scmp.eq.s32.totalorder %s15, 2
    %p80 = por %p78, %p79
    %p82 = scmp.ne.s32.totalorder %s67, %s81
    %p83 = scmp.eq.s32.totalorder %s15, 0
    %p84 = por %p82, %p83
    %s85 = ssub.s32 %s9, %s16
    %p86 = scmp.eq.s32.totalorder %s85, 0
    %s88 = sadd.s32 %s87, 1
    %s89 = scalar_select %p86, %s87, %s88
    %p92 = pneg %p86
    %p93 = scmp.eq.s32.totalorder %s9, 2
    %p94 = por %p92, %p93
    %p95 = scmp.ne.s32.totalorder %s87, %s90
    %p96 = scmp.eq.s32.totalorder %s9, 0
    %p97 = por %p95, %p96
    %p98 = scmp.ne.s32.totalorder %s87, %s90
    %p99 = scmp.eq.s32.totalorder %s14, 2
    %p100 = por %p98, %p99
    %p101 = scmp.ne.s32.totalorder %s90, %s91
    %p102 = scmp.eq.s32.totalorder %s14, 0
    %p103 = por %p101, %p102
    %p104 = scmp.ne.s32.totalorder %s90, %s91
    %p105 = scmp.eq.s32.totalorder %s15, 2
    %p106 = por %p104, %p105
    %p108 = scmp.ne.s32.totalorder %s91, %s107
    %p109 = scmp.eq.s32.totalorder %s15, 0
    %p110 = por %p108, %p109
    %p111 = scmp.le.s32.totalorder 1, %s9
    %p112 = scmp.lt.s32.totalorder %s9, 4
    %p113 = pnand %p111, %p112
    %p114 = pneg %p113
    // Predicated region
    $region9: #{net_forward.18} parent=5 // pred_check
      _
    $region10: #{net_forward.18} parent=5 // pred_check_branch
      %116 = sbr.rel (%p113) target = $region12
    $region11: #{net_forward.18} parent=5 // pred_region
      %s117 = ssub.s32 %s9, 1
      // Predicated region
      $region13: #{net_forward.18} parent=11 // pred_check
        %p118 = pneg %p56
      $region14: #{net_forward.18} parent=11 // pred_check_branch
        %120 = sbr.rel (%p118) target = $region16
      $region15: #{net_forward.18} parent=11 // pred_region
        _
      $region16: #{net_forward.18} parent=11 // pred_fallthru
        _
      // Predicated region
      $region17: #{net_forward.18} parent=11 // pred_check
        %p121 = pneg %p77
      $region18: #{net_forward.18} parent=11 // pred_check_branch
        %123 = sbr.rel (%p121) target = $region20
      $region19: #{net_forward.18} parent=11 // pred_region
        _
      $region20: #{net_forward.18} parent=11 // pred_fallthru
        _
    $region12: #{net_forward.18} parent=5 // pred_fallthru
      _
    %p124 = scmp.lt.s32.totalorder %s9, 3
    // Predicated region
    $region21: #{net_forward.18} parent=5 // pred_check
      %p125 = pneg %p124
    $region22: #{net_forward.18} parent=5 // pred_check_branch
      %127 = sbr.rel (%p125) target = $region24
    $region23: #{net_forward.18} parent=5 // pred_region
      // Predicated region
      $region25: #{net_forward.18} parent=23 // pred_check
        %p128 = pneg %p29
      $region26: #{net_forward.18} parent=23 // pred_check_branch
        %130 = sbr.rel (%p128) target = $region28
      $region27: #{net_forward.18} parent=23 // pred_region
        %s131 = smul.u32 12, %s9
        %p132 = scmp.lt.s32.totalorder %s131, 35
        %s133 = scalar_select %p132, %s131, 35
        %s134 = smul.addr %s133, 2
        %s135 = smul.addr %s134, 8
        %s136 = scalar_lea.vmem %s0, %s135
        %s137 = smul.u32 12, %s9
      $region28: #{net_forward.18} parent=23 // pred_fallthru
        _
    $region24: #{net_forward.18} parent=5 // pred_fallthru
      _
    %p138 = scmp.le.s32.totalorder 1, %s9
    %p139 = scmp.lt.s32.totalorder %s9, 4
    %p140 = pnand %p138, %p139
    %p141 = pneg %p140
    // Predicated region
    $region29: #{net_forward.18} parent=5 // pred_check
      _
    $region30: #{net_forward.18} parent=5 // pred_check_branch
      %143 = sbr.rel (%p140) target = $region32
    $region31: #{net_forward.18} parent=5 // pred_region
      %s144 = ssub.s32 %s9, 1
      %s145 = smul.u32 12, %s14
      %p146 = scmp.lt.s32.totalorder %s145, 35
      %s147 = scalar_select %p146, %s145, 35
      %s148 = smul.addr %s147, 2
      %s149 = smul.addr %s148, 8
      %s150 = scalar_lea.vmem %s0, %s149
      %p151 = pneg %p35
      %p152 = pneg %p32
      %p153 = pneg %p56
      %p154 = pneg %p53
      %p155 = pneg %p77
      %p156 = pneg %p74
      %p157 = pneg %p103
      %p158 = pneg %p100
      %s159 = smul.u32 12, %s14
      %p160 = scmp.lt.s32.totalorder %s159, 35
      %s161 = scalar_select %p160, %s159, 35
      %s162 = smul.addr %s161, 8
      %s163 = scalar_lea.vmem %s3, %s162
      %s164 = smul.u32 12, %s14
      %p165 = scmp.lt.s32.totalorder %s164, 35
      %s166 = scalar_select %p165, %s164, 35
      %s167 = smul.addr %s166, 2
      %s168 = smul.addr %s167, 8
      %s169 = scalar_lea.vmem %s0, %s168
      %s170 = smul.u32 12, %s14
      %s171 = smul.u32 12, %s14
      %p172 = scmp.lt.s32.totalorder %s171, 35
      %s173 = scalar_select %p172, %s171, 35
      %s174 = smul.addr %s173, 8
      %s175 = scalar_lea.vmem %s3, %s174
      %s176 = smul.u32 12, %s14
      %v177 = vld [vmem:[%s169] sm:$0xff]
      %v178 = vld [vmem:[%s169 + $0x8] sm:$0xff]
      %v179 = vld [vmem:[%s169 + $0x10] sm:$0xff]
      %v180 = vld [vmem:[%s169 + $0x18] sm:$0xff]
      %v181 = vld [vmem:[%s169 + $0x20] sm:$0xff]
      %v182 = vld [vmem:[%s169 + $0x28] sm:$0xff]
      %v183 = vld [vmem:[%s169 + $0x30] sm:$0xff]
      %v184 = vld [vmem:[%s169 + $0x38] sm:$0xff]
      %v185 = vld [vmem:[%s169 + $0x40] sm:$0xff]
      %v186 = vld [vmem:[%s169 + $0x48] sm:$0xff]
      %v187 = vld [vmem:[%s169 + $0x50] sm:$0xff]
      %v188 = vld [vmem:[%s169 + $0x58] sm:$0xff]
      %v189 = vld [vmem:[%s169 + $0x60] sm:$0xff]
      %v190 = vld [vmem:[%s169 + $0x68] sm:$0xff]
      %v191 = vld [vmem:[%s169 + $0x70] sm:$0xff]
      %v192 = vld [vmem:[%s169 + $0x78] sm:$0xff]
      %v193 = vld [vmem:[%s169 + $0x80] sm:$0xff]
      %v194 = vld [vmem:[%s169 + $0x88] sm:$0xff]
      %v195 = vld [vmem:[%s169 + $0x90] sm:$0xff]
      %v196 = vld [vmem:[%s169 + $0x98] sm:$0xff]
      %v197 = vld [vmem:[%s169 + $0xa0] sm:$0xff]
      %v198 = vld [vmem:[%s169 + $0xa8] sm:$0xff]
      %v199 = vld [vmem:[%s169 + $0xb0] sm:$0xff]
      %v200 = vld [vmem:[%s169 + $0xb8] sm:$0xff]
      %v201 = vld [vmem:[%s1] sm:$0xff]
      %v202 = vld [vmem:[%s1 + $0x8] sm:$0xff]
      %v203 = vld [vmem:[%s1 + $0x10] sm:$0xff]
      %v204 = vld [vmem:[%s1 + $0x18] sm:$0xff]
      %v205 = vld [vmem:[%s1 + $0x20] sm:$0xff]
      %v206 = vld [vmem:[%s1 + $0x28] sm:$0xff]
      %v207 = vld [vmem:[%s1 + $0x30] sm:$0xff]
      %v208 = vld [vmem:[%s1 + $0x38] sm:$0xff]
      %v209 = vld [vmem:[%s1 + $0x40] sm:$0xff]
      %v210 = vld [vmem:[%s1 + $0x48] sm:$0xff]
      %v211 = vld [vmem:[%s1 + $0x50] sm:$0xff]
      %v212 = vld [vmem:[%s1 + $0x58] sm:$0xff]
      %v213 = vld [vmem:[%s1 + $0x60] sm:$0xff]
      %v214 = vld [vmem:[%s1 + $0x68] sm:$0xff]
      %v215 = vld [vmem:[%s1 + $0x70] sm:$0xff]
      %v216 = vld [vmem:[%s1 + $0x78] sm:$0xff]
      %v217 = vld [vmem:[%s1 + $0x80] sm:$0xff]
      %v218 = vld [vmem:[%s1 + $0x88] sm:$0xff]
      %v219 = vld [vmem:[%s1 + $0x90] sm:$0xff]
      %v220 = vld [vmem:[%s1 + $0x98] sm:$0xff]
      %v221 = vld [vmem:[%s1 + $0xa0] sm:$0xff]
      %v222 = vld [vmem:[%s1 + $0xa8] sm:$0xff]
      %v223 = vld [vmem:[%s1 + $0xb0] sm:$0xff]
      %v224 = vld [vmem:[%s1 + $0xb8] sm:$0xff]
      %v225 = vld [vmem:[%s1 + $0xc0] sm:$0xff]
      %v226 = vld [vmem:[%s1 + $0xc8] sm:$0xff]
      %v227 = vld [vmem:[%s1 + $0xd0] sm:$0xff]
      %v228 = vld [vmem:[%s2] sm:$0x1]
      %v230 = vperm.slane %v228, 0
      %vm232 = vcmask 719872
      %v234 = vsel %vm232, %v178, 0
      %v237 = vsel %vm232, %v180, 0
      %v240 = vsel %vm232, %v182, 0
      %v243 = vsel %vm232, %v184, 0
      %v246 = vsel %vm232, %v186, 0
      %v249 = vsel %vm232, %v188, 0
      %v252 = vsel %vm232, %v190, 0
      %v255 = vsel %vm232, %v192, 0
      %v258 = vsel %vm232, %v194, 0
      %v261 = vsel %vm232, %v196, 0
      %v264 = vsel %vm232, %v198, 0
      %v267 = vsel %vm232, %v200, 0
      %269 = vmatpush.msra.mxu0 %v216
      %270 = vmatpush.msra.mxu0 %v215
      %271 = vmatpush.msra.mxu0 %v214
      %272 = vmatpush.msra.mxu0 %v213
      %273 = vmatpush.msra.mxu0 %v212
      %274 = vmatpush.msra.mxu0 %v211
      %275 = vmatpush.msra.mxu0 %v210
      %276 = vmatpush.msra.mxu0 %v209
      %277 = vmatpush.msra.mxu0 %v208
      %278 = vmatpush.msra.mxu0 %v207
      %279 = vmatpush.msra.mxu0 %v206
      %280 = vmatpush.msra.mxu0 %v205
      %281 = vmatpush.msra.mxu0 %v204
      %282 = vmatpush.msra.mxu0 %v203
      %283 = vmatpush.msra.mxu0 %v202
      %284 = vmatpush.msra.mxu0 %v201
      %285 = vmatmul.f32.gmra.mxu0 %v177
      %v286 = vpop.f32.mrf.mxu0
      %v287 = vadd.f32 %v230, %v286
      %288 = vmatmul.f32.gmra.mxu0 %v179
      %v289 = vpop.f32.mrf.mxu0
      %v290 = vadd.f32 %v230, %v289
      %291 = vmatmul.f32.gmra.mxu0 %v181
      %v292 = vpop.f32.mrf.mxu0
      %v293 = vadd.f32 %v230, %v292
      %294 = vmatmul.f32.gmra.mxu0 %v183
      %v295 = vpop.f32.mrf.mxu0
      %v296 = vadd.f32 %v230, %v295
      %297 = vmatmul.f32.gmra.mxu0 %v185
      %v298 = vpop.f32.mrf.mxu0
      %v299 = vadd.f32 %v230, %v298
      %300 = vmatmul.f32.gmra.mxu0 %v187
      %v301 = vpop.f32.mrf.mxu0
      %v302 = vadd.f32 %v230, %v301
      %303 = vmatmul.f32.gmra.mxu0 %v189
      %v304 = vpop.f32.mrf.mxu0
      %v305 = vadd.f32 %v230, %v304
      %306 = vmatmul.f32.gmra.mxu0 %v191
      %v307 = vpop.f32.mrf.mxu0
      %v308 = vadd.f32 %v230, %v307
      %309 = vmatmul.f32.gmra.mxu0 %v193
      %v310 = vpop.f32.mrf.mxu0
      %v311 = vadd.f32 %v230, %v310
      %312 = vmatmul.f32.gmra.mxu0 %v195
      %v313 = vpop.f32.mrf.mxu0
      %v314 = vadd.f32 %v230, %v313
      %315 = vmatmul.f32.gmra.mxu0 %v197
      %v316 = vpop.f32.mrf.mxu0
      %v317 = vadd.f32 %v230, %v316
      %318 = vmatmul.f32.gmra.mxu0 %v199
      %v319 = vpop.f32.mrf.mxu0
      %v320 = vadd.f32 %v230, %v319
      %321 = vdwg.mxu0
      %322 = vmatpush.msra.mxu0 0.0
      %323 = vmatpush.msra.mxu0 0.0
      %324 = vmatpush.msra.mxu0 0.0
      %325 = vmatpush.msra.mxu0 0.0
      %326 = vmatpush.msra.mxu0 0.0
      %327 = vmatpush.msra.mxu0 %v227
      %328 = vmatpush.msra.mxu0 %v226
      %329 = vmatpush.msra.mxu0 %v225
      %330 = vmatpush.msra.mxu0 %v224
      %331 = vmatpush.msra.mxu0 %v223
      %332 = vmatpush.msra.mxu0 %v222
      %333 = vmatpush.msra.mxu0 %v221
      %334 = vmatpush.msra.mxu0 %v220
      %335 = vmatpush.msra.mxu0 %v219
      %336 = vmatpush.msra.mxu0 %v218
      %337 = vmatpush.msra.mxu0 %v217
      %338 = vmatmul.f32.gmra.mxu0 %v234
      %v339 = vpop.f32.mrf.mxu0
      %v340 = vadd.f32 %v287, %v339
      %341 = vmatmul.f32.gmra.mxu0 %v237
      %v342 = vpop.f32.mrf.mxu0
      %v343 = vadd.f32 %v290, %v342
      %344 = vmatmul.f32.gmra.mxu0 %v240
      %v345 = vpop.f32.mrf.mxu0
      %v346 = vadd.f32 %v293, %v345
      %347 = vmatmul.f32.gmra.mxu0 %v243
      %v348 = vpop.f32.mrf.mxu0
      %v349 = vadd.f32 %v296, %v348
      %350 = vmatmul.f32.gmra.mxu0 %v246
      %v351 = vpop.f32.mrf.mxu0
      %v352 = vadd.f32 %v299, %v351
      %353 = vmatmul.f32.gmra.mxu0 %v249
      %v354 = vpop.f32.mrf.mxu0
      %v355 = vadd.f32 %v302, %v354
      %356 = vmatmul.f32.gmra.mxu0 %v252
      %v357 = vpop.f32.mrf.mxu0
      %v358 = vadd.f32 %v305, %v357
      %359 = vmatmul.f32.gmra.mxu0 %v255
      %v360 = vpop.f32.mrf.mxu0
      %v361 = vadd.f32 %v308, %v360
      %362 = vmatmul.f32.gmra.mxu0 %v258
      %v363 = vpop.f32.mrf.mxu0
      %v364 = vadd.f32 %v311, %v363
      %365 = vmatmul.f32.gmra.mxu0 %v261
      %v366 = vpop.f32.mrf.mxu0
      %v367 = vadd.f32 %v314, %v366
      %368 = vmatmul.f32.gmra.mxu0 %v264
      %v369 = vpop.f32.mrf.mxu0
      %v370 = vadd.f32 %v317, %v369
      %371 = vmatmul.f32.gmra.mxu0 %v267
      %v372 = vpop.f32.mrf.mxu0
      %v373 = vadd.f32 %v320, %v372
      %374 = vdwg.mxu0
      %vm375 = vcmask 195584
      %376 = vst.msk [vmem:[%s175] sm:$0xff] %vm375, %v340
      %377 = vst.msk [vmem:[%s175 + $0x8] sm:$0xff] %vm375, %v343
      %378 = vst.msk [vmem:[%s175 + $0x10] sm:$0xff] %vm375, %v346
      %379 = vst.msk [vmem:[%s175 + $0x18] sm:$0xff] %vm375, %v349
      %380 = vst.msk [vmem:[%s175 + $0x20] sm:$0xff] %vm375, %v352
      %381 = vst.msk [vmem:[%s175 + $0x28] sm:$0xff] %vm375, %v355
      %382 = vst.msk [vmem:[%s175 + $0x30] sm:$0xff] %vm375, %v358
      %383 = vst.msk [vmem:[%s175 + $0x38] sm:$0xff] %vm375, %v361
      %384 = vst.msk [vmem:[%s175 + $0x40] sm:$0xff] %vm375, %v364
      %385 = vst.msk [vmem:[%s175 + $0x48] sm:$0xff] %vm375, %v367
      %386 = vst.msk [vmem:[%s175 + $0x50] sm:$0xff] %vm375, %v370
      %387 = vst.msk [vmem:[%s175 + $0x58] sm:$0xff] %vm375, %v373
      %s388 = smul.u32 12, %s14
      %p389 = scmp.lt.s32.totalorder %s388, 35
      %s390 = scalar_select %p389, %s388, 35
      %s391 = smul.addr %s390, 8
      %s392 = scalar_lea.vmem %s3, %s391
      // Predicated region
      $region33: #{net_forward.18} parent=31 // pred_check
        %p393 = pneg %p100
      $region34: #{net_forward.18} parent=31 // pred_check_branch
        %395 = sbr.rel (%p393) target = $region36
      $region35: #{net_forward.18} parent=31 // pred_region
        %s396 = smul.u32 12, %s14
      $region36: #{net_forward.18} parent=31 // pred_fallthru
        _
    $region32: #{net_forward.18} parent=5 // pred_fallthru
      _
    %p397 = scmp.le.s32.totalorder 2, %s9
    // Predicated region
    $region37: #{net_forward.18} parent=5 // pred_check
      %p398 = pneg %p397
    $region38: #{net_forward.18} parent=5 // pred_check_branch
      %400 = sbr.rel (%p398) target = $region40
    $region39: #{net_forward.18} parent=5 // pred_region
      %s401 = ssub.s32 %s9, 2
      // Predicated region
      $region41: #{net_forward.18} parent=39 // pred_check
        %p402 = pneg %p106
      $region42: #{net_forward.18} parent=39 // pred_check_branch
        %404 = sbr.rel (%p402) target = $region44
      $region43: #{net_forward.18} parent=39 // pred_region
        %s405 = smul.u32 12, %s15
        %p406 = scmp.lt.s32.totalorder %s405, 35
        %s407 = scalar_select %p406, %s405, 35
        %s408 = smul.addr %s407, 8
        %s409 = scalar_lea.vmem %s3, %s408
      $region44: #{net_forward.18} parent=39 // pred_fallthru
        _
    $region40: #{net_forward.18} parent=5 // pred_fallthru
      _
  $region6: #{net_forward.18} parent=0 // loop_footer
    %s13 = sadd.s32 1, %s9
  $region7: #{net_forward.18} parent=0 // loop_footer_branch
    %8 = sbr.rel target = $region3
  $region8: #{net_forward.18} parent=0 // loop_exit
    _

// kernel: net_forward.19
$region0: #{net_forward.19}
  #allocation0 [shape = 'u32[]', space=smem, size = 0x4, offset = 0x4, fixed_abs, tag = 'smem constant byte address 0x4 - core index']
  #allocation1 [shape = 'u32[72,128]{1,0:T(1,128)}', space=vmem, size = 0x9000, scoped, tag = 'internal scratch']
  %s0 = inlined_call_operand.vmem [shape: f32[128,2200], index: 0, kind: input, shape index: {}]
  %s1 = inlined_call_operand.vmem [shape: f32[2200,20], index: 1, kind: input, shape index: {}]
  %s2 = inlined_call_operand.vmem [shape: f32[1,20], index: 2, kind: input, shape index: {}]
  %s3 = inlined_call_operand.vmem [shape: f32[128,20], index: 3, kind: output, shape index: {}]
  %s4 = sld [smem:[#allocation0]]
  $region22: #{net_forward.19} parent=0
    _
  %s6 = ssub.s32 1, %s4
  %s7 = scalar_select 0, %s6, %s4
  // Predicated region
  $region2: #{net_forward.19} parent=0 // pred_check
    _
  $region3: #{net_forward.19} parent=0 // pred_check_branch
    %9 = sbr.rel (0) target = $region5
  $region4: #{net_forward.19} parent=0 // pred_region
    _
  $region5: #{net_forward.19} parent=0 // pred_fallthru
    _
  // Predicated region
  $region6: #{net_forward.19} parent=0 // pred_check
    _
  $region7: #{net_forward.19} parent=0 // pred_check_branch
    %11 = sbr.rel (0) target = $region9
  $region8: #{net_forward.19} parent=0 // pred_region
    _
  $region9: #{net_forward.19} parent=0 // pred_fallthru
    _
  // Predicated region
  $region10: #{net_forward.19} parent=0 // pred_check
    _
  $region11: #{net_forward.19} parent=0 // pred_check_branch
    %13 = sbr.rel (0) target = $region13
  $region12: #{net_forward.19} parent=0 // pred_region
    _
  $region13: #{net_forward.19} parent=0 // pred_fallthru
    _
  %v14 = vld [vmem:[%s0] sm:$0xff]
  %v15 = vld [vmem:[%s0 + $0x8] sm:$0xff]
  %v16 = vld [vmem:[%s0 + $0x10] sm:$0xff]
  %v17 = vld [vmem:[%s0 + $0x18] sm:$0xff]
  %v18 = vld [vmem:[%s0 + $0x20] sm:$0xff]
  %v19 = vld [vmem:[%s0 + $0x28] sm:$0xff]
  %v20 = vld [vmem:[%s0 + $0x30] sm:$0xff]
  %v21 = vld [vmem:[%s0 + $0x38] sm:$0xff]
  %v22 = vld [vmem:[%s0 + $0x40] sm:$0xff]
  %v23 = vld [vmem:[%s0 + $0x48] sm:$0xff]
  %v24 = vld [vmem:[%s0 + $0x50] sm:$0xff]
  %v25 = vld [vmem:[%s0 + $0x58] sm:$0xff]
  %v26 = vld [vmem:[%s0 + $0x60] sm:$0xff]
  %v27 = vld [vmem:[%s0 + $0x68] sm:$0xff]
  %v28 = vld [vmem:[%s0 + $0x70] sm:$0xff]
  %v29 = vld [vmem:[%s0 + $0x78] sm:$0xff]
  %v30 = vld [vmem:[%s0 + $0x80] sm:$0xff]
  %v31 = vld [vmem:[%s0 + $0x88] sm:$0xff]
  %v32 = vld [vmem:[%s0 + $0x90] sm:$0xff]
  %v33 = vld [vmem:[%s0 + $0x98] sm:$0xff]
  %v34 = vld [vmem:[%s0 + $0xa0] sm:$0xff]
  %v35 = vld [vmem:[%s0 + $0xa8] sm:$0xff]
  %v36 = vld [vmem:[%s0 + $0xb0] sm:$0xff]
  %v37 = vld [vmem:[%s0 + $0xb8] sm:$0xff]
  %v38 = vld [vmem:[%s0 + $0xc0] sm:$0xff]
  %v39 = vld [vmem:[%s0 + $0xc8] sm:$0xff]
  %v40 = vld [vmem:[%s0 + $0xd0] sm:$0xff]
  %v41 = vld [vmem:[%s0 + $0xd8] sm:$0xff]
  %v42 = vld [vmem:[%s0 + $0xe0] sm:$0xff]
  %v43 = vld [vmem:[%s0 + $0xe8] sm:$0xff]
  %v44 = vld [vmem:[%s0 + $0xf0] sm:$0xff]
  %v45 = vld [vmem:[%s0 + $0xf8] sm:$0xff]
  %v46 = vld [vmem:[%s0 + $0x100] sm:$0xff]
  %v47 = vld [vmem:[%s0 + $0x108] sm:$0xff]
  %v48 = vld [vmem:[%s0 + $0x110] sm:$0xff]
  %v49 = vld [vmem:[%s0 + $0x118] sm:$0xff]
  %v50 = vld [vmem:[%s0 + $0x120] sm:$0xff]
  %v51 = vld [vmem:[%s0 + $0x128] sm:$0xff]
  %v52 = vld [vmem:[%s0 + $0x130] sm:$0xff]
  %v53 = vld [vmem:[%s0 + $0x138] sm:$0xff]
  %v54 = vld [vmem:[%s0 + $0x140] sm:$0xff]
  %v55 = vld [vmem:[%s0 + $0x148] sm:$0xff]
  %v56 = vld [vmem:[%s0 + $0x150] sm:$0xff]
  %v57 = vld [vmem:[%s0 + $0x158] sm:$0xff]
  %v58 = vld [vmem:[%s0 + $0x160] sm:$0xff]
  %v59 = vld [vmem:[%s0 + $0x168] sm:$0xff]
  %v60 = vld [vmem:[%s0 + $0x170] sm:$0xff]
  %v61 = vld [vmem:[%s0 + $0x178] sm:$0xff]
  %v62 = vld [vmem:[%s0 + $0x180] sm:$0xff]
  %v63 = vld [vmem:[%s0 + $0x188] sm:$0xff]
  %v64 = vld [vmem:[%s0 + $0x190] sm:$0xff]
  %v65 = vld [vmem:[%s0 + $0x198] sm:$0xff]
  %v66 = vld [vmem:[%s0 + $0x1a0] sm:$0xff]
  %v67 = vld [vmem:[%s0 + $0x1a8] sm:$0xff]
  %v68 = vld [vmem:[%s0 + $0x1b0] sm:$0xff]
  %v69 = vld [vmem:[%s0 + $0x1b8] sm:$0xff]
  %v70 = vld [vmem:[%s0 + $0x1c0] sm:$0xff]
  %v71 = vld [vmem:[%s0 + $0x1c8] sm:$0xff]
  %v72 = vld [vmem:[%s0 + $0x1d0] sm:$0xff]
  %v73 = vld [vmem:[%s0 + $0x1d8] sm:$0xff]
  %v74 = vld [vmem:[%s0 + $0x1e0] sm:$0xff]
  %v75 = vld [vmem:[%s0 + $0x1e8] sm:$0xff]
  %v76 = vld [vmem:[%s0 + $0x1f0] sm:$0xff]
  %v77 = vld [vmem:[%s0 + $0x1f8] sm:$0xff]
  %v78 = vld [vmem:[%s0 + $0x200] sm:$0xff]
  %v79 = vld [vmem:[%s0 + $0x208] sm:$0xff]
  %v80 = vld [vmem:[%s0 + $0x210] sm:$0xff]
  %v81 = vld [vmem:[%s0 + $0x218] sm:$0xff]
  %v82 = vld [vmem:[%s0 + $0x220] sm:$0xff]
  %v83 = vld [vmem:[%s0 + $0x228] sm:$0xff]
  %v84 = vld [vmem:[%s0 + $0x230] sm:$0xff]
  %v85 = vld [vmem:[%s0 + $0x238] sm:$0xff]
  %v86 = vld [vmem:[%s0 + $0x240] sm:$0xff]
  %v87 = vld [vmem:[%s0 + $0x248] sm:$0xff]
  %v88 = vld [vmem:[%s0 + $0x250] sm:$0xff]
  %v89 = vld [vmem:[%s0 + $0x258] sm:$0xff]
  %v90 = vld [vmem:[%s0 + $0x260] sm:$0xff]
  %v91 = vld [vmem:[%s0 + $0x268] sm:$0xff]
  %v92 = vld [vmem:[%s0 + $0x270] sm:$0xff]
  %v93 = vld [vmem:[%s0 + $0x278] sm:$0xff]
  %v94 = vld [vmem:[%s0 + $0x280] sm:$0xff]
  %v95 = vld [vmem:[%s0 + $0x288] sm:$0xff]
  %v96 = vld [vmem:[%s0 + $0x290] sm:$0xff]
  %v97 = vld [vmem:[%s0 + $0x298] sm:$0xff]
  %v98 = vld [vmem:[%s0 + $0x2a0] sm:$0xff]
  %v99 = vld [vmem:[%s0 + $0x2a8] sm:$0xff]
  %v100 = vld [vmem:[%s0 + $0x2b0] sm:$0xff]
  %v101 = vld [vmem:[%s0 + $0x2b8] sm:$0xff]
  %v102 = vld [vmem:[%s0 + $0x2c0] sm:$0xff]
  %v103 = vld [vmem:[%s0 + $0x2c8] sm:$0xff]
  %v104 = vld [vmem:[%s0 + $0x2d0] sm:$0xff]
  %v105 = vld [vmem:[%s0 + $0x2d8] sm:$0xff]
  %v106 = vld [vmem:[%s0 + $0x2e0] sm:$0xff]
  %v107 = vld [vmem:[%s0 + $0x2e8] sm:$0xff]
  %v108 = vld [vmem:[%s0 + $0x2f0] sm:$0xff]
  %v109 = vld [vmem:[%s0 + $0x2f8] sm:$0xff]
  %v110 = vld [vmem:[%s0 + $0x300] sm:$0xff]
  %v111 = vld [vmem:[%s0 + $0x308] sm:$0xff]
  %v112 = vld [vmem:[%s0 + $0x310] sm:$0xff]
  %v113 = vld [vmem:[%s0 + $0x318] sm:$0xff]
  %v114 = vld [vmem:[%s0 + $0x320] sm:$0xff]
  %v115 = vld [vmem:[%s0 + $0x328] sm:$0xff]
  %v116 = vld [vmem:[%s0 + $0x330] sm:$0xff]
  %v117 = vld [vmem:[%s0 + $0x338] sm:$0xff]
  %v118 = vld [vmem:[%s0 + $0x340] sm:$0xff]
  %v119 = vld [vmem:[%s0 + $0x348] sm:$0xff]
  %v120 = vld [vmem:[%s0 + $0x350] sm:$0xff]
  %v121 = vld [vmem:[%s0 + $0x358] sm:$0xff]
  %v122 = vld [vmem:[%s0 + $0x360] sm:$0xff]
  %v123 = vld [vmem:[%s0 + $0x368] sm:$0xff]
  %v124 = vld [vmem:[%s0 + $0x370] sm:$0xff]
  %v125 = vld [vmem:[%s0 + $0x378] sm:$0xff]
  %v126 = vld [vmem:[%s0 + $0x380] sm:$0xff]
  %v127 = vld [vmem:[%s0 + $0x388] sm:$0xff]
  %v128 = vld [vmem:[%s0 + $0x390] sm:$0xff]
  %v129 = vld [vmem:[%s0 + $0x398] sm:$0xff]
  %v130 = vld [vmem:[%s0 + $0x3a0] sm:$0xff]
  %v131 = vld [vmem:[%s0 + $0x3a8] sm:$0xff]
  %v132 = vld [vmem:[%s0 + $0x3b0] sm:$0xff]
  %v133 = vld [vmem:[%s0 + $0x3b8] sm:$0xff]
  %v134 = vld [vmem:[%s0 + $0x3c0] sm:$0xff]
  %v135 = vld [vmem:[%s0 + $0x3c8] sm:$0xff]
  %v136 = vld [vmem:[%s0 + $0x3d0] sm:$0xff]
  %v137 = vld [vmem:[%s0 + $0x3d8] sm:$0xff]
  %v138 = vld [vmem:[%s0 + $0x3e0] sm:$0xff]
  %v139 = vld [vmem:[%s0 + $0x3e8] sm:$0xff]
  %v140 = vld [vmem:[%s0 + $0x3f0] sm:$0xff]
  %v141 = vld [vmem:[%s0 + $0x3f8] sm:$0xff]
  %v142 = vld [vmem:[%s0 + $0x400] sm:$0xff]
  %v143 = vld [vmem:[%s0 + $0x408] sm:$0xff]
  %v144 = vld [vmem:[%s0 + $0x410] sm:$0xff]
  %v145 = vld [vmem:[%s0 + $0x418] sm:$0xff]
  %v146 = vld [vmem:[%s0 + $0x420] sm:$0xff]
  %v147 = vld [vmem:[%s0 + $0x428] sm:$0xff]
  %v148 = vld [vmem:[%s0 + $0x430] sm:$0xff]
  %v149 = vld [vmem:[%s0 + $0x438] sm:$0xff]
  %v150 = vld [vmem:[%s0 + $0x440] sm:$0xff]
  %v151 = vld [vmem:[%s0 + $0x448] sm:$0xff]
  %v152 = vld [vmem:[%s0 + $0x450] sm:$0xff]
  %v153 = vld [vmem:[%s0 + $0x458] sm:$0xff]
  %v154 = vld [vmem:[%s0 + $0x460] sm:$0xff]
  %v155 = vld [vmem:[%s0 + $0x468] sm:$0xff]
  %v156 = vld [vmem:[%s0 + $0x470] sm:$0xff]
  %v157 = vld [vmem:[%s0 + $0x478] sm:$0xff]
  %v158 = vld [vmem:[%s0 + $0x480] sm:$0xff]
  %v159 = vld [vmem:[%s0 + $0x488] sm:$0xff]
  %v160 = vld [vmem:[%s0 + $0x490] sm:$0xff]
  %v161 = vld [vmem:[%s0 + $0x498] sm:$0xff]
  %v162 = vld [vmem:[%s0 + $0x4a0] sm:$0xff]
  %v163 = vld [vmem:[%s0 + $0x4a8] sm:$0xff]
  %v164 = vld [vmem:[%s0 + $0x4b0] sm:$0xff]
  %v165 = vld [vmem:[%s0 + $0x4b8] sm:$0xff]
  %v166 = vld [vmem:[%s0 + $0x4c0] sm:$0xff]
  %v167 = vld [vmem:[%s0 + $0x4c8] sm:$0xff]
  %v168 = vld [vmem:[%s0 + $0x4d0] sm:$0xff]
  %v169 = vld [vmem:[%s0 + $0x4d8] sm:$0xff]
  %v170 = vld [vmem:[%s0 + $0x4e0] sm:$0xff]
  %v171 = vld [vmem:[%s0 + $0x4e8] sm:$0xff]
  %v172 = vld [vmem:[%s0 + $0x4f0] sm:$0xff]
  %v173 = vld [vmem:[%s0 + $0x4f8] sm:$0xff]
  %v174 = vld [vmem:[%s0 + $0x500] sm:$0xff]
  %v175 = vld [vmem:[%s0 + $0x508] sm:$0xff]
  %v176 = vld [vmem:[%s0 + $0x510] sm:$0xff]
  %v177 = vld [vmem:[%s0 + $0x518] sm:$0xff]
  %v178 = vld [vmem:[%s0 + $0x520] sm:$0xff]
  %v179 = vld [vmem:[%s0 + $0x528] sm:$0xff]
  %v180 = vld [vmem:[%s0 + $0x530] sm:$0xff]
  %v181 = vld [vmem:[%s0 + $0x538] sm:$0xff]
  %v182 = vld [vmem:[%s0 + $0x540] sm:$0xff]
  %v183 = vld [vmem:[%s0 + $0x548] sm:$0xff]
  %v184 = vld [vmem:[%s0 + $0x550] sm:$0xff]
  %v185 = vld [vmem:[%s0 + $0x558] sm:$0xff]
  %v186 = vld [vmem:[%s0 + $0x560] sm:$0xff]
  %v187 = vld [vmem:[%s0 + $0x568] sm:$0xff]
  %v188 = vld [vmem:[%s0 + $0x570] sm:$0xff]
  %v189 = vld [vmem:[%s0 + $0x578] sm:$0xff]
  %v190 = vld [vmem:[%s0 + $0x580] sm:$0xff]
  %v191 = vld [vmem:[%s0 + $0x588] sm:$0xff]
  %v192 = vld [vmem:[%s0 + $0x590] sm:$0xff]
  %v193 = vld [vmem:[%s0 + $0x598] sm:$0xff]
  %v194 = vld [vmem:[%s0 + $0x5a0] sm:$0xff]
  %v195 = vld [vmem:[%s0 + $0x5a8] sm:$0xff]
  %v196 = vld [vmem:[%s0 + $0x5b0] sm:$0xff]
  %v197 = vld [vmem:[%s0 + $0x5b8] sm:$0xff]
  %v198 = vld [vmem:[%s0 + $0x5c0] sm:$0xff]
  %v199 = vld [vmem:[%s0 + $0x5c8] sm:$0xff]
  %v200 = vld [vmem:[%s0 + $0x5d0] sm:$0xff]
  %v201 = vld [vmem:[%s0 + $0x5d8] sm:$0xff]
  %v202 = vld [vmem:[%s0 + $0x5e0] sm:$0xff]
  %v203 = vld [vmem:[%s0 + $0x5e8] sm:$0xff]
  %v204 = vld [vmem:[%s0 + $0x5f0] sm:$0xff]
  %v205 = vld [vmem:[%s0 + $0x5f8] sm:$0xff]
  %v206 = vld [vmem:[%s0 + $0x600] sm:$0xff]
  %v207 = vld [vmem:[%s0 + $0x608] sm:$0xff]
  %v208 = vld [vmem:[%s0 + $0x610] sm:$0xff]
  %v209 = vld [vmem:[%s0 + $0x618] sm:$0xff]
  %v210 = vld [vmem:[%s0 + $0x620] sm:$0xff]
  %v211 = vld [vmem:[%s0 + $0x628] sm:$0xff]
  %v212 = vld [vmem:[%s0 + $0x630] sm:$0xff]
  %v213 = vld [vmem:[%s0 + $0x638] sm:$0xff]
  %v214 = vld [vmem:[%s0 + $0x640] sm:$0xff]
  %v215 = vld [vmem:[%s0 + $0x648] sm:$0xff]
  %v216 = vld [vmem:[%s0 + $0x650] sm:$0xff]
  %v217 = vld [vmem:[%s0 + $0x658] sm:$0xff]
  %v218 = vld [vmem:[%s0 + $0x660] sm:$0xff]
  %v219 = vld [vmem:[%s0 + $0x668] sm:$0xff]
  %v220 = vld [vmem:[%s0 + $0x670] sm:$0xff]
  %v221 = vld [vmem:[%s0 + $0x678] sm:$0xff]
  %v222 = vld [vmem:[%s0 + $0x680] sm:$0xff]
  %v223 = vld [vmem:[%s0 + $0x688] sm:$0xff]
  %v224 = vld [vmem:[%s0 + $0x690] sm:$0xff]
  %v225 = vld [vmem:[%s0 + $0x698] sm:$0xff]
  %v226 = vld [vmem:[%s0 + $0x6a0] sm:$0xff]
  %v227 = vld [vmem:[%s0 + $0x6a8] sm:$0xff]
  %v228 = vld [vmem:[%s0 + $0x6b0] sm:$0xff]
  %v229 = vld [vmem:[%s0 + $0x6b8] sm:$0xff]
  %v230 = vld [vmem:[%s0 + $0x6c0] sm:$0xff]
  %v231 = vld [vmem:[%s0 + $0x6c8] sm:$0xff]
  %v232 = vld [vmem:[%s0 + $0x6d0] sm:$0xff]
  %v233 = vld [vmem:[%s0 + $0x6d8] sm:$0xff]
  %v234 = vld [vmem:[%s0 + $0x6e0] sm:$0xff]
  %v235 = vld [vmem:[%s0 + $0x6e8] sm:$0xff]
  %v236 = vld [vmem:[%s0 + $0x6f0] sm:$0xff]
  %v237 = vld [vmem:[%s0 + $0x6f8] sm:$0xff]
  %v238 = vld [vmem:[%s0 + $0x700] sm:$0xff]
  %v239 = vld [vmem:[%s0 + $0x708] sm:$0xff]
  %v240 = vld [vmem:[%s0 + $0x710] sm:$0xff]
  %v241 = vld [vmem:[%s0 + $0x718] sm:$0xff]
  %v242 = vld [vmem:[%s0 + $0x720] sm:$0xff]
  %v243 = vld [vmem:[%s0 + $0x728] sm:$0xff]
  %v244 = vld [vmem:[%s0 + $0x730] sm:$0xff]
  %v245 = vld [vmem:[%s0 + $0x738] sm:$0xff]
  %v246 = vld [vmem:[%s0 + $0x740] sm:$0xff]
  %v247 = vld [vmem:[%s0 + $0x748] sm:$0xff]
  %v248 = vld [vmem:[%s0 + $0x750] sm:$0xff]
  %v249 = vld [vmem:[%s0 + $0x758] sm:$0xff]
  %v250 = vld [vmem:[%s0 + $0x760] sm:$0xff]
  %v251 = vld [vmem:[%s0 + $0x768] sm:$0xff]
  %v252 = vld [vmem:[%s0 + $0x770] sm:$0xff]
  %v253 = vld [vmem:[%s0 + $0x778] sm:$0xff]
  %v254 = vld [vmem:[%s0 + $0x780] sm:$0xff]
  %v255 = vld [vmem:[%s0 + $0x788] sm:$0xff]
  %v256 = vld [vmem:[%s0 + $0x790] sm:$0xff]
  %v257 = vld [vmem:[%s0 + $0x798] sm:$0xff]
  %v258 = vld [vmem:[%s0 + $0x7a0] sm:$0xff]
  %v259 = vld [vmem:[%s0 + $0x7a8] sm:$0xff]
  %v260 = vld [vmem:[%s0 + $0x7b0] sm:$0xff]
  %v261 = vld [vmem:[%s0 + $0x7b8] sm:$0xff]
  %v262 = vld [vmem:[%s0 + $0x7c0] sm:$0xff]
  %v263 = vld [vmem:[%s0 + $0x7c8] sm:$0xff]
  %v264 = vld [vmem:[%s0 + $0x7d0] sm:$0xff]
  %v265 = vld [vmem:[%s0 + $0x7d8] sm:$0xff]
  %v266 = vld [vmem:[%s0 + $0x7e0] sm:$0xff]
  %v267 = vld [vmem:[%s0 + $0x7e8] sm:$0xff]
  %v268 = vld [vmem:[%s0 + $0x7f0] sm:$0xff]
  %v269 = vld [vmem:[%s0 + $0x7f8] sm:$0xff]
  %v270 = vld [vmem:[%s0 + $0x800] sm:$0xff]
  %v271 = vld [vmem:[%s0 + $0x808] sm:$0xff]
  %v272 = vld [vmem:[%s0 + $0x810] sm:$0xff]
  %v273 = vld [vmem:[%s0 + $0x818] sm:$0xff]
  %v274 = vld [vmem:[%s0 + $0x820] sm:$0xff]
  %v275 = vld [vmem:[%s0 + $0x828] sm:$0xff]
  %v276 = vld [vmem:[%s0 + $0x830] sm:$0xff]
  %v277 = vld [vmem:[%s0 + $0x838] sm:$0xff]
  %v278 = vld [vmem:[%s0 + $0x840] sm:$0xff]
  %v279 = vld [vmem:[%s0 + $0x848] sm:$0xff]
  %v280 = vld [vmem:[%s0 + $0x850] sm:$0xff]
  %v281 = vld [vmem:[%s0 + $0x858] sm:$0xff]
  %v282 = vld [vmem:[%s0 + $0x860] sm:$0xff]
  %v283 = vld [vmem:[%s0 + $0x868] sm:$0xff]
  %v284 = vld [vmem:[%s0 + $0x870] sm:$0xff]
  %v285 = vld [vmem:[%s0 + $0x878] sm:$0xff]
  %v286 = vld [vmem:[%s0 + $0x880] sm:$0xff]
  %v287 = vld [vmem:[%s0 + $0x888] sm:$0xff]
  %v288 = vld [vmem:[%s0 + $0x890] sm:$0xff]
  %v289 = vld [vmem:[%s0 + $0x898] sm:$0xff]
  %v290 = vld [vmem:[%s0 + $0x8a0] sm:$0xff]
  %v291 = vld [vmem:[%s0 + $0x8a8] sm:$0xff]
  %v292 = vld [vmem:[%s0 + $0x8b0] sm:$0xff]
  %v293 = vld [vmem:[%s0 + $0x8b8] sm:$0xff]
  %v294 = vld [vmem:[%s0 + $0x8c0] sm:$0xff]
  %v295 = vld [vmem:[%s0 + $0x8c8] sm:$0xff]
  %v296 = vld [vmem:[%s0 + $0x8d0] sm:$0xff]
  %v297 = vld [vmem:[%s0 + $0x8d8] sm:$0xff]
  %v298 = vld [vmem:[%s0 + $0x8e0] sm:$0xff]
  %v299 = vld [vmem:[%s0 + $0x8e8] sm:$0xff]
  %v300 = vld [vmem:[%s0 + $0x8f0] sm:$0xff]
  %v301 = vld [vmem:[%s0 + $0x8f8] sm:$0xff]
  %v302 = vld [vmem:[%s1] sm:$0xff]
  %v303 = vld [vmem:[%s1 + $0x8] sm:$0xff]
  %v304 = vld [vmem:[%s1 + $0x10] sm:$0xff]
  %v305 = vld [vmem:[%s1 + $0x18] sm:$0xff]
  %v306 = vld [vmem:[%s1 + $0x20] sm:$0xff]
  %v307 = vld [vmem:[%s1 + $0x28] sm:$0xff]
  %v308 = vld [vmem:[%s1 + $0x30] sm:$0xff]
  %v309 = vld [vmem:[%s1 + $0x38] sm:$0xff]
  %v310 = vld [vmem:[%s1 + $0x40] sm:$0xff]
  %v311 = vld [vmem:[%s1 + $0x48] sm:$0xff]
  %v312 = vld [vmem:[%s1 + $0x50] sm:$0xff]
  %v313 = vld [vmem:[%s1 + $0x58] sm:$0xff]
  %v314 = vld [vmem:[%s1 + $0x60] sm:$0xff]
  %v315 = vld [vmem:[%s1 + $0x68] sm:$0xff]
  %v316 = vld [vmem:[%s1 + $0x70] sm:$0xff]
  %v317 = vld [vmem:[%s1 + $0x78] sm:$0xff]
  %v318 = vld [vmem:[%s1 + $0x80] sm:$0xff]
  %v319 = vld [vmem:[%s1 + $0x88] sm:$0xff]
  %v320 = vld [vmem:[%s1 + $0x90] sm:$0xff]
  %v321 = vld [vmem:[%s1 + $0x98] sm:$0xff]
  %v322 = vld [vmem:[%s1 + $0xa0] sm:$0xff]
  %v323 = vld [vmem:[%s1 + $0xa8] sm:$0xff]
  %v324 = vld [vmem:[%s1 + $0xb0] sm:$0xff]
  %v325 = vld [vmem:[%s1 + $0xb8] sm:$0xff]
  %v326 = vld [vmem:[%s1 + $0xc0] sm:$0xff]
  %v327 = vld [vmem:[%s1 + $0xc8] sm:$0xff]
  %v328 = vld [vmem:[%s1 + $0xd0] sm:$0xff]
  %v329 = vld [vmem:[%s1 + $0xd8] sm:$0xff]
  %v330 = vld [vmem:[%s1 + $0xe0] sm:$0xff]
  %v331 = vld [vmem:[%s1 + $0xe8] sm:$0xff]
  %v332 = vld [vmem:[%s1 + $0xf0] sm:$0xff]
  %v333 = vld [vmem:[%s1 + $0xf8] sm:$0xff]
  %v334 = vld [vmem:[%s1 + $0x100] sm:$0xff]
  %v335 = vld [vmem:[%s1 + $0x108] sm:$0xff]
  %v336 = vld [vmem:[%s1 + $0x110] sm:$0xff]
  %v337 = vld [vmem:[%s1 + $0x118] sm:$0xff]
  %v338 = vld [vmem:[%s1 + $0x120] sm:$0xff]
  %v339 = vld [vmem:[%s1 + $0x128] sm:$0xff]
  %v340 = vld [vmem:[%s1 + $0x130] sm:$0xff]
  %v341 = vld [vmem:[%s1 + $0x138] sm:$0xff]
  %v342 = vld [vmem:[%s1 + $0x140] sm:$0xff]
  %v343 = vld [vmem:[%s1 + $0x148] sm:$0xff]
  %v344 = vld [vmem:[%s1 + $0x150] sm:$0xff]
  %v345 = vld [vmem:[%s1 + $0x158] sm:$0xff]
  %v346 = vld [vmem:[%s1 + $0x160] sm:$0xff]
  %v347 = vld [vmem:[%s1 + $0x168] sm:$0xff]
  %v348 = vld [vmem:[%s1 + $0x170] sm:$0xff]
  %v349 = vld [vmem:[%s1 + $0x178] sm:$0xff]
  %v350 = vld [vmem:[%s1 + $0x180] sm:$0xff]
  %v351 = vld [vmem:[%s1 + $0x188] sm:$0xff]
  %v352 = vld [vmem:[%s1 + $0x190] sm:$0xff]
  %v353 = vld [vmem:[%s1 + $0x198] sm:$0xff]
  %v354 = vld [vmem:[%s1 + $0x1a0] sm:$0xff]
  %v355 = vld [vmem:[%s1 + $0x1a8] sm:$0xff]
  %v356 = vld [vmem:[%s1 + $0x1b0] sm:$0xff]
  %v357 = vld [vmem:[%s1 + $0x1b8] sm:$0xff]
  %v358 = vld [vmem:[%s1 + $0x1c0] sm:$0xff]
  %v359 = vld [vmem:[%s1 + $0x1c8] sm:$0xff]
  %v360 = vld [vmem:[%s1 + $0x1d0] sm:$0xff]
  %v361 = vld [vmem:[%s1 + $0x1d8] sm:$0xff]
  %v362 = vld [vmem:[%s1 + $0x1e0] sm:$0xff]
  %v363 = vld [vmem:[%s1 + $0x1e8] sm:$0xff]
  %v364 = vld [vmem:[%s1 + $0x1f0] sm:$0xff]
  %v365 = vld [vmem:[%s1 + $0x1f8] sm:$0xff]
  %v366 = vld [vmem:[%s1 + $0x200] sm:$0xff]
  %v367 = vld [vmem:[%s1 + $0x208] sm:$0xff]
  %v368 = vld [vmem:[%s1 + $0x210] sm:$0xff]
  %v369 = vld [vmem:[%s1 + $0x218] sm:$0xff]
  %v370 = vld [vmem:[%s1 + $0x220] sm:$0xff]
  %v371 = vld [vmem:[%s1 + $0x228] sm:$0xff]
  %v372 = vld [vmem:[%s1 + $0x230] sm:$0xff]
  %v373 = vld [vmem:[%s1 + $0x238] sm:$0xff]
  %v374 = vld [vmem:[%s1 + $0x240] sm:$0xff]
  %v375 = vld [vmem:[%s1 + $0x248] sm:$0xff]
  %v376 = vld [vmem:[%s1 + $0x250] sm:$0xff]
  %v377 = vld [vmem:[%s1 + $0x258] sm:$0xff]
  %v378 = vld [vmem:[%s1 + $0x260] sm:$0xff]
  %v379 = vld [vmem:[%s1 + $0x268] sm:$0xff]
  %v380 = vld [vmem:[%s1 + $0x270] sm:$0xff]
  %v381 = vld [vmem:[%s1 + $0x278] sm:$0xff]
  %v382 = vld [vmem:[%s1 + $0x280] sm:$0xff]
  %v383 = vld [vmem:[%s1 + $0x288] sm:$0xff]
  %v384 = vld [vmem:[%s1 + $0x290] sm:$0xff]
  %v385 = vld [vmem:[%s1 + $0x298] sm:$0xff]
  %v386 = vld [vmem:[%s1 + $0x2a0] sm:$0xff]
  %v387 = vld [vmem:[%s1 + $0x2a8] sm:$0xff]
  %v388 = vld [vmem:[%s1 + $0x2b0] sm:$0xff]
  %v389 = vld [vmem:[%s1 + $0x2b8] sm:$0xff]
  %v390 = vld [vmem:[%s1 + $0x2c0] sm:$0xff]
  %v391 = vld [vmem:[%s1 + $0x2c8] sm:$0xff]
  %v392 = vld [vmem:[%s1 + $0x2d0] sm:$0xff]
  %v393 = vld [vmem:[%s1 + $0x2d8] sm:$0xff]
  %v394 = vld [vmem:[%s1 + $0x2e0] sm:$0xff]
  %v395 = vld [vmem:[%s1 + $0x2e8] sm:$0xff]
  %v396 = vld [vmem:[%s1 + $0x2f0] sm:$0xff]
  %v397 = vld [vmem:[%s1 + $0x2f8] sm:$0xff]
  %v398 = vld [vmem:[%s1 + $0x300] sm:$0xff]
  %v399 = vld [vmem:[%s1 + $0x308] sm:$0xff]
  %v400 = vld [vmem:[%s1 + $0x310] sm:$0xff]
  %v401 = vld [vmem:[%s1 + $0x318] sm:$0xff]
  %v402 = vld [vmem:[%s1 + $0x320] sm:$0xff]
  %v403 = vld [vmem:[%s1 + $0x328] sm:$0xff]
  %v404 = vld [vmem:[%s1 + $0x330] sm:$0xff]
  %v405 = vld [vmem:[%s1 + $0x338] sm:$0xff]
  %v406 = vld [vmem:[%s1 + $0x340] sm:$0xff]
  %v407 = vld [vmem:[%s1 + $0x348] sm:$0xff]
  %v408 = vld [vmem:[%s1 + $0x350] sm:$0xff]
  %v409 = vld [vmem:[%s1 + $0x358] sm:$0xff]
  %v410 = vld [vmem:[%s1 + $0x360] sm:$0xff]
  %v411 = vld [vmem:[%s1 + $0x368] sm:$0xff]
  %v412 = vld [vmem:[%s1 + $0x370] sm:$0xff]
  %v413 = vld [vmem:[%s1 + $0x378] sm:$0xff]
  %v414 = vld [vmem:[%s1 + $0x380] sm:$0xff]
  %v415 = vld [vmem:[%s1 + $0x388] sm:$0xff]
  %v416 = vld [vmem:[%s1 + $0x390] sm:$0xff]
  %v417 = vld [vmem:[%s1 + $0x398] sm:$0xff]
  %v418 = vld [vmem:[%s1 + $0x3a0] sm:$0xff]
  %v419 = vld [vmem:[%s1 + $0x3a8] sm:$0xff]
  %v420 = vld [vmem:[%s1 + $0x3b0] sm:$0xff]
  %v421 = vld [vmem:[%s1 + $0x3b8] sm:$0xff]
  %v422 = vld [vmem:[%s1 + $0x3c0] sm:$0xff]
  %v423 = vld [vmem:[%s1 + $0x3c8] sm:$0xff]
  %v424 = vld [vmem:[%s1 + $0x3d0] sm:$0xff]
  %v425 = vld [vmem:[%s1 + $0x3d8] sm:$0xff]
  %v426 = vld [vmem:[%s1 + $0x3e0] sm:$0xff]
  %v427 = vld [vmem:[%s1 + $0x3e8] sm:$0xff]
  %v428 = vld [vmem:[%s1 + $0x3f0] sm:$0xff]
  %v429 = vld [vmem:[%s1 + $0x3f8] sm:$0xff]
  %v430 = vld [vmem:[%s1 + $0x400] sm:$0xff]
  %v431 = vld [vmem:[%s1 + $0x408] sm:$0xff]
  %v432 = vld [vmem:[%s1 + $0x410] sm:$0xff]
  %v433 = vld [vmem:[%s1 + $0x418] sm:$0xff]
  %v434 = vld [vmem:[%s1 + $0x420] sm:$0xff]
  %v435 = vld [vmem:[%s1 + $0x428] sm:$0xff]
  %v436 = vld [vmem:[%s1 + $0x430] sm:$0xff]
  %v437 = vld [vmem:[%s1 + $0x438] sm:$0xff]
  %v438 = vld [vmem:[%s1 + $0x440] sm:$0xff]
  %v439 = vld [vmem:[%s1 + $0x448] sm:$0xff]
  %v440 = vld [vmem:[%s1 + $0x450] sm:$0xff]
  %v441 = vld [vmem:[%s1 + $0x458] sm:$0xff]
  %v442 = vld [vmem:[%s1 + $0x460] sm:$0xff]
  %v443 = vld [vmem:[%s1 + $0x468] sm:$0xff]
  %v444 = vld [vmem:[%s1 + $0x470] sm:$0xff]
  %v445 = vld [vmem:[%s1 + $0x478] sm:$0xff]
  %v446 = vld [vmem:[%s1 + $0x480] sm:$0xff]
  %v447 = vld [vmem:[%s1 + $0x488] sm:$0xff]
  %v448 = vld [vmem:[%s1 + $0x490] sm:$0xff]
  %v449 = vld [vmem:[%s1 + $0x498] sm:$0xff]
  %v450 = vld [vmem:[%s1 + $0x4a0] sm:$0xff]
  %v451 = vld [vmem:[%s1 + $0x4a8] sm:$0xff]
  %v452 = vld [vmem:[%s1 + $0x4b0] sm:$0xff]
  %v453 = vld [vmem:[%s1 + $0x4b8] sm:$0xff]
  %v454 = vld [vmem:[%s1 + $0x4c0] sm:$0xff]
  %v455 = vld [vmem:[%s1 + $0x4c8] sm:$0xff]
  %v456 = vld [vmem:[%s1 + $0x4d0] sm:$0xff]
  %v457 = vld [vmem:[%s1 + $0x4d8] sm:$0xff]
  %v458 = vld [vmem:[%s1 + $0x4e0] sm:$0xff]
  %v459 = vld [vmem:[%s1 + $0x4e8] sm:$0xff]
  %v460 = vld [vmem:[%s1 + $0x4f0] sm:$0xff]
  %v461 = vld [vmem:[%s1 + $0x4f8] sm:$0xff]
  %v462 = vld [vmem:[%s1 + $0x500] sm:$0xff]
  %v463 = vld [vmem:[%s1 + $0x508] sm:$0xff]
  %v464 = vld [vmem:[%s1 + $0x510] sm:$0xff]
  %v465 = vld [vmem:[%s1 + $0x518] sm:$0xff]
  %v466 = vld [vmem:[%s1 + $0x520] sm:$0xff]
  %v467 = vld [vmem:[%s1 + $0x528] sm:$0xff]
  %v468 = vld [vmem:[%s1 + $0x530] sm:$0xff]
  %v469 = vld [vmem:[%s1 + $0x538] sm:$0xff]
  %v470 = vld [vmem:[%s1 + $0x540] sm:$0xff]
  %v471 = vld [vmem:[%s1 + $0x548] sm:$0xff]
  %v472 = vld [vmem:[%s1 + $0x550] sm:$0xff]
  %v473 = vld [vmem:[%s1 + $0x558] sm:$0xff]
  %v474 = vld [vmem:[%s1 + $0x560] sm:$0xff]
  %v475 = vld [vmem:[%s1 + $0x568] sm:$0xff]
  %v476 = vld [vmem:[%s1 + $0x570] sm:$0xff]
  %v477 = vld [vmem:[%s1 + $0x578] sm:$0xff]
  %v478 = vld [vmem:[%s1 + $0x580] sm:$0xff]
  %v479 = vld [vmem:[%s1 + $0x588] sm:$0xff]
  %v480 = vld [vmem:[%s1 + $0x590] sm:$0xff]
  %v481 = vld [vmem:[%s1 + $0x598] sm:$0xff]
  %v482 = vld [vmem:[%s1 + $0x5a0] sm:$0xff]
  %v483 = vld [vmem:[%s1 + $0x5a8] sm:$0xff]
  %v484 = vld [vmem:[%s1 + $0x5b0] sm:$0xff]
  %v485 = vld [vmem:[%s1 + $0x5b8] sm:$0xff]
  %v486 = vld [vmem:[%s1 + $0x5c0] sm:$0xff]
  %v487 = vld [vmem:[%s1 + $0x5c8] sm:$0xff]
  %v488 = vld [vmem:[%s1 + $0x5d0] sm:$0xff]
  %v489 = vld [vmem:[%s1 + $0x5d8] sm:$0xff]
  %v490 = vld [vmem:[%s1 + $0x5e0] sm:$0xff]
  %v491 = vld [vmem:[%s1 + $0x5e8] sm:$0xff]
  %v492 = vld [vmem:[%s1 + $0x5f0] sm:$0xff]
  %v493 = vld [vmem:[%s1 + $0x5f8] sm:$0xff]
  %v494 = vld [vmem:[%s1 + $0x600] sm:$0xff]
  %v495 = vld [vmem:[%s1 + $0x608] sm:$0xff]
  %v496 = vld [vmem:[%s1 + $0x610] sm:$0xff]
  %v497 = vld [vmem:[%s1 + $0x618] sm:$0xff]
  %v498 = vld [vmem:[%s1 + $0x620] sm:$0xff]
  %v499 = vld [vmem:[%s1 + $0x628] sm:$0xff]
  %v500 = vld [vmem:[%s1 + $0x630] sm:$0xff]
  %v501 = vld [vmem:[%s1 + $0x638] sm:$0xff]
  %v502 = vld [vmem:[%s1 + $0x640] sm:$0xff]
  %v503 = vld [vmem:[%s1 + $0x648] sm:$0xff]
  %v504 = vld [vmem:[%s1 + $0x650] sm:$0xff]
  %v505 = vld [vmem:[%s1 + $0x658] sm:$0xff]
  %v506 = vld [vmem:[%s1 + $0x660] sm:$0xff]
  %v507 = vld [vmem:[%s1 + $0x668] sm:$0xff]
  %v508 = vld [vmem:[%s1 + $0x670] sm:$0xff]
  %v509 = vld [vmem:[%s1 + $0x678] sm:$0xff]
  %v510 = vld [vmem:[%s1 + $0x680] sm:$0xff]
  %v511 = vld [vmem:[%s1 + $0x688] sm:$0xff]
  %v512 = vld [vmem:[%s1 + $0x690] sm:$0xff]
  %v513 = vld [vmem:[%s1 + $0x698] sm:$0xff]
  %v514 = vld [vmem:[%s1 + $0x6a0] sm:$0xff]
  %v515 = vld [vmem:[%s1 + $0x6a8] sm:$0xff]
  %v516 = vld [vmem:[%s1 + $0x6b0] sm:$0xff]
  %v517 = vld [vmem:[%s1 + $0x6b8] sm:$0xff]
  %v518 = vld [vmem:[%s1 + $0x6c0] sm:$0xff]
  %v519 = vld [vmem:[%s1 + $0x6c8] sm:$0xff]
  %v520 = vld [vmem:[%s1 + $0x6d0] sm:$0xff]
  %v521 = vld [vmem:[%s1 + $0x6d8] sm:$0xff]
  %v522 = vld [vmem:[%s1 + $0x6e0] sm:$0xff]
  %v523 = vld [vmem:[%s1 + $0x6e8] sm:$0xff]
  %v524 = vld [vmem:[%s1 + $0x6f0] sm:$0xff]
  %v525 = vld [vmem:[%s1 + $0x6f8] sm:$0xff]
  %v526 = vld [vmem:[%s1 + $0x700] sm:$0xff]
  %v527 = vld [vmem:[%s1 + $0x708] sm:$0xff]
  %v528 = vld [vmem:[%s1 + $0x710] sm:$0xff]
  %v529 = vld [vmem:[%s1 + $0x718] sm:$0xff]
  %v530 = vld [vmem:[%s1 + $0x720] sm:$0xff]
  %v531 = vld [vmem:[%s1 + $0x728] sm:$0xff]
  %v532 = vld [vmem:[%s1 + $0x730] sm:$0xff]
  %v533 = vld [vmem:[%s1 + $0x738] sm:$0xff]
  %v534 = vld [vmem:[%s1 + $0x740] sm:$0xff]
  %v535 = vld [vmem:[%s1 + $0x748] sm:$0xff]
  %v536 = vld [vmem:[%s1 + $0x750] sm:$0xff]
  %v537 = vld [vmem:[%s1 + $0x758] sm:$0xff]
  %v538 = vld [vmem:[%s1 + $0x760] sm:$0xff]
  %v539 = vld [vmem:[%s1 + $0x768] sm:$0xff]
  %v540 = vld [vmem:[%s1 + $0x770] sm:$0xff]
  %v541 = vld [vmem:[%s1 + $0x778] sm:$0xff]
  %v542 = vld [vmem:[%s1 + $0x780] sm:$0xff]
  %v543 = vld [vmem:[%s1 + $0x788] sm:$0xff]
  %v544 = vld [vmem:[%s1 + $0x790] sm:$0xff]
  %v545 = vld [vmem:[%s1 + $0x798] sm:$0xff]
  %v546 = vld [vmem:[%s1 + $0x7a0] sm:$0xff]
  %v547 = vld [vmem:[%s1 + $0x7a8] sm:$0xff]
  %v548 = vld [vmem:[%s1 + $0x7b0] sm:$0xff]
  %v549 = vld [vmem:[%s1 + $0x7b8] sm:$0xff]
  %v550 = vld [vmem:[%s1 + $0x7c0] sm:$0xff]
  %v551 = vld [vmem:[%s1 + $0x7c8] sm:$0xff]
  %v552 = vld [vmem:[%s1 + $0x7d0] sm:$0xff]
  %v553 = vld [vmem:[%s1 + $0x7d8] sm:$0xff]
  %v554 = vld [vmem:[%s1 + $0x7e0] sm:$0xff]
  %v555 = vld [vmem:[%s1 + $0x7e8] sm:$0xff]
  %v556 = vld [vmem:[%s1 + $0x7f0] sm:$0xff]
  %v557 = vld [vmem:[%s1 + $0x7f8] sm:$0xff]
  %v558 = vld [vmem:[%s1 + $0x800] sm:$0xff]
  %v559 = vld [vmem:[%s1 + $0x808] sm:$0xff]
  %v560 = vld [vmem:[%s1 + $0x810] sm:$0xff]
  %v561 = vld [vmem:[%s1 + $0x818] sm:$0xff]
  %v562 = vld [vmem:[%s1 + $0x820] sm:$0xff]
  %v563 = vld [vmem:[%s1 + $0x828] sm:$0xff]
  %v564 = vld [vmem:[%s1 + $0x830] sm:$0xff]
  %v565 = vld [vmem:[%s1 + $0x838] sm:$0xff]
  %v566 = vld [vmem:[%s1 + $0x840] sm:$0xff]
  %v567 = vld [vmem:[%s1 + $0x848] sm:$0xff]
  %v568 = vld [vmem:[%s1 + $0x850] sm:$0xff]
  %v569 = vld [vmem:[%s1 + $0x858] sm:$0xff]
  %v570 = vld [vmem:[%s1 + $0x860] sm:$0xff]
  %v571 = vld [vmem:[%s1 + $0x868] sm:$0xff]
  %v572 = vld [vmem:[%s1 + $0x870] sm:$0xff]
  %v573 = vld [vmem:[%s1 + $0x878] sm:$0xff]
  %v574 = vld [vmem:[%s1 + $0x880] sm:$0xff]
  %v575 = vld [vmem:[%s1 + $0x888] sm:$0xff]
  %v576 = vld [vmem:[%s1 + $0x890] sm:$0xff]
  %v577 = vld [vmem:[%s2] sm:$0x1]
  %v579 = vperm.slane %v577, 0
  %vm581 = vcmask 195584
  %v583 = vsel %vm581, %v31, 0
  %v586 = vsel %vm581, %v49, 0
  %v589 = vsel %vm581, %v67, 0
  %v592 = vsel %vm581, %v85, 0
  %v595 = vsel %vm581, %v103, 0
  %v598 = vsel %vm581, %v121, 0
  %v601 = vsel %vm581, %v139, 0
  %v604 = vsel %vm581, %v157, 0
  %v607 = vsel %vm581, %v175, 0
  %v610 = vsel %vm581, %v193, 0
  %v613 = vsel %vm581, %v211, 0
  %v616 = vsel %vm581, %v229, 0
  %v619 = vsel %vm581, %v247, 0
  %v622 = vsel %vm581, %v265, 0
  %v625 = vsel %vm581, %v283, 0
  %v628 = vsel %vm581, %v301, 0
  %630 = vmatpush.msra.mxu0 %v317
  %631 = vmatpush.msra.mxu0 %v316
  %632 = vmatpush.msra.mxu0 %v315
  %633 = vmatpush.msra.mxu0 %v314
  %634 = vmatpush.msra.mxu0 %v313
  %635 = vmatpush.msra.mxu0 %v312
  %636 = vmatpush.msra.mxu0 %v311
  %637 = vmatpush.msra.mxu0 %v310
  %638 = vmatpush.msra.mxu0 %v309
  %639 = vmatpush.msra.mxu0 %v308
  %640 = vmatpush.msra.mxu0 %v307
  %641 = vmatpush.msra.mxu0 %v306
  %642 = vmatpush.msra.mxu0 %v305
  %643 = vmatpush.msra.mxu0 %v304
  %644 = vmatpush.msra.mxu0 %v303
  %645 = vmatpush.msra.mxu0 %v302
  %646 = vmatmul.f32.gmra.mxu0 %v14
  %v647 = vpop.f32.mrf.mxu0
  %v648 = vadd.f32 %v579, %v647
  %649 = vmatmul.f32.gmra.mxu0 %v32
  %v650 = vpop.f32.mrf.mxu0
  %v651 = vadd.f32 %v579, %v650
  %652 = vmatmul.f32.gmra.mxu0 %v50
  %v653 = vpop.f32.mrf.mxu0
  %v654 = vadd.f32 %v579, %v653
  %655 = vmatmul.f32.gmra.mxu0 %v68
  %v656 = vpop.f32.mrf.mxu0
  %v657 = vadd.f32 %v579, %v656
  %658 = vmatmul.f32.gmra.mxu0 %v86
  %v659 = vpop.f32.mrf.mxu0
  %v660 = vadd.f32 %v579, %v659
  %661 = vmatmul.f32.gmra.mxu0 %v104
  %v662 = vpop.f32.mrf.mxu0
  %v663 = vadd.f32 %v579, %v662
  %664 = vmatmul.f32.gmra.mxu0 %v122
  %v665 = vpop.f32.mrf.mxu0
  %v666 = vadd.f32 %v579, %v665
  %667 = vmatmul.f32.gmra.mxu0 %v140
  %v668 = vpop.f32.mrf.mxu0
  %v669 = vadd.f32 %v579, %v668
  %670 = vmatmul.f32.gmra.mxu0 %v158
  %v671 = vpop.f32.mrf.mxu0
  %v672 = vadd.f32 %v579, %v671
  %673 = vmatmul.f32.gmra.mxu0 %v176
  %v674 = vpop.f32.mrf.mxu0
  %v675 = vadd.f32 %v579, %v674
  %676 = vmatmul.f32.gmra.mxu0 %v194
  %v677 = vpop.f32.mrf.mxu0
  %v678 = vadd.f32 %v579, %v677
  %679 = vmatmul.f32.gmra.mxu0 %v212
  %v680 = vpop.f32.mrf.mxu0
  %v681 = vadd.f32 %v579, %v680
  %682 = vmatmul.f32.gmra.mxu0 %v230
  %v683 = vpop.f32.mrf.mxu0
  %v684 = vadd.f32 %v579, %v683
  %685 = vmatmul.f32.gmra.mxu0 %v248
  %v686 = vpop.f32.mrf.mxu0
  %v687 = vadd.f32 %v579, %v686
  %688 = vmatmul.f32.gmra.mxu0 %v266
  %v689 = vpop.f32.mrf.mxu0
  %v690 = vadd.f32 %v579, %v689
  %691 = vmatmul.f32.gmra.mxu0 %v284
  %v692 = vpop.f32.mrf.mxu0
  %v693 = vadd.f32 %v579, %v692
  %694 = vdwg.mxu0
  %695 = vmatpush.msra.mxu0 %v333
  %696 = vmatpush.msra.mxu0 %v332
  %697 = vmatpush.msra.mxu0 %v331
  %698 = vmatpush.msra.mxu0 %v330
  %699 = vmatpush.msra.mxu0 %v329
  %700 = vmatpush.msra.mxu0 %v328
  %701 = vmatpush.msra.mxu0 %v327
  %702 = vmatpush.msra.mxu0 %v326
  %703 = vmatpush.msra.mxu0 %v325
  %704 = vmatpush.msra.mxu0 %v324
  %705 = vmatpush.msra.mxu0 %v323
  %706 = vmatpush.msra.mxu0 %v322
  %707 = vmatpush.msra.mxu0 %v321
  %708 = vmatpush.msra.mxu0 %v320
  %709 = vmatpush.msra.mxu0 %v319
  %710 = vmatpush.msra.mxu0 %v318
  %711 = vmatmul.f32.gmra.mxu0 %v15
  %v712 = vpop.f32.mrf.mxu0
  %v713 = vadd.f32 %v648, %v712
  %714 = vmatmul.f32.gmra.mxu0 %v33
  %v715 = vpop.f32.mrf.mxu0
  %v716 = vadd.f32 %v651, %v715
  %717 = vmatmul.f32.gmra.mxu0 %v51
  %v718 = vpop.f32.mrf.mxu0
  %v719 = vadd.f32 %v654, %v718
  %720 = vmatmul.f32.gmra.mxu0 %v69
  %v721 = vpop.f32.mrf.mxu0
  %v722 = vadd.f32 %v657, %v721
  %723 = vmatmul.f32.gmra.mxu0 %v87
  %v724 = vpop.f32.mrf.mxu0
  %v725 = vadd.f32 %v660, %v724
  %726 = vmatmul.f32.gmra.mxu0 %v105
  %v727 = vpop.f32.mrf.mxu0
  %v728 = vadd.f32 %v663, %v727
  %729 = vmatmul.f32.gmra.mxu0 %v123
  %v730 = vpop.f32.mrf.mxu0
  %v731 = vadd.f32 %v666, %v730
  %732 = vmatmul.f32.gmra.mxu0 %v141
  %v733 = vpop.f32.mrf.mxu0
  %v734 = vadd.f32 %v669, %v733
  %735 = vmatmul.f32.gmra.mxu0 %v159
  %v736 = vpop.f32.mrf.mxu0
  %v737 = vadd.f32 %v672, %v736
  %738 = vmatmul.f32.gmra.mxu0 %v177
  %v739 = vpop.f32.mrf.mxu0
  %v740 = vadd.f32 %v675, %v739
  %741 = vmatmul.f32.gmra.mxu0 %v195
  %v742 = vpop.f32.mrf.mxu0
  %v743 = vadd.f32 %v678, %v742
  %744 = vmatmul.f32.gmra.mxu0 %v213
  %v745 = vpop.f32.mrf.mxu0
  %v746 = vadd.f32 %v681, %v745
  %747 = vmatmul.f32.gmra.mxu0 %v231
  %v748 = vpop.f32.mrf.mxu0
  %v749 = vadd.f32 %v684, %v748
  %750 = vmatmul.f32.gmra.mxu0 %v249
  %v751 = vpop.f32.mrf.mxu0
  %v752 = vadd.f32 %v687, %v751
  %753 = vmatmul.f32.gmra.mxu0 %v267
  %v754 = vpop.f32.mrf.mxu0
  %v755 = vadd.f32 %v690, %v754
  %756 = vmatmul.f32.gmra.mxu0 %v285
  %v757 = vpop.f32.mrf.mxu0
  %v758 = vadd.f32 %v693, %v757
  %759 = vdwg.mxu0
  %760 = vmatpush.msra.mxu0 %v349
  %761 = vmatpush.msra.mxu0 %v348
  %762 = vmatpush.msra.mxu0 %v347
  %763 = vmatpush.msra.mxu0 %v346
  %764 = vmatpush.msra.mxu0 %v345
  %765 = vmatpush.msra.mxu0 %v344
  %766 = vmatpush.msra.mxu0 %v343
  %767 = vmatpush.msra.mxu0 %v342
  %768 = vmatpush.msra.mxu0 %v341
  %769 = vmatpush.msra.mxu0 %v340
  %770 = vmatpush.msra.mxu0 %v339
  %771 = vmatpush.msra.mxu0 %v338
  %772 = vmatpush.msra.mxu0 %v337
  %773 = vmatpush.msra.mxu0 %v336
  %774 = vmatpush.msra.mxu0 %v335
  %775 = vmatpush.msra.mxu0 %v334
  %776 = vmatmul.f32.gmra.mxu0 %v16
  %v777 = vpop.f32.mrf.mxu0
  %v778 = vadd.f32 %v713, %v777
  %779 = vmatmul.f32.gmra.mxu0 %v34
  %v780 = vpop.f32.mrf.mxu0
  %v781 = vadd.f32 %v716, %v780
  %782 = vmatmul.f32.gmra.mxu0 %v52
  %v783 = vpop.f32.mrf.mxu0
  %v784 = vadd.f32 %v719, %v783
  %785 = vmatmul.f32.gmra.mxu0 %v70
  %v786 = vpop.f32.mrf.mxu0
  %v787 = vadd.f32 %v722, %v786
  %788 = vmatmul.f32.gmra.mxu0 %v88
  %v789 = vpop.f32.mrf.mxu0
  %v790 = vadd.f32 %v725, %v789
  %791 = vmatmul.f32.gmra.mxu0 %v106
  %v792 = vpop.f32.mrf.mxu0
  %v793 = vadd.f32 %v728, %v792
  %794 = vmatmul.f32.gmra.mxu0 %v124
  %v795 = vpop.f32.mrf.mxu0
  %v796 = vadd.f32 %v731, %v795
  %797 = vmatmul.f32.gmra.mxu0 %v142
  %v798 = vpop.f32.mrf.mxu0
  %v799 = vadd.f32 %v734, %v798
  %800 = vmatmul.f32.gmra.mxu0 %v160
  %v801 = vpop.f32.mrf.mxu0
  %v802 = vadd.f32 %v737, %v801
  %803 = vmatmul.f32.gmra.mxu0 %v178
  %v804 = vpop.f32.mrf.mxu0
  %v805 = vadd.f32 %v740, %v804
  %806 = vmatmul.f32.gmra.mxu0 %v196
  %v807 = vpop.f32.mrf.mxu0
  %v808 = vadd.f32 %v743, %v807
  %809 = vmatmul.f32.gmra.mxu0 %v214
  %v810 = vpop.f32.mrf.mxu0
  %v811 = vadd.f32 %v746, %v810
  %812 = vmatmul.f32.gmra.mxu0 %v232
  %v813 = vpop.f32.mrf.mxu0
  %v814 = vadd.f32 %v749, %v813
  %815 = vmatmul.f32.gmra.mxu0 %v250
  %v816 = vpop.f32.mrf.mxu0
  %v817 = vadd.f32 %v752, %v816
  %818 = vmatmul.f32.gmra.mxu0 %v268
  %v819 = vpop.f32.mrf.mxu0
  %v820 = vadd.f32 %v755, %v819
  %821 = vmatmul.f32.gmra.mxu0 %v286
  %v822 = vpop.f32.mrf.mxu0
  %v823 = vadd.f32 %v758, %v822
  %824 = vdwg.mxu0
  %825 = vmatpush.msra.mxu0 %v365
  %826 = vmatpush.msra.mxu0 %v364
  %827 = vmatpush.msra.mxu0 %v363
  %828 = vmatpush.msra.mxu0 %v362
  %829 = vmatpush.msra.mxu0 %v361
  %830 = vmatpush.msra.mxu0 %v360
  %831 = vmatpush.msra.mxu0 %v359
  %832 = vmatpush.msra.mxu0 %v358
  %833 = vmatpush.msra.mxu0 %v357
  %834 = vmatpush.msra.mxu0 %v356
  %835 = vmatpush.msra.mxu0 %v355
  %836 = vmatpush.msra.mxu0 %v354
  %837 = vmatpush.msra.mxu0 %v353
  %838 = vmatpush.msra.mxu0 %v352
  %839 = vmatpush.msra.mxu0 %v351
  %840 = vmatpush.msra.mxu0 %v350
  %841 = vmatmul.f32.gmra.mxu0 %v17
  %v842 = vpop.f32.mrf.mxu0
  %v843 = vadd.f32 %v778, %v842
  %844 = vmatmul.f32.gmra.mxu0 %v35
  %v845 = vpop.f32.mrf.mxu0
  %v846 = vadd.f32 %v781, %v845
  %847 = vmatmul.f32.gmra.mxu0 %v53
  %v848 = vpop.f32.mrf.mxu0
  %v849 = vadd.f32 %v784, %v848
  %850 = vmatmul.f32.gmra.mxu0 %v71
  %v851 = vpop.f32.mrf.mxu0
  %v852 = vadd.f32 %v787, %v851
  %853 = vmatmul.f32.gmra.mxu0 %v89
  %v854 = vpop.f32.mrf.mxu0
  %v855 = vadd.f32 %v790, %v854
  %856 = vmatmul.f32.gmra.mxu0 %v107
  %v857 = vpop.f32.mrf.mxu0
  %v858 = vadd.f32 %v793, %v857
  %859 = vmatmul.f32.gmra.mxu0 %v125
  %v860 = vpop.f32.mrf.mxu0
  %v861 = vadd.f32 %v796, %v860
  %862 = vmatmul.f32.gmra.mxu0 %v143
  %v863 = vpop.f32.mrf.mxu0
  %v864 = vadd.f32 %v799, %v863
  %865 = vmatmul.f32.gmra.mxu0 %v161
  %v866 = vpop.f32.mrf.mxu0
  %v867 = vadd.f32 %v802, %v866
  %868 = vmatmul.f32.gmra.mxu0 %v179
  %v869 = vpop.f32.mrf.mxu0
  %v870 = vadd.f32 %v805, %v869
  %871 = vmatmul.f32.gmra.mxu0 %v197
  %v872 = vpop.f32.mrf.mxu0
  %v873 = vadd.f32 %v808, %v872
  %874 = vmatmul.f32.gmra.mxu0 %v215
  %v875 = vpop.f32.mrf.mxu0
  %v876 = vadd.f32 %v811, %v875
  %877 = vmatmul.f32.gmra.mxu0 %v233
  %v878 = vpop.f32.mrf.mxu0
  %v879 = vadd.f32 %v814, %v878
  %880 = vmatmul.f32.gmra.mxu0 %v251
  %v881 = vpop.f32.mrf.mxu0
  %v882 = vadd.f32 %v817, %v881
  %883 = vmatmul.f32.gmra.mxu0 %v269
  %v884 = vpop.f32.mrf.mxu0
  %v885 = vadd.f32 %v820, %v884
  %886 = vmatmul.f32.gmra.mxu0 %v287
  %v887 = vpop.f32.mrf.mxu0
  %v888 = vadd.f32 %v823, %v887
  %889 = vdwg.mxu0
  %890 = vmatpush.msra.mxu0 %v381
  %891 = vmatpush.msra.mxu0 %v380
  %892 = vmatpush.msra.mxu0 %v379
  %893 = vmatpush.msra.mxu0 %v378
  %894 = vmatpush.msra.mxu0 %v377
  %895 = vmatpush.msra.mxu0 %v376
  %896 = vmatpush.msra.mxu0 %v375
  %897 = vmatpush.msra.mxu0 %v374
  %898 = vmatpush.msra.mxu0 %v373
  %899 = vmatpush.msra.mxu0 %v372
  %900 = vmatpush.msra.mxu0 %v371
  %901 = vmatpush.msra.mxu0 %v370
  %902 = vmatpush.msra.mxu0 %v369
  %903 = vmatpush.msra.mxu0 %v368
  %904 = vmatpush.msra.mxu0 %v367
  %905 = vmatpush.msra.mxu0 %v366
  %906 = vmatmul.f32.gmra.mxu0 %v18
  %v907 = vpop.f32.mrf.mxu0
  %v908 = vadd.f32 %v843, %v907
  %909 = vmatmul.f32.gmra.mxu0 %v36
  %v910 = vpop.f32.mrf.mxu0
  %v911 = vadd.f32 %v846, %v910
  %912 = vmatmul.f32.gmra.mxu0 %v54
  %v913 = vpop.f32.mrf.mxu0
  %v914 = vadd.f32 %v849, %v913
  %915 = vmatmul.f32.gmra.mxu0 %v72
  %v916 = vpop.f32.mrf.mxu0
  %v917 = vadd.f32 %v852, %v916
  %918 = vmatmul.f32.gmra.mxu0 %v90
  %v919 = vpop.f32.mrf.mxu0
  %v920 = vadd.f32 %v855, %v919
  %921 = vmatmul.f32.gmra.mxu0 %v108
  %v922 = vpop.f32.mrf.mxu0
  %v923 = vadd.f32 %v858, %v922
  %924 = vmatmul.f32.gmra.mxu0 %v126
  %v925 = vpop.f32.mrf.mxu0
  %v926 = vadd.f32 %v861, %v925
  %927 = vmatmul.f32.gmra.mxu0 %v144
  %v928 = vpop.f32.mrf.mxu0
  %v929 = vadd.f32 %v864, %v928
  %930 = vmatmul.f32.gmra.mxu0 %v162
  %v931 = vpop.f32.mrf.mxu0
  %v932 = vadd.f32 %v867, %v931
  %933 = vmatmul.f32.gmra.mxu0 %v180
  %v934 = vpop.f32.mrf.mxu0
  %v935 = vadd.f32 %v870, %v934
  %936 = vmatmul.f32.gmra.mxu0 %v198
  %v937 = vpop.f32.mrf.mxu0
  %v938 = vadd.f32 %v873, %v937
  %939 = vmatmul.f32.gmra.mxu0 %v216
  %v940 = vpop.f32.mrf.mxu0
  %v941 = vadd.f32 %v876, %v940
  %942 = vmatmul.f32.gmra.mxu0 %v234
  %v943 = vpop.f32.mrf.mxu0
  %v944 = vadd.f32 %v879, %v943
  %945 = vmatmul.f32.gmra.mxu0 %v252
  %v946 = vpop.f32.mrf.mxu0
  %v947 = vadd.f32 %v882, %v946
  %948 = vmatmul.f32.gmra.mxu0 %v270
  %v949 = vpop.f32.mrf.mxu0
  %v950 = vadd.f32 %v885, %v949
  %951 = vmatmul.f32.gmra.mxu0 %v288
  %v952 = vpop.f32.mrf.mxu0
  %v953 = vadd.f32 %v888, %v952
  %954 = vdwg.mxu0
  %955 = vmatpush.msra.mxu0 %v397
  %956 = vmatpush.msra.mxu0 %v396
  %957 = vmatpush.msra.mxu0 %v395
  %958 = vmatpush.msra.mxu0 %v394
  %959 = vmatpush.msra.mxu0 %v393
  %960 = vmatpush.msra.mxu0 %v392
  %961 = vmatpush.msra.mxu0 %v391
  %962 = vmatpush.msra.mxu0 %v390
  %963 = vmatpush.msra.mxu0 %v389
  %964 = vmatpush.msra.mxu0 %v388
  %965 = vmatpush.msra.mxu0 %v387
  %966 = vmatpush.msra.mxu0 %v386
  %967 = vmatpush.msra.mxu0 %v385
  %968 = vmatpush.msra.mxu0 %v384
  %969 = vmatpush.msra.mxu0 %v383
  %970 = vmatpush.msra.mxu0 %v382
  %971 = vmatmul.f32.gmra.mxu0 %v19
  %v972 = vpop.f32.mrf.mxu0
  %v973 = vadd.f32 %v908, %v972
  %974 = vmatmul.f32.gmra.mxu0 %v37
  %v975 = vpop.f32.mrf.mxu0
  %v976 = vadd.f32 %v911, %v975
  %977 = vmatmul.f32.gmra.mxu0 %v55
  %v978 = vpop.f32.mrf.mxu0
  %v979 = vadd.f32 %v914, %v978
  %980 = vmatmul.f32.gmra.mxu0 %v73
  %v981 = vpop.f32.mrf.mxu0
  %v982 = vadd.f32 %v917, %v981
  %983 = vmatmul.f32.gmra.mxu0 %v91
  %v984 = vpop.f32.mrf.mxu0
  %v985 = vadd.f32 %v920, %v984
  %986 = vmatmul.f32.gmra.mxu0 %v109
  %v987 = vpop.f32.mrf.mxu0
  %v988 = vadd.f32 %v923, %v987
  %989 = vmatmul.f32.gmra.mxu0 %v127
  %v990 = vpop.f32.mrf.mxu0
  %v991 = vadd.f32 %v926, %v990
  %992 = vmatmul.f32.gmra.mxu0 %v145
  %v993 = vpop.f32.mrf.mxu0
  %v994 = vadd.f32 %v929, %v993
  %995 = vmatmul.f32.gmra.mxu0 %v163
  %v996 = vpop.f32.mrf.mxu0
  %v997 = vadd.f32 %v932, %v996
  %998 = vmatmul.f32.gmra.mxu0 %v181
  %v999 = vpop.f32.mrf.mxu0
  %v1000 = vadd.f32 %v935, %v999
  %1001 = vmatmul.f32.gmra.mxu0 %v199
  %v1002 = vpop.f32.mrf.mxu0
  %v1003 = vadd.f32 %v938, %v1002
  %1004 = vmatmul.f32.gmra.mxu0 %v217
  %v1005 = vpop.f32.mrf.mxu0
  %v1006 = vadd.f32 %v941, %v1005
  %1007 = vmatmul.f32.gmra.mxu0 %v235
  %v1008 = vpop.f32.mrf.mxu0
  %v1009 = vadd.f32 %v944, %v1008
  %1010 = vmatmul.f32.gmra.mxu0 %v253
  %v1011 = vpop.f32.mrf.mxu0
  %v1012 = vadd.f32 %v947, %v1011
  %1013 = vmatmul.f32.gmra.mxu0 %v271
  %v1014 = vpop.f32.mrf.mxu0
  %v1015 = vadd.f32 %v950, %v1014
  %1016 = vmatmul.f32.gmra.mxu0 %v289
  %v1017 = vpop.f32.mrf.mxu0
  %v1018 = vadd.f32 %v953, %v1017
  %1019 = vdwg.mxu0
  %1020 = vmatpush.msra.mxu0 %v413
  %1021 = vmatpush.msra.mxu0 %v412
  %1022 = vmatpush.msra.mxu0 %v411
  %1023 = vmatpush.msra.mxu0 %v410
  %1024 = vmatpush.msra.mxu0 %v409
  %1025 = vmatpush.msra.mxu0 %v408
  %1026 = vmatpush.msra.mxu0 %v407
  %1027 = vmatpush.msra.mxu0 %v406
  %1028 = vmatpush.msra.mxu0 %v405
  %1029 = vmatpush.msra.mxu0 %v404
  %1030 = vmatpush.msra.mxu0 %v403
  %1031 = vmatpush.msra.mxu0 %v402
  %1032 = vmatpush.msra.mxu0 %v401
  %1033 = vmatpush.msra.mxu0 %v400
  %1034 = vmatpush.msra.mxu0 %v399
  %1035 = vmatpush.msra.mxu0 %v398
  %1036 = vmatmul.f32.gmra.mxu0 %v20
  %v1037 = vpop.f32.mrf.mxu0
  %v1038 = vadd.f32 %v973, %v1037
  %1039 = vmatmul.f32.gmra.mxu0 %v38
  %v1040 = vpop.f32.mrf.mxu0
  %v1041 = vadd.f32 %v976, %v1040
  %1042 = vmatmul.f32.gmra.mxu0 %v56
  %v1043 = vpop.f32.mrf.mxu0
  %v1044 = vadd.f32 %v979, %v1043
  %1045 = vmatmul.f32.gmra.mxu0 %v74
  %v1046 = vpop.f32.mrf.mxu0
  %v1047 = vadd.f32 %v982, %v1046
  %1048 = vmatmul.f32.gmra.mxu0 %v92
  %v1049 = vpop.f32.mrf.mxu0
  %v1050 = vadd.f32 %v985, %v1049
  %1051 = vmatmul.f32.gmra.mxu0 %v110
  %v1052 = vpop.f32.mrf.mxu0
  %v1053 = vadd.f32 %v988, %v1052
  %1054 = vmatmul.f32.gmra.mxu0 %v128
  %v1055 = vpop.f32.mrf.mxu0
  %v1056 = vadd.f32 %v991, %v1055
  %1057 = vmatmul.f32.gmra.mxu0 %v146
  %v1058 = vpop.f32.mrf.mxu0
  %v1059 = vadd.f32 %v994, %v1058
  %1060 = vmatmul.f32.gmra.mxu0 %v164
  %v1061 = vpop.f32.mrf.mxu0
  %v1062 = vadd.f32 %v997, %v1061
  %1063 = vmatmul.f32.gmra.mxu0 %v182
  %v1064 = vpop.f32.mrf.mxu0
  %v1065 = vadd.f32 %v1000, %v1064
  %1066 = vmatmul.f32.gmra.mxu0 %v200
  %v1067 = vpop.f32.mrf.mxu0
  %v1068 = vadd.f32 %v1003, %v1067
  %1069 = vmatmul.f32.gmra.mxu0 %v218
  %v1070 = vpop.f32.mrf.mxu0
  %v1071 = vadd.f32 %v1006, %v1070
  %1072 = vmatmul.f32.gmra.mxu0 %v236
  %v1073 = vpop.f32.mrf.mxu0
  %v1074 = vadd.f32 %v1009, %v1073
  %1075 = vmatmul.f32.gmra.mxu0 %v254
  %v1076 = vpop.f32.mrf.mxu0
  %v1077 = vadd.f32 %v1012, %v1076
  %1078 = vmatmul.f32.gmra.mxu0 %v272
  %v1079 = vpop.f32.mrf.mxu0
  %v1080 = vadd.f32 %v1015, %v1079
  %1081 = vmatmul.f32.gmra.mxu0 %v290
  %v1082 = vpop.f32.mrf.mxu0
  %v1083 = vadd.f32 %v1018, %v1082
  %1084 = vdwg.mxu0
  %1085 = vmatpush.msra.mxu0 %v429
  %1086 = vmatpush.msra.mxu0 %v428
  %1087 = vmatpush.msra.mxu0 %v427
  %1088 = vmatpush.msra.mxu0 %v426
  %1089 = vmatpush.msra.mxu0 %v425
  %1090 = vmatpush.msra.mxu0 %v424
  %1091 = vmatpush.msra.mxu0 %v423
  %1092 = vmatpush.msra.mxu0 %v422
  %1093 = vmatpush.msra.mxu0 %v421
  %1094 = vmatpush.msra.mxu0 %v420
  %1095 = vmatpush.msra.mxu0 %v419
  %1096 = vmatpush.msra.mxu0 %v418
  %1097 = vmatpush.msra.mxu0 %v417
  %1098 = vmatpush.msra.mxu0 %v416
  %1099 = vmatpush.msra.mxu0 %v415
  %1100 = vmatpush.msra.mxu0 %v414
  %1101 = vmatmul.f32.gmra.mxu0 %v21
  %v1102 = vpop.f32.mrf.mxu0
  %v1103 = vadd.f32 %v1038, %v1102
  %1104 = vmatmul.f32.gmra.mxu0 %v39
  %v1105 = vpop.f32.mrf.mxu0
  %v1106 = vadd.f32 %v1041, %v1105
  %1107 = vmatmul.f32.gmra.mxu0 %v57
  %v1108 = vpop.f32.mrf.mxu0
  %v1109 = vadd.f32 %v1044, %v1108
  %1110 = vmatmul.f32.gmra.mxu0 %v75
  %v1111 = vpop.f32.mrf.mxu0
  %v1112 = vadd.f32 %v1047, %v1111
  %1113 = vmatmul.f32.gmra.mxu0 %v93
  %v1114 = vpop.f32.mrf.mxu0
  %v1115 = vadd.f32 %v1050, %v1114
  %1116 = vmatmul.f32.gmra.mxu0 %v111
  %v1117 = vpop.f32.mrf.mxu0
  %v1118 = vadd.f32 %v1053, %v1117
  %1119 = vmatmul.f32.gmra.mxu0 %v129
  %v1120 = vpop.f32.mrf.mxu0
  %v1121 = vadd.f32 %v1056, %v1120
  %1122 = vmatmul.f32.gmra.mxu0 %v147
  %v1123 = vpop.f32.mrf.mxu0
  %v1124 = vadd.f32 %v1059, %v1123
  %1125 = vmatmul.f32.gmra.mxu0 %v165
  %v1126 = vpop.f32.mrf.mxu0
  %v1127 = vadd.f32 %v1062, %v1126
  %1128 = vmatmul.f32.gmra.mxu0 %v183
  %v1129 = vpop.f32.mrf.mxu0
  %v1130 = vadd.f32 %v1065, %v1129
  %1131 = vmatmul.f32.gmra.mxu0 %v201
  %v1132 = vpop.f32.mrf.mxu0
  %v1133 = vadd.f32 %v1068, %v1132
  %1134 = vmatmul.f32.gmra.mxu0 %v219
  %v1135 = vpop.f32.mrf.mxu0
  %v1136 = vadd.f32 %v1071, %v1135
  %1137 = vmatmul.f32.gmra.mxu0 %v237
  %v1138 = vpop.f32.mrf.mxu0
  %v1139 = vadd.f32 %v1074, %v1138
  %1140 = vmatmul.f32.gmra.mxu0 %v255
  %v1141 = vpop.f32.mrf.mxu0
  %v1142 = vadd.f32 %v1077, %v1141
  %1143 = vmatmul.f32.gmra.mxu0 %v273
  %v1144 = vpop.f32.mrf.mxu0
  %v1145 = vadd.f32 %v1080, %v1144
  %1146 = vmatmul.f32.gmra.mxu0 %v291
  %v1147 = vpop.f32.mrf.mxu0
  %v1148 = vadd.f32 %v1083, %v1147
  %1149 = vdwg.mxu0
  %1150 = vmatpush.msra.mxu0 %v445
  %1151 = vmatpush.msra.mxu0 %v444
  %1152 = vmatpush.msra.mxu0 %v443
  %1153 = vmatpush.msra.mxu0 %v442
  %1154 = vmatpush.msra.mxu0 %v441
  %1155 = vmatpush.msra.mxu0 %v440
  %1156 = vmatpush.msra.mxu0 %v439
  %1157 = vmatpush.msra.mxu0 %v438
  %1158 = vmatpush.msra.mxu0 %v437
  %1159 = vmatpush.msra.mxu0 %v436
  %1160 = vmatpush.msra.mxu0 %v435
  %1161 = vmatpush.msra.mxu0 %v434
  %1162 = vmatpush.msra.mxu0 %v433
  %1163 = vmatpush.msra.mxu0 %v432
  %1164 = vmatpush.msra.mxu0 %v431
  %1165 = vmatpush.msra.mxu0 %v430
  %1166 = vmatmul.f32.gmra.mxu0 %v22
  %v1167 = vpop.f32.mrf.mxu0
  %v1168 = vadd.f32 %v1103, %v1167
  %1169 = vmatmul.f32.gmra.mxu0 %v40
  %v1170 = vpop.f32.mrf.mxu0
  %v1171 = vadd.f32 %v1106, %v1170
  %1172 = vmatmul.f32.gmra.mxu0 %v58
  %v1173 = vpop.f32.mrf.mxu0
  %v1174 = vadd.f32 %v1109, %v1173
  %1175 = vmatmul.f32.gmra.mxu0 %v76
  %v1176 = vpop.f32.mrf.mxu0
  %v1177 = vadd.f32 %v1112, %v1176
  %1178 = vmatmul.f32.gmra.mxu0 %v94
  %v1179 = vpop.f32.mrf.mxu0
  %v1180 = vadd.f32 %v1115, %v1179
  %1181 = vmatmul.f32.gmra.mxu0 %v112
  %v1182 = vpop.f32.mrf.mxu0
  %v1183 = vadd.f32 %v1118, %v1182
  %1184 = vmatmul.f32.gmra.mxu0 %v130
  %v1185 = vpop.f32.mrf.mxu0
  %v1186 = vadd.f32 %v1121, %v1185
  %1187 = vmatmul.f32.gmra.mxu0 %v148
  %v1188 = vpop.f32.mrf.mxu0
  %v1189 = vadd.f32 %v1124, %v1188
  %1190 = vmatmul.f32.gmra.mxu0 %v166
  %v1191 = vpop.f32.mrf.mxu0
  %v1192 = vadd.f32 %v1127, %v1191
  %1193 = vmatmul.f32.gmra.mxu0 %v184
  %v1194 = vpop.f32.mrf.mxu0
  %v1195 = vadd.f32 %v1130, %v1194
  %1196 = vmatmul.f32.gmra.mxu0 %v202
  %v1197 = vpop.f32.mrf.mxu0
  %v1198 = vadd.f32 %v1133, %v1197
  %1199 = vmatmul.f32.gmra.mxu0 %v220
  %v1200 = vpop.f32.mrf.mxu0
  %v1201 = vadd.f32 %v1136, %v1200
  %1202 = vmatmul.f32.gmra.mxu0 %v238
  %v1203 = vpop.f32.mrf.mxu0
  %v1204 = vadd.f32 %v1139, %v1203
  %1205 = vmatmul.f32.gmra.mxu0 %v256
  %v1206 = vpop.f32.mrf.mxu0
  %v1207 = vadd.f32 %v1142, %v1206
  %1208 = vmatmul.f32.gmra.mxu0 %v274
  %v1209 = vpop.f32.mrf.mxu0
  %v1210 = vadd.f32 %v1145, %v1209
  %1211 = vmatmul.f32.gmra.mxu0 %v292
  %v1212 = vpop.f32.mrf.mxu0
  %v1213 = vadd.f32 %v1148, %v1212
  %1214 = vdwg.mxu0
  %1215 = vmatpush.msra.mxu0 %v461
  %1216 = vmatpush.msra.mxu0 %v460
  %1217 = vmatpush.msra.mxu0 %v459
  %1218 = vmatpush.msra.mxu0 %v458
  %1219 = vmatpush.msra.mxu0 %v457
  %1220 = vmatpush.msra.mxu0 %v456
  %1221 = vmatpush.msra.mxu0 %v455
  %1222 = vmatpush.msra.mxu0 %v454
  %1223 = vmatpush.msra.mxu0 %v453
  %1224 = vmatpush.msra.mxu0 %v452
  %1225 = vmatpush.msra.mxu0 %v451
  %1226 = vmatpush.msra.mxu0 %v450
  %1227 = vmatpush.msra.mxu0 %v449
  %1228 = vmatpush.msra.mxu0 %v448
  %1229 = vmatpush.msra.mxu0 %v447
  %1230 = vmatpush.msra.mxu0 %v446
  %1231 = vmatmul.f32.gmra.mxu0 %v23
  %v1232 = vpop.f32.mrf.mxu0
  %v1233 = vadd.f32 %v1168, %v1232
  %1234 = vmatmul.f32.gmra.mxu0 %v41
  %v1235 = vpop.f32.mrf.mxu0
  %v1236 = vadd.f32 %v1171, %v1235
  %1237 = vmatmul.f32.gmra.mxu0 %v59
  %v1238 = vpop.f32.mrf.mxu0
  %v1239 = vadd.f32 %v1174, %v1238
  %1240 = vmatmul.f32.gmra.mxu0 %v77
  %v1241 = vpop.f32.mrf.mxu0
  %v1242 = vadd.f32 %v1177, %v1241
  %1243 = vmatmul.f32.gmra.mxu0 %v95
  %v1244 = vpop.f32.mrf.mxu0
  %v1245 = vadd.f32 %v1180, %v1244
  %1246 = vmatmul.f32.gmra.mxu0 %v113
  %v1247 = vpop.f32.mrf.mxu0
  %v1248 = vadd.f32 %v1183, %v1247
  %1249 = vmatmul.f32.gmra.mxu0 %v131
  %v1250 = vpop.f32.mrf.mxu0
  %v1251 = vadd.f32 %v1186, %v1250
  %1252 = vmatmul.f32.gmra.mxu0 %v149
  %v1253 = vpop.f32.mrf.mxu0
  %v1254 = vadd.f32 %v1189, %v1253
  %1255 = vmatmul.f32.gmra.mxu0 %v167
  %v1256 = vpop.f32.mrf.mxu0
  %v1257 = vadd.f32 %v1192, %v1256
  %1258 = vmatmul.f32.gmra.mxu0 %v185
  %v1259 = vpop.f32.mrf.mxu0
  %v1260 = vadd.f32 %v1195, %v1259
  %1261 = vmatmul.f32.gmra.mxu0 %v203
  %v1262 = vpop.f32.mrf.mxu0
  %v1263 = vadd.f32 %v1198, %v1262
  %1264 = vmatmul.f32.gmra.mxu0 %v221
  %v1265 = vpop.f32.mrf.mxu0
  %v1266 = vadd.f32 %v1201, %v1265
  %1267 = vmatmul.f32.gmra.mxu0 %v239
  %v1268 = vpop.f32.mrf.mxu0
  %v1269 = vadd.f32 %v1204, %v1268
  %1270 = vmatmul.f32.gmra.mxu0 %v257
  %v1271 = vpop.f32.mrf.mxu0
  %v1272 = vadd.f32 %v1207, %v1271
  %1273 = vmatmul.f32.gmra.mxu0 %v275
  %v1274 = vpop.f32.mrf.mxu0
  %v1275 = vadd.f32 %v1210, %v1274
  %1276 = vmatmul.f32.gmra.mxu0 %v293
  %v1277 = vpop.f32.mrf.mxu0
  %v1278 = vadd.f32 %v1213, %v1277
  %1279 = vdwg.mxu0
  %1280 = vmatpush.msra.mxu0 %v477
  %1281 = vmatpush.msra.mxu0 %v476
  %1282 = vmatpush.msra.mxu0 %v475
  %1283 = vmatpush.msra.mxu0 %v474
  %1284 = vmatpush.msra.mxu0 %v473
  %1285 = vmatpush.msra.mxu0 %v472
  %1286 = vmatpush.msra.mxu0 %v471
  %1287 = vmatpush.msra.mxu0 %v470
  %1288 = vmatpush.msra.mxu0 %v469
  %1289 = vmatpush.msra.mxu0 %v468
  %1290 = vmatpush.msra.mxu0 %v467
  %1291 = vmatpush.msra.mxu0 %v466
  %1292 = vmatpush.msra.mxu0 %v465
  %1293 = vmatpush.msra.mxu0 %v464
  %1294 = vmatpush.msra.mxu0 %v463
  %1295 = vmatpush.msra.mxu0 %v462
  %1296 = vmatmul.f32.gmra.mxu0 %v24
  %v1297 = vpop.f32.mrf.mxu0
  %v1298 = vadd.f32 %v1233, %v1297
  %1299 = vmatmul.f32.gmra.mxu0 %v42
  %v1300 = vpop.f32.mrf.mxu0
  %v1301 = vadd.f32 %v1236, %v1300
  %1302 = vmatmul.f32.gmra.mxu0 %v60
  %v1303 = vpop.f32.mrf.mxu0
  %v1304 = vadd.f32 %v1239, %v1303
  %1305 = vmatmul.f32.gmra.mxu0 %v78
  %v1306 = vpop.f32.mrf.mxu0
  %v1307 = vadd.f32 %v1242, %v1306
  %1308 = vmatmul.f32.gmra.mxu0 %v96
  %v1309 = vpop.f32.mrf.mxu0
  %v1310 = vadd.f32 %v1245, %v1309
  %1311 = vmatmul.f32.gmra.mxu0 %v114
  %v1312 = vpop.f32.mrf.mxu0
  %v1313 = vadd.f32 %v1248, %v1312
  %1314 = vmatmul.f32.gmra.mxu0 %v132
  %v1315 = vpop.f32.mrf.mxu0
  %v1316 = vadd.f32 %v1251, %v1315
  %1317 = vmatmul.f32.gmra.mxu0 %v150
  %v1318 = vpop.f32.mrf.mxu0
  %v1319 = vadd.f32 %v1254, %v1318
  %1320 = vmatmul.f32.gmra.mxu0 %v168
  %v1321 = vpop.f32.mrf.mxu0
  %v1322 = vadd.f32 %v1257, %v1321
  %1323 = vmatmul.f32.gmra.mxu0 %v186
  %v1324 = vpop.f32.mrf.mxu0
  %v1325 = vadd.f32 %v1260, %v1324
  %1326 = vmatmul.f32.gmra.mxu0 %v204
  %v1327 = vpop.f32.mrf.mxu0
  %v1328 = vadd.f32 %v1263, %v1327
  %1329 = vmatmul.f32.gmra.mxu0 %v222
  %v1330 = vpop.f32.mrf.mxu0
  %v1331 = vadd.f32 %v1266, %v1330
  %1332 = vmatmul.f32.gmra.mxu0 %v240
  %v1333 = vpop.f32.mrf.mxu0
  %v1334 = vadd.f32 %v1269, %v1333
  %1335 = vmatmul.f32.gmra.mxu0 %v258
  %v1336 = vpop.f32.mrf.mxu0
  %v1337 = vadd.f32 %v1272, %v1336
  %1338 = vmatmul.f32.gmra.mxu0 %v276
  %v1339 = vpop.f32.mrf.mxu0
  %v1340 = vadd.f32 %v1275, %v1339
  %1341 = vmatmul.f32.gmra.mxu0 %v294
  %v1342 = vpop.f32.mrf.mxu0
  %v1343 = vadd.f32 %v1278, %v1342
  %1344 = vdwg.mxu0
  %1345 = vmatpush.msra.mxu0 %v493
  %1346 = vmatpush.msra.mxu0 %v492
  %1347 = vmatpush.msra.mxu0 %v491
  %1348 = vmatpush.msra.mxu0 %v490
  %1349 = vmatpush.msra.mxu0 %v489
  %1350 = vmatpush.msra.mxu0 %v488
  %1351 = vmatpush.msra.mxu0 %v487
  %1352 = vmatpush.msra.mxu0 %v486
  %1353 = vmatpush.msra.mxu0 %v485
  %1354 = vmatpush.msra.mxu0 %v484
  %1355 = vmatpush.msra.mxu0 %v483
  %1356 = vmatpush.msra.mxu0 %v482
  %1357 = vmatpush.msra.mxu0 %v481
  %1358 = vmatpush.msra.mxu0 %v480
  %1359 = vmatpush.msra.mxu0 %v479
  %1360 = vmatpush.msra.mxu0 %v478
  %1361 = vmatmul.f32.gmra.mxu0 %v25
  %v1362 = vpop.f32.mrf.mxu0
  %v1363 = vadd.f32 %v1298, %v1362
  %1364 = vmatmul.f32.gmra.mxu0 %v43
  %v1365 = vpop.f32.mrf.mxu0
  %v1366 = vadd.f32 %v1301, %v1365
  %1367 = vmatmul.f32.gmra.mxu0 %v61
  %v1368 = vpop.f32.mrf.mxu0
  %v1369 = vadd.f32 %v1304, %v1368
  %1370 = vmatmul.f32.gmra.mxu0 %v79
  %v1371 = vpop.f32.mrf.mxu0
  %v1372 = vadd.f32 %v1307, %v1371
  %1373 = vmatmul.f32.gmra.mxu0 %v97
  %v1374 = vpop.f32.mrf.mxu0
  %v1375 = vadd.f32 %v1310, %v1374
  %1376 = vmatmul.f32.gmra.mxu0 %v115
  %v1377 = vpop.f32.mrf.mxu0
  %v1378 = vadd.f32 %v1313, %v1377
  %1379 = vmatmul.f32.gmra.mxu0 %v133
  %v1380 = vpop.f32.mrf.mxu0
  %v1381 = vadd.f32 %v1316, %v1380
  %1382 = vmatmul.f32.gmra.mxu0 %v151
  %v1383 = vpop.f32.mrf.mxu0
  %v1384 = vadd.f32 %v1319, %v1383
  %1385 = vmatmul.f32.gmra.mxu0 %v169
  %v1386 = vpop.f32.mrf.mxu0
  %v1387 = vadd.f32 %v1322, %v1386
  %1388 = vmatmul.f32.gmra.mxu0 %v187
  %v1389 = vpop.f32.mrf.mxu0
  %v1390 = vadd.f32 %v1325, %v1389
  %1391 = vmatmul.f32.gmra.mxu0 %v205
  %v1392 = vpop.f32.mrf.mxu0
  %v1393 = vadd.f32 %v1328, %v1392
  %1394 = vmatmul.f32.gmra.mxu0 %v223
  %v1395 = vpop.f32.mrf.mxu0
  %v1396 = vadd.f32 %v1331, %v1395
  %1397 = vmatmul.f32.gmra.mxu0 %v241
  %v1398 = vpop.f32.mrf.mxu0
  %v1399 = vadd.f32 %v1334, %v1398
  %1400 = vmatmul.f32.gmra.mxu0 %v259
  %v1401 = vpop.f32.mrf.mxu0
  %v1402 = vadd.f32 %v1337, %v1401
  %1403 = vmatmul.f32.gmra.mxu0 %v277
  %v1404 = vpop.f32.mrf.mxu0
  %v1405 = vadd.f32 %v1340, %v1404
  %1406 = vmatmul.f32.gmra.mxu0 %v295
  %v1407 = vpop.f32.mrf.mxu0
  %v1408 = vadd.f32 %v1343, %v1407
  %1409 = vdwg.mxu0
  %1410 = vmatpush.msra.mxu0 %v509
  %1411 = vmatpush.msra.mxu0 %v508
  %1412 = vmatpush.msra.mxu0 %v507
  %1413 = vmatpush.msra.mxu0 %v506
  %1414 = vmatpush.msra.mxu0 %v505
  %1415 = vmatpush.msra.mxu0 %v504
  %1416 = vmatpush.msra.mxu0 %v503
  %1417 = vmatpush.msra.mxu0 %v502
  %1418 = vmatpush.msra.mxu0 %v501
  %1419 = vmatpush.msra.mxu0 %v500
  %1420 = vmatpush.msra.mxu0 %v499
  %1421 = vmatpush.msra.mxu0 %v498
  %1422 = vmatpush.msra.mxu0 %v497
  %1423 = vmatpush.msra.mxu0 %v496
  %1424 = vmatpush.msra.mxu0 %v495
  %1425 = vmatpush.msra.mxu0 %v494
  %1426 = vmatmul.f32.gmra.mxu0 %v26
  %v1427 = vpop.f32.mrf.mxu0
  %v1428 = vadd.f32 %v1363, %v1427
  %1429 = vmatmul.f32.gmra.mxu0 %v44
  %v1430 = vpop.f32.mrf.mxu0
  %v1431 = vadd.f32 %v1366, %v1430
  %1432 = vmatmul.f32.gmra.mxu0 %v62
  %v1433 = vpop.f32.mrf.mxu0
  %v1434 = vadd.f32 %v1369, %v1433
  %1435 = vmatmul.f32.gmra.mxu0 %v80
  %v1436 = vpop.f32.mrf.mxu0
  %v1437 = vadd.f32 %v1372, %v1436
  %1438 = vmatmul.f32.gmra.mxu0 %v98
  %v1439 = vpop.f32.mrf.mxu0
  %v1440 = vadd.f32 %v1375, %v1439
  %1441 = vmatmul.f32.gmra.mxu0 %v116
  %v1442 = vpop.f32.mrf.mxu0
  %v1443 = vadd.f32 %v1378, %v1442
  %1444 = vmatmul.f32.gmra.mxu0 %v134
  %v1445 = vpop.f32.mrf.mxu0
  %v1446 = vadd.f32 %v1381, %v1445
  %1447 = vmatmul.f32.gmra.mxu0 %v152
  %v1448 = vpop.f32.mrf.mxu0
  %v1449 = vadd.f32 %v1384, %v1448
  %1450 = vmatmul.f32.gmra.mxu0 %v170
  %v1451 = vpop.f32.mrf.mxu0
  %v1452 = vadd.f32 %v1387, %v1451
  %1453 = vmatmul.f32.gmra.mxu0 %v188
  %v1454 = vpop.f32.mrf.mxu0
  %v1455 = vadd.f32 %v1390, %v1454
  %1456 = vmatmul.f32.gmra.mxu0 %v206
  %v1457 = vpop.f32.mrf.mxu0
  %v1458 = vadd.f32 %v1393, %v1457
  %1459 = vmatmul.f32.gmra.mxu0 %v224
  %v1460 = vpop.f32.mrf.mxu0
  %v1461 = vadd.f32 %v1396, %v1460
  %1462 = vmatmul.f32.gmra.mxu0 %v242
  %v1463 = vpop.f32.mrf.mxu0
  %v1464 = vadd.f32 %v1399, %v1463
  %1465 = vmatmul.f32.gmra.mxu0 %v260
  %v1466 = vpop.f32.mrf.mxu0
  %v1467 = vadd.f32 %v1402, %v1466
  %1468 = vmatmul.f32.gmra.mxu0 %v278
  %v1469 = vpop.f32.mrf.mxu0
  %v1470 = vadd.f32 %v1405, %v1469
  %1471 = vmatmul.f32.gmra.mxu0 %v296
  %v1472 = vpop.f32.mrf.mxu0
  %v1473 = vadd.f32 %v1408, %v1472
  %1474 = vdwg.mxu0
  %1475 = vmatpush.msra.mxu0 %v525
  %1476 = vmatpush.msra.mxu0 %v524
  %1477 = vmatpush.msra.mxu0 %v523
  %1478 = vmatpush.msra.mxu0 %v522
  %1479 = vmatpush.msra.mxu0 %v521
  %1480 = vmatpush.msra.mxu0 %v520
  %1481 = vmatpush.msra.mxu0 %v519
  %1482 = vmatpush.msra.mxu0 %v518
  %1483 = vmatpush.msra.mxu0 %v517
  %1484 = vmatpush.msra.mxu0 %v516
  %1485 = vmatpush.msra.mxu0 %v515
  %1486 = vmatpush.msra.mxu0 %v514
  %1487 = vmatpush.msra.mxu0 %v513
  %1488 = vmatpush.msra.mxu0 %v512
  %1489 = vmatpush.msra.mxu0 %v511
  %1490 = vmatpush.msra.mxu0 %v510
  %1491 = vmatmul.f32.gmra.mxu0 %v27
  %v1492 = vpop.f32.mrf.mxu0
  %v1493 = vadd.f32 %v1428, %v1492
  %1494 = vmatmul.f32.gmra.mxu0 %v45
  %v1495 = vpop.f32.mrf.mxu0
  %v1496 = vadd.f32 %v1431, %v1495
  %1497 = vmatmul.f32.gmra.mxu0 %v63
  %v1498 = vpop.f32.mrf.mxu0
  %v1499 = vadd.f32 %v1434, %v1498
  %1500 = vmatmul.f32.gmra.mxu0 %v81
  %v1501 = vpop.f32.mrf.mxu0
  %v1502 = vadd.f32 %v1437, %v1501
  %1503 = vmatmul.f32.gmra.mxu0 %v99
  %v1504 = vpop.f32.mrf.mxu0
  %v1505 = vadd.f32 %v1440, %v1504
  %1506 = vmatmul.f32.gmra.mxu0 %v117
  %v1507 = vpop.f32.mrf.mxu0
  %v1508 = vadd.f32 %v1443, %v1507
  %1509 = vmatmul.f32.gmra.mxu0 %v135
  %v1510 = vpop.f32.mrf.mxu0
  %v1511 = vadd.f32 %v1446, %v1510
  %1512 = vmatmul.f32.gmra.mxu0 %v153
  %v1513 = vpop.f32.mrf.mxu0
  %v1514 = vadd.f32 %v1449, %v1513
  %1515 = vmatmul.f32.gmra.mxu0 %v171
  %v1516 = vpop.f32.mrf.mxu0
  %v1517 = vadd.f32 %v1452, %v1516
  %1518 = vmatmul.f32.gmra.mxu0 %v189
  %v1519 = vpop.f32.mrf.mxu0
  %v1520 = vadd.f32 %v1455, %v1519
  %1521 = vmatmul.f32.gmra.mxu0 %v207
  %v1522 = vpop.f32.mrf.mxu0
  %v1523 = vadd.f32 %v1458, %v1522
  %1524 = vmatmul.f32.gmra.mxu0 %v225
  %v1525 = vpop.f32.mrf.mxu0
  %v1526 = vadd.f32 %v1461, %v1525
  %1527 = vmatmul.f32.gmra.mxu0 %v243
  %v1528 = vpop.f32.mrf.mxu0
  %v1529 = vadd.f32 %v1464, %v1528
  %1530 = vmatmul.f32.gmra.mxu0 %v261
  %v1531 = vpop.f32.mrf.mxu0
  %v1532 = vadd.f32 %v1467, %v1531
  %1533 = vmatmul.f32.gmra.mxu0 %v279
  %v1534 = vpop.f32.mrf.mxu0
  %v1535 = vadd.f32 %v1470, %v1534
  %1536 = vmatmul.f32.gmra.mxu0 %v297
  %v1537 = vpop.f32.mrf.mxu0
  %v1538 = vadd.f32 %v1473, %v1537
  %1539 = vdwg.mxu0
  %1540 = vmatpush.msra.mxu0 %v541
  %1541 = vmatpush.msra.mxu0 %v540
  %1542 = vmatpush.msra.mxu0 %v539
  %1543 = vmatpush.msra.mxu0 %v538
  %1544 = vmatpush.msra.mxu0 %v537
  %1545 = vmatpush.msra.mxu0 %v536
  %1546 = vmatpush.msra.mxu0 %v535
  %1547 = vmatpush.msra.mxu0 %v534
  %1548 = vmatpush.msra.mxu0 %v533
  %1549 = vmatpush.msra.mxu0 %v532
  %1550 = vmatpush.msra.mxu0 %v531
  %1551 = vmatpush.msra.mxu0 %v530
  %1552 = vmatpush.msra.mxu0 %v529
  %1553 = vmatpush.msra.mxu0 %v528
  %1554 = vmatpush.msra.mxu0 %v527
  %1555 = vmatpush.msra.mxu0 %v526
  %1556 = vmatmul.f32.gmra.mxu0 %v28
  %v1557 = vpop.f32.mrf.mxu0
  %v1558 = vadd.f32 %v1493, %v1557
  %1559 = vmatmul.f32.gmra.mxu0 %v46
  %v1560 = vpop.f32.mrf.mxu0
  %v1561 = vadd.f32 %v1496, %v1560
  %1562 = vmatmul.f32.gmra.mxu0 %v64
  %v1563 = vpop.f32.mrf.mxu0
  %v1564 = vadd.f32 %v1499, %v1563
  %1565 = vmatmul.f32.gmra.mxu0 %v82
  %v1566 = vpop.f32.mrf.mxu0
  %v1567 = vadd.f32 %v1502, %v1566
  %1568 = vmatmul.f32.gmra.mxu0 %v100
  %v1569 = vpop.f32.mrf.mxu0
  %v1570 = vadd.f32 %v1505, %v1569
  %1571 = vmatmul.f32.gmra.mxu0 %v118
  %v1572 = vpop.f32.mrf.mxu0
  %v1573 = vadd.f32 %v1508, %v1572
  %1574 = vmatmul.f32.gmra.mxu0 %v136
  %v1575 = vpop.f32.mrf.mxu0
  %v1576 = vadd.f32 %v1511, %v1575
  %1577 = vmatmul.f32.gmra.mxu0 %v154
  %v1578 = vpop.f32.mrf.mxu0
  %v1579 = vadd.f32 %v1514, %v1578
  %1580 = vmatmul.f32.gmra.mxu0 %v172
  %v1581 = vpop.f32.mrf.mxu0
  %v1582 = vadd.f32 %v1517, %v1581
  %1583 = vmatmul.f32.gmra.mxu0 %v190
  %v1584 = vpop.f32.mrf.mxu0
  %v1585 = vadd.f32 %v1520, %v1584
  %1586 = vmatmul.f32.gmra.mxu0 %v208
  %v1587 = vpop.f32.mrf.mxu0
  %v1588 = vadd.f32 %v1523, %v1587
  %1589 = vmatmul.f32.gmra.mxu0 %v226
  %v1590 = vpop.f32.mrf.mxu0
  %v1591 = vadd.f32 %v1526, %v1590
  %1592 = vmatmul.f32.gmra.mxu0 %v244
  %v1593 = vpop.f32.mrf.mxu0
  %v1594 = vadd.f32 %v1529, %v1593
  %1595 = vmatmul.f32.gmra.mxu0 %v262
  %v1596 = vpop.f32.mrf.mxu0
  %v1597 = vadd.f32 %v1532, %v1596
  %1598 = vmatmul.f32.gmra.mxu0 %v280
  %v1599 = vpop.f32.mrf.mxu0
  %v1600 = vadd.f32 %v1535, %v1599
  %1601 = vmatmul.f32.gmra.mxu0 %v298
  %v1602 = vpop.f32.mrf.mxu0
  %v1603 = vadd.f32 %v1538, %v1602
  %1604 = vdwg.mxu0
  %1605 = vmatpush.msra.mxu0 %v557
  %1606 = vmatpush.msra.mxu0 %v556
  %1607 = vmatpush.msra.mxu0 %v555
  %1608 = vmatpush.msra.mxu0 %v554
  %1609 = vmatpush.msra.mxu0 %v553
  %1610 = vmatpush.msra.mxu0 %v552
  %1611 = vmatpush.msra.mxu0 %v551
  %1612 = vmatpush.msra.mxu0 %v550
  %1613 = vmatpush.msra.mxu0 %v549
  %1614 = vmatpush.msra.mxu0 %v548
  %1615 = vmatpush.msra.mxu0 %v547
  %1616 = vmatpush.msra.mxu0 %v546
  %1617 = vmatpush.msra.mxu0 %v545
  %1618 = vmatpush.msra.mxu0 %v544
  %1619 = vmatpush.msra.mxu0 %v543
  %1620 = vmatpush.msra.mxu0 %v542
  %1621 = vmatmul.f32.gmra.mxu0 %v29
  %v1622 = vpop.f32.mrf.mxu0
  %v1623 = vadd.f32 %v1558, %v1622
  %1624 = vmatmul.f32.gmra.mxu0 %v47
  %v1625 = vpop.f32.mrf.mxu0
  %v1626 = vadd.f32 %v1561, %v1625
  %1627 = vmatmul.f32.gmra.mxu0 %v65
  %v1628 = vpop.f32.mrf.mxu0
  %v1629 = vadd.f32 %v1564, %v1628
  %1630 = vmatmul.f32.gmra.mxu0 %v83
  %v1631 = vpop.f32.mrf.mxu0
  %v1632 = vadd.f32 %v1567, %v1631
  %1633 = vmatmul.f32.gmra.mxu0 %v101
  %v1634 = vpop.f32.mrf.mxu0
  %v1635 = vadd.f32 %v1570, %v1634
  %1636 = vmatmul.f32.gmra.mxu0 %v119
  %v1637 = vpop.f32.mrf.mxu0
  %v1638 = vadd.f32 %v1573, %v1637
  %1639 = vmatmul.f32.gmra.mxu0 %v137
  %v1640 = vpop.f32.mrf.mxu0
  %v1641 = vadd.f32 %v1576, %v1640
  %1642 = vmatmul.f32.gmra.mxu0 %v155
  %v1643 = vpop.f32.mrf.mxu0
  %v1644 = vadd.f32 %v1579, %v1643
  %1645 = vmatmul.f32.gmra.mxu0 %v173
  %v1646 = vpop.f32.mrf.mxu0
  %v1647 = vadd.f32 %v1582, %v1646
  %1648 = vmatmul.f32.gmra.mxu0 %v191
  %v1649 = vpop.f32.mrf.mxu0
  %v1650 = vadd.f32 %v1585, %v1649
  %1651 = vmatmul.f32.gmra.mxu0 %v209
  %v1652 = vpop.f32.mrf.mxu0
  %v1653 = vadd.f32 %v1588, %v1652
  %1654 = vmatmul.f32.gmra.mxu0 %v227
  %v1655 = vpop.f32.mrf.mxu0
  %v1656 = vadd.f32 %v1591, %v1655
  %1657 = vmatmul.f32.gmra.mxu0 %v245
  %v1658 = vpop.f32.mrf.mxu0
  %v1659 = vadd.f32 %v1594, %v1658
  %1660 = vmatmul.f32.gmra.mxu0 %v263
  %v1661 = vpop.f32.mrf.mxu0
  %v1662 = vadd.f32 %v1597, %v1661
  %1663 = vmatmul.f32.gmra.mxu0 %v281
  %v1664 = vpop.f32.mrf.mxu0
  %v1665 = vadd.f32 %v1600, %v1664
  %1666 = vmatmul.f32.gmra.mxu0 %v299
  %v1667 = vpop.f32.mrf.mxu0
  %v1668 = vadd.f32 %v1603, %v1667
  %1669 = vdwg.mxu0
  %1670 = vmatpush.msra.mxu0 %v573
  %1671 = vmatpush.msra.mxu0 %v572
  %1672 = vmatpush.msra.mxu0 %v571
  %1673 = vmatpush.msra.mxu0 %v570
  %1674 = vmatpush.msra.mxu0 %v569
  %1675 = vmatpush.msra.mxu0 %v568
  %1676 = vmatpush.msra.mxu0 %v567
  %1677 = vmatpush.msra.mxu0 %v566
  %1678 = vmatpush.msra.mxu0 %v565
  %1679 = vmatpush.msra.mxu0 %v564
  %1680 = vmatpush.msra.mxu0 %v563
  %1681 = vmatpush.msra.mxu0 %v562
  %1682 = vmatpush.msra.mxu0 %v561
  %1683 = vmatpush.msra.mxu0 %v560
  %1684 = vmatpush.msra.mxu0 %v559
  %1685 = vmatpush.msra.mxu0 %v558
  %1686 = vmatmul.f32.gmra.mxu0 %v30
  %v1687 = vpop.f32.mrf.mxu0
  %v1688 = vadd.f32 %v1623, %v1687
  %1689 = vmatmul.f32.gmra.mxu0 %v48
  %v1690 = vpop.f32.mrf.mxu0
  %v1691 = vadd.f32 %v1626, %v1690
  %1692 = vmatmul.f32.gmra.mxu0 %v66
  %v1693 = vpop.f32.mrf.mxu0
  %v1694 = vadd.f32 %v1629, %v1693
  %1695 = vmatmul.f32.gmra.mxu0 %v84
  %v1696 = vpop.f32.mrf.mxu0
  %v1697 = vadd.f32 %v1632, %v1696
  %1698 = vmatmul.f32.gmra.mxu0 %v102
  %v1699 = vpop.f32.mrf.mxu0
  %v1700 = vadd.f32 %v1635, %v1699
  %1701 = vmatmul.f32.gmra.mxu0 %v120
  %v1702 = vpop.f32.mrf.mxu0
  %v1703 = vadd.f32 %v1638, %v1702
  %1704 = vmatmul.f32.gmra.mxu0 %v138
  %v1705 = vpop.f32.mrf.mxu0
  %v1706 = vadd.f32 %v1641, %v1705
  %1707 = vmatmul.f32.gmra.mxu0 %v156
  %v1708 = vpop.f32.mrf.mxu0
  %v1709 = vadd.f32 %v1644, %v1708
  %1710 = vmatmul.f32.gmra.mxu0 %v174
  %v1711 = vpop.f32.mrf.mxu0
  %v1712 = vadd.f32 %v1647, %v1711
  %1713 = vmatmul.f32.gmra.mxu0 %v192
  %v1714 = vpop.f32.mrf.mxu0
  %v1715 = vadd.f32 %v1650, %v1714
  %1716 = vmatmul.f32.gmra.mxu0 %v210
  %v1717 = vpop.f32.mrf.mxu0
  %v1718 = vadd.f32 %v1653, %v1717
  %1719 = vmatmul.f32.gmra.mxu0 %v228
  %v1720 = vpop.f32.mrf.mxu0
  %v1721 = vadd.f32 %v1656, %v1720
  %1722 = vmatmul.f32.gmra.mxu0 %v246
  %v1723 = vpop.f32.mrf.mxu0
  %v1724 = vadd.f32 %v1659, %v1723
  %1725 = vmatmul.f32.gmra.mxu0 %v264
  %v1726 = vpop.f32.mrf.mxu0
  %v1727 = vadd.f32 %v1662, %v1726
  %1728 = vmatmul.f32.gmra.mxu0 %v282
  %v1729 = vpop.f32.mrf.mxu0
  %v1730 = vadd.f32 %v1665, %v1729
  %1731 = vmatmul.f32.gmra.mxu0 %v300
  %v1732 = vpop.f32.mrf.mxu0
  %v1733 = vadd.f32 %v1668, %v1732
  %1734 = vdwg.mxu0
  %1735 = vmatpush.msra.mxu0 0.0
  %1736 = vmatpush.msra.mxu0 0.0
  %1737 = vmatpush.msra.mxu0 0.0
  %1738 = vmatpush.msra.mxu0 0.0
  %1739 = vmatpush.msra.mxu0 0.0
  %1740 = vmatpush.msra.mxu0 0.0
  %1741 = vmatpush.msra.mxu0 0.0
  %1742 = vmatpush.msra.mxu0 0.0
  %1743 = vmatpush.msra.mxu0 0.0
  %1744 = vmatpush.msra.mxu0 0.0
  %1745 = vmatpush.msra.mxu0 0.0
  %1746 = vmatpush.msra.mxu0 0.0
  %1747 = vmatpush.msra.mxu0 0.0
  %1748 = vmatpush.msra.mxu0 %v576
  %1749 = vmatpush.msra.mxu0 %v575
  %1750 = vmatpush.msra.mxu0 %v574
  %1751 = vmatmul.f32.gmra.mxu0 %v583
  %v1752 = vpop.f32.mrf.mxu0
  %v1753 = vadd.f32 %v1688, %v1752
  %1754 = vmatmul.f32.gmra.mxu0 %v586
  %v1755 = vpop.f32.mrf.mxu0
  %v1756 = vadd.f32 %v1691, %v1755
  %1757 = vmatmul.f32.gmra.mxu0 %v589
  %v1758 = vpop.f32.mrf.mxu0
  %v1759 = vadd.f32 %v1694, %v1758
  %1760 = vmatmul.f32.gmra.mxu0 %v592
  %v1761 = vpop.f32.mrf.mxu0
  %v1762 = vadd.f32 %v1697, %v1761
  %1763 = vmatmul.f32.gmra.mxu0 %v595
  %v1764 = vpop.f32.mrf.mxu0
  %v1765 = vadd.f32 %v1700, %v1764
  %1766 = vmatmul.f32.gmra.mxu0 %v598
  %v1767 = vpop.f32.mrf.mxu0
  %v1768 = vadd.f32 %v1703, %v1767
  %1769 = vmatmul.f32.gmra.mxu0 %v601
  %v1770 = vpop.f32.mrf.mxu0
  %v1771 = vadd.f32 %v1706, %v1770
  %1772 = vmatmul.f32.gmra.mxu0 %v604
  %v1773 = vpop.f32.mrf.mxu0
  %v1774 = vadd.f32 %v1709, %v1773
  %1775 = vmatmul.f32.gmra.mxu0 %v607
  %v1776 = vpop.f32.mrf.mxu0
  %v1777 = vadd.f32 %v1712, %v1776
  %1778 = vmatmul.f32.gmra.mxu0 %v610
  %v1779 = vpop.f32.mrf.mxu0
  %v1780 = vadd.f32 %v1715, %v1779
  %1781 = vmatmul.f32.gmra.mxu0 %v613
  %v1782 = vpop.f32.mrf.mxu0
  %v1783 = vadd.f32 %v1718, %v1782
  %1784 = vmatmul.f32.gmra.mxu0 %v616
  %v1785 = vpop.f32.mrf.mxu0
  %v1786 = vadd.f32 %v1721, %v1785
  %1787 = vmatmul.f32.gmra.mxu0 %v619
  %v1788 = vpop.f32.mrf.mxu0
  %v1789 = vadd.f32 %v1724, %v1788
  %1790 = vmatmul.f32.gmra.mxu0 %v622
  %v1791 = vpop.f32.mrf.mxu0
  %v1792 = vadd.f32 %v1727, %v1791
  %1793 = vmatmul.f32.gmra.mxu0 %v625
  %v1794 = vpop.f32.mrf.mxu0
  %v1795 = vadd.f32 %v1730, %v1794
  %1796 = vmatmul.f32.gmra.mxu0 %v628
  %v1797 = vpop.f32.mrf.mxu0
  %v1798 = vadd.f32 %v1733, %v1797
  %1799 = vdwg.mxu0
  %v1800 = vmax.f32 %v1753, 0.0
  %v1801 = vmax.f32 %v1756, 0.0
  %v1802 = vmax.f32 %v1759, 0.0
  %v1803 = vmax.f32 %v1762, 0.0
  %v1804 = vmax.f32 %v1765, 0.0
  %v1805 = vmax.f32 %v1768, 0.0
  %v1806 = vmax.f32 %v1771, 0.0
  %v1807 = vmax.f32 %v1774, 0.0
  %v1808 = vmax.f32 %v1777, 0.0
  %v1809 = vmax.f32 %v1780, 0.0
  %v1810 = vmax.f32 %v1783, 0.0
  %v1811 = vmax.f32 %v1786, 0.0
  %v1812 = vmax.f32 %v1789, 0.0
  %v1813 = vmax.f32 %v1792, 0.0
  %v1814 = vmax.f32 %v1795, 0.0
  %v1815 = vmax.f32 %v1798, 0.0
  %vm1816 = vcmask 162816
  %1817 = vst.msk [vmem:[%s3] sm:$0xff] %vm1816, %v1800
  %1818 = vst.msk [vmem:[%s3 + $0x8] sm:$0xff] %vm1816, %v1801
  %1819 = vst.msk [vmem:[%s3 + $0x10] sm:$0xff] %vm1816, %v1802
  %1820 = vst.msk [vmem:[%s3 + $0x18] sm:$0xff] %vm1816, %v1803
  %1821 = vst.msk [vmem:[%s3 + $0x20] sm:$0xff] %vm1816, %v1804
  %1822 = vst.msk [vmem:[%s3 + $0x28] sm:$0xff] %vm1816, %v1805
  %1823 = vst.msk [vmem:[%s3 + $0x30] sm:$0xff] %vm1816, %v1806
  %1824 = vst.msk [vmem:[%s3 + $0x38] sm:$0xff] %vm1816, %v1807
  %1825 = vst.msk [vmem:[%s3 + $0x40] sm:$0xff] %vm1816, %v1808
  %1826 = vst.msk [vmem:[%s3 + $0x48] sm:$0xff] %vm1816, %v1809
  %1827 = vst.msk [vmem:[%s3 + $0x50] sm:$0xff] %vm1816, %v1810
  %1828 = vst.msk [vmem:[%s3 + $0x58] sm:$0xff] %vm1816, %v1811
  %1829 = vst.msk [vmem:[%s3 + $0x60] sm:$0xff] %vm1816, %v1812
  %1830 = vst.msk [vmem:[%s3 + $0x68] sm:$0xff] %vm1816, %v1813
  %1831 = vst.msk [vmem:[%s3 + $0x70] sm:$0xff] %vm1816, %v1814
  %1832 = vst.msk [vmem:[%s3 + $0x78] sm:$0xff] %vm1816, %v1815
  // Predicated region
  $region14: #{net_forward.19} parent=0 // pred_check
    _
  $region15: #{net_forward.19} parent=0 // pred_check_branch
    %1834 = sbr.rel (0) target = $region17
  $region16: #{net_forward.19} parent=0 // pred_region
    _
  $region17: #{net_forward.19} parent=0 // pred_fallthru
    _
  // Predicated region
  $region18: #{net_forward.19} parent=0 // pred_check
    _
  $region19: #{net_forward.19} parent=0 // pred_check_branch
    %1836 = sbr.rel (0) target = $region21
  $region20: #{net_forward.19} parent=0 // pred_region
    _
  $region21: #{net_forward.19} parent=0 // pred_fallthru
    _

// kernel: net_forward.21
$region0: #{net_forward.21}
  #allocation0 [shape = 'u32[]', space=smem, size = 0x4, offset = 0x4, fixed_abs, tag = 'smem constant byte address 0x4 - core index']
  #allocation1 [shape = 'u32[72,128]{1,0:T(1,128)}', space=vmem, size = 0x9000, scoped, tag = 'internal scratch']
  %s0 = inlined_call_operand.vmem [shape: f32[32,180], index: 0, kind: input, shape index: {}]
  %s1 = inlined_call_operand.vmem [shape: f32[180,16], index: 1, kind: input, shape index: {}]
  %s2 = inlined_call_operand.vmem [shape: f32[1,16], index: 2, kind: input, shape index: {}]
  %s3 = inlined_call_operand.vmem [shape: f32[32,16], index: 3, kind: output, shape index: {}]
  %s4 = sld [smem:[#allocation0]]
  $region22: #{net_forward.21} parent=0
    _
  %s6 = ssub.s32 1, %s4
  %s7 = scalar_select 0, %s6, %s4
  // Predicated region
  $region2: #{net_forward.21} parent=0 // pred_check
    _
  $region3: #{net_forward.21} parent=0 // pred_check_branch
    %9 = sbr.rel (0) target = $region5
  $region4: #{net_forward.21} parent=0 // pred_region
    _
  $region5: #{net_forward.21} parent=0 // pred_fallthru
    _
  // Predicated region
  $region6: #{net_forward.21} parent=0 // pred_check
    _
  $region7: #{net_forward.21} parent=0 // pred_check_branch
    %11 = sbr.rel (0) target = $region9
  $region8: #{net_forward.21} parent=0 // pred_region
    _
  $region9: #{net_forward.21} parent=0 // pred_fallthru
    _
  // Predicated region
  $region10: #{net_forward.21} parent=0 // pred_check
    _
  $region11: #{net_forward.21} parent=0 // pred_check_branch
    %13 = sbr.rel (0) target = $region13
  $region12: #{net_forward.21} parent=0 // pred_region
    _
  $region13: #{net_forward.21} parent=0 // pred_fallthru
    _
  %v14 = vld [vmem:[%s0] sm:$0xff]
  %v15 = vld [vmem:[%s0 + $0x8] sm:$0xff]
  %v16 = vld [vmem:[%s0 + $0x10] sm:$0xff]
  %v17 = vld [vmem:[%s0 + $0x18] sm:$0xff]
  %v18 = vld [vmem:[%s0 + $0x20] sm:$0xff]
  %v19 = vld [vmem:[%s0 + $0x28] sm:$0xff]
  %v20 = vld [vmem:[%s0 + $0x30] sm:$0xff]
  %v21 = vld [vmem:[%s0 + $0x38] sm:$0xff]
  %v22 = vld [vmem:[%s1] sm:$0xff]
  %v23 = vld [vmem:[%s1 + $0x8] sm:$0xff]
  %v24 = vld [vmem:[%s1 + $0x10] sm:$0xff]
  %v25 = vld [vmem:[%s1 + $0x18] sm:$0xff]
  %v26 = vld [vmem:[%s1 + $0x20] sm:$0xff]
  %v27 = vld [vmem:[%s1 + $0x28] sm:$0xff]
  %v28 = vld [vmem:[%s1 + $0x30] sm:$0xff]
  %v29 = vld [vmem:[%s1 + $0x38] sm:$0xff]
  %v30 = vld [vmem:[%s1 + $0x40] sm:$0xff]
  %v31 = vld [vmem:[%s1 + $0x48] sm:$0xff]
  %v32 = vld [vmem:[%s1 + $0x50] sm:$0xff]
  %v33 = vld [vmem:[%s1 + $0x58] sm:$0xff]
  %v34 = vld [vmem:[%s1 + $0x60] sm:$0xff]
  %v35 = vld [vmem:[%s1 + $0x68] sm:$0xff]
  %v36 = vld [vmem:[%s1 + $0x70] sm:$0xff]
  %v37 = vld [vmem:[%s1 + $0x78] sm:$0xff]
  %v38 = vld [vmem:[%s1 + $0x80] sm:$0xff]
  %v39 = vld [vmem:[%s1 + $0x88] sm:$0xff]
  %v40 = vld [vmem:[%s1 + $0x90] sm:$0xff]
  %v41 = vld [vmem:[%s1 + $0x98] sm:$0xff]
  %v42 = vld [vmem:[%s1 + $0xa0] sm:$0xff]
  %v43 = vld [vmem:[%s1 + $0xa8] sm:$0xff]
  %v44 = vld [vmem:[%s1 + $0xb0] sm:$0xf]
  %v45 = vld [vmem:[%s2] sm:$0x1]
  %v47 = vperm.slane %v45, 0
  %vm49 = vcmask 424960
  %v51 = vsel %vm49, %v15, 0
  %v54 = vsel %vm49, %v17, 0
  %v57 = vsel %vm49, %v19, 0
  %v60 = vsel %vm49, %v21, 0
  %vm62 = vcmask 1043456
  %v64 = vsel %vm62, %v44, 0
  %66 = vmatpush.msra.mxu0 %v37
  %67 = vmatpush.msra.mxu0 %v36
  %68 = vmatpush.msra.mxu0 %v35
  %69 = vmatpush.msra.mxu0 %v34
  %70 = vmatpush.msra.mxu0 %v33
  %71 = vmatpush.msra.mxu0 %v32
  %72 = vmatpush.msra.mxu0 %v31
  %73 = vmatpush.msra.mxu0 %v30
  %74 = vmatpush.msra.mxu0 %v29
  %75 = vmatpush.msra.mxu0 %v28
  %76 = vmatpush.msra.mxu0 %v27
  %77 = vmatpush.msra.mxu0 %v26
  %78 = vmatpush.msra.mxu0 %v25
  %79 = vmatpush.msra.mxu0 %v24
  %80 = vmatpush.msra.mxu0 %v23
  %81 = vmatpush.msra.mxu0 %v22
  %82 = vmatmul.f32.gmra.mxu0 %v14
  %v83 = vpop.f32.mrf.mxu0
  %v84 = vadd.f32 %v47, %v83
  %85 = vmatmul.f32.gmra.mxu0 %v16
  %v86 = vpop.f32.mrf.mxu0
  %v87 = vadd.f32 %v47, %v86
  %88 = vmatmul.f32.gmra.mxu0 %v18
  %v89 = vpop.f32.mrf.mxu0
  %v90 = vadd.f32 %v47, %v89
  %91 = vmatmul.f32.gmra.mxu0 %v20
  %v92 = vpop.f32.mrf.mxu0
  %v93 = vadd.f32 %v47, %v92
  %94 = vdwg.mxu0
  %95 = vmatpush.msra.mxu0 0.0
  %96 = vmatpush.msra.mxu0 0.0
  %97 = vmatpush.msra.mxu0 0.0
  %98 = vmatpush.msra.mxu0 0.0
  %99 = vmatpush.msra.mxu0 0.0
  %100 = vmatpush.msra.mxu0 0.0
  %101 = vmatpush.msra.mxu0 0.0
  %102 = vmatpush.msra.mxu0 0.0
  %103 = vmatpush.msra.mxu0 0.0
  %104 = vmatpush.msra.mxu0 %v64
  %105 = vmatpush.msra.mxu0 %v43
  %106 = vmatpush.msra.mxu0 %v42
  %107 = vmatpush.msra.mxu0 %v41
  %108 = vmatpush.msra.mxu0 %v40
  %109 = vmatpush.msra.mxu0 %v39
  %110 = vmatpush.msra.mxu0 %v38
  %111 = vmatmul.f32.gmra.mxu0 %v51
  %v112 = vpop.f32.mrf.mxu0
  %v113 = vadd.f32 %v84, %v112
  %114 = vmatmul.f32.gmra.mxu0 %v54
  %v115 = vpop.f32.mrf.mxu0
  %v116 = vadd.f32 %v87, %v115
  %117 = vmatmul.f32.gmra.mxu0 %v57
  %v118 = vpop.f32.mrf.mxu0
  %v119 = vadd.f32 %v90, %v118
  %120 = vmatmul.f32.gmra.mxu0 %v60
  %v121 = vpop.f32.mrf.mxu0
  %v122 = vadd.f32 %v93, %v121
  %123 = vdwg.mxu0
  %vm124 = vcmask 130048
  %125 = vst.msk [vmem:[%s3] sm:$0xff] %vm124, %v113
  %126 = vst.msk [vmem:[%s3 + $0x8] sm:$0xff] %vm124, %v116
  %127 = vst.msk [vmem:[%s3 + $0x10] sm:$0xff] %vm124, %v119
  %128 = vst.msk [vmem:[%s3 + $0x18] sm:$0xff] %vm124, %v122
  // Predicated region
  $region14: #{net_forward.21} parent=0 // pred_check
    _
  $region15: #{net_forward.21} parent=0 // pred_check_branch
    %130 = sbr.rel (0) target = $region17
  $region16: #{net_forward.21} parent=0 // pred_region
    _
  $region17: #{net_forward.21} parent=0 // pred_fallthru
    _
  // Predicated region
  $region18: #{net_forward.21} parent=0 // pred_check
    _
  $region19: #{net_forward.21} parent=0 // pred_check_branch
    %132 = sbr.rel (0) target = $region21
  $region20: #{net_forward.21} parent=0 // pred_region
    _
  $region21: #{net_forward.21} parent=0 // pred_fallthru
    _

// kernel: net_forward.22
$region0: #{net_forward.22}
  #allocation0 [shape = 'u32[]', space=smem, size = 0x4, offset = 0x4, fixed_abs, tag = 'smem constant byte address 0x4 - core index']
  #allocation1 [shape = 'u32[72,128]{1,0:T(1,128)}', space=vmem, size = 0x9000, scoped, tag = 'internal scratch']
  %s0 = inlined_call_operand.vmem [shape: f32[32,400], index: 0, kind: input, shape index: {}]
  %s1 = inlined_call_operand.vmem [shape: f32[400,24], index: 1, kind: input, shape index: {}]
  %s2 = inlined_call_operand.vmem [shape: f32[1,24], index: 2, kind: input, shape index: {}]
  %s3 = inlined_call_operand.vmem [shape: f32[32,24], index: 3, kind: output, shape index: {}]
  %s4 = sld [smem:[#allocation0]]
  $region22: #{net_forward.22} parent=0
    _
  %s6 = ssub.s32 1, %s4
  %s7 = scalar_select 0, %s6, %s4
  // Predicated region
  $region2: #{net_forward.22} parent=0 // pred_check
    _
  $region3: #{net_forward.22} parent=0 // pred_check_branch
    %9 = sbr.rel (0) target = $region5
  $region4: #{net_forward.22} parent=0 // pred_region
    _
  $region5: #{net_forward.22} parent=0 // pred_fallthru
    _
  // Predicated region
  $region6: #{net_forward.22} parent=0 // pred_check
    _
  $region7: #{net_forward.22} parent=0 // pred_check_branch
    %11 = sbr.rel (0) target = $region9
  $region8: #{net_forward.22} parent=0 // pred_region
    _
  $region9: #{net_forward.22} parent=0 // pred_fallthru
    _
  // Predicated region
  $region10: #{net_forward.22} parent=0 // pred_check
    _
  $region11: #{net_forward.22} parent=0 // pred_check_branch
    %13 = sbr.rel (0) target = $region13
  $region12: #{net_forward.22} parent=0 // pred_region
    _
  $region13: #{net_forward.22} parent=0 // pred_fallthru
    _
  %v14 = vld [vmem:[%s0] sm:$0xff]
  %v15 = vld [vmem:[%s0 + $0x8] sm:$0xff]
  %v16 = vld [vmem:[%s0 + $0x10] sm:$0xff]
  %v17 = vld [vmem:[%s0 + $0x18] sm:$0xff]
  %v18 = vld [vmem:[%s0 + $0x20] sm:$0xff]
  %v19 = vld [vmem:[%s0 + $0x28] sm:$0xff]
  %v20 = vld [vmem:[%s0 + $0x30] sm:$0xff]
  %v21 = vld [vmem:[%s0 + $0x38] sm:$0xff]
  %v22 = vld [vmem:[%s0 + $0x40] sm:$0xff]
  %v23 = vld [vmem:[%s0 + $0x48] sm:$0xff]
  %v24 = vld [vmem:[%s0 + $0x50] sm:$0xff]
  %v25 = vld [vmem:[%s0 + $0x58] sm:$0xff]
  %v26 = vld [vmem:[%s0 + $0x60] sm:$0xff]
  %v27 = vld [vmem:[%s0 + $0x68] sm:$0xff]
  %v28 = vld [vmem:[%s0 + $0x70] sm:$0xff]
  %v29 = vld [vmem:[%s0 + $0x78] sm:$0xff]
  %v30 = vld [vmem:[%s1] sm:$0xff]
  %v31 = vld [vmem:[%s1 + $0x8] sm:$0xff]
  %v32 = vld [vmem:[%s1 + $0x10] sm:$0xff]
  %v33 = vld [vmem:[%s1 + $0x18] sm:$0xff]
  %v34 = vld [vmem:[%s1 + $0x20] sm:$0xff]
  %v35 = vld [vmem:[%s1 + $0x28] sm:$0xff]
  %v36 = vld [vmem:[%s1 + $0x30] sm:$0xff]
  %v37 = vld [vmem:[%s1 + $0x38] sm:$0xff]
  %v38 = vld [vmem:[%s1 + $0x40] sm:$0xff]
  %v39 = vld [vmem:[%s1 + $0x48] sm:$0xff]
  %v40 = vld [vmem:[%s1 + $0x50] sm:$0xff]
  %v41 = vld [vmem:[%s1 + $0x58] sm:$0xff]
  %v42 = vld [vmem:[%s1 + $0x60] sm:$0xff]
  %v43 = vld [vmem:[%s1 + $0x68] sm:$0xff]
  %v44 = vld [vmem:[%s1 + $0x70] sm:$0xff]
  %v45 = vld [vmem:[%s1 + $0x78] sm:$0xff]
  %v46 = vld [vmem:[%s1 + $0x80] sm:$0xff]
  %v47 = vld [vmem:[%s1 + $0x88] sm:$0xff]
  %v48 = vld [vmem:[%s1 + $0x90] sm:$0xff]
  %v49 = vld [vmem:[%s1 + $0x98] sm:$0xff]
  %v50 = vld [vmem:[%s1 + $0xa0] sm:$0xff]
  %v51 = vld [vmem:[%s1 + $0xa8] sm:$0xff]
  %v52 = vld [vmem:[%s1 + $0xb0] sm:$0xff]
  %v53 = vld [vmem:[%s1 + $0xb8] sm:$0xff]
  %v54 = vld [vmem:[%s1 + $0xc0] sm:$0xff]
  %v55 = vld [vmem:[%s1 + $0xc8] sm:$0xff]
  %v56 = vld [vmem:[%s1 + $0xd0] sm:$0xff]
  %v57 = vld [vmem:[%s1 + $0xd8] sm:$0xff]
  %v58 = vld [vmem:[%s1 + $0xe0] sm:$0xff]
  %v59 = vld [vmem:[%s1 + $0xe8] sm:$0xff]
  %v60 = vld [vmem:[%s1 + $0xf0] sm:$0xff]
  %v61 = vld [vmem:[%s1 + $0xf8] sm:$0xff]
  %v62 = vld [vmem:[%s1 + $0x100] sm:$0xff]
  %v63 = vld [vmem:[%s1 + $0x108] sm:$0xff]
  %v64 = vld [vmem:[%s1 + $0x110] sm:$0xff]
  %v65 = vld [vmem:[%s1 + $0x118] sm:$0xff]
  %v66 = vld [vmem:[%s1 + $0x120] sm:$0xff]
  %v67 = vld [vmem:[%s1 + $0x128] sm:$0xff]
  %v68 = vld [vmem:[%s1 + $0x130] sm:$0xff]
  %v69 = vld [vmem:[%s1 + $0x138] sm:$0xff]
  %v70 = vld [vmem:[%s1 + $0x140] sm:$0xff]
  %v71 = vld [vmem:[%s1 + $0x148] sm:$0xff]
  %v72 = vld [vmem:[%s1 + $0x150] sm:$0xff]
  %v73 = vld [vmem:[%s1 + $0x158] sm:$0xff]
  %v74 = vld [vmem:[%s1 + $0x160] sm:$0xff]
  %v75 = vld [vmem:[%s1 + $0x168] sm:$0xff]
  %v76 = vld [vmem:[%s1 + $0x170] sm:$0xff]
  %v77 = vld [vmem:[%s1 + $0x178] sm:$0xff]
  %v78 = vld [vmem:[%s1 + $0x180] sm:$0xff]
  %v79 = vld [vmem:[%s1 + $0x188] sm:$0xff]
  %v80 = vld [vmem:[%s2] sm:$0x1]
  %v82 = vperm.slane %v80, 0
  %vm84 = vcmask 130048
  %v86 = vsel %vm84, %v17, 0
  %v89 = vsel %vm84, %v21, 0
  %v92 = vsel %vm84, %v25, 0
  %v95 = vsel %vm84, %v29, 0
  %97 = vmatpush.msra.mxu0 %v45
  %98 = vmatpush.msra.mxu0 %v44
  %99 = vmatpush.msra.mxu0 %v43
  %100 = vmatpush.msra.mxu0 %v42
  %101 = vmatpush.msra.mxu0 %v41
  %102 = vmatpush.msra.mxu0 %v40
  %103 = vmatpush.msra.mxu0 %v39
  %104 = vmatpush.msra.mxu0 %v38
  %105 = vmatpush.msra.mxu0 %v37
  %106 = vmatpush.msra.mxu0 %v36
  %107 = vmatpush.msra.mxu0 %v35
  %108 = vmatpush.msra.mxu0 %v34
  %109 = vmatpush.msra.mxu0 %v33
  %110 = vmatpush.msra.mxu0 %v32
  %111 = vmatpush.msra.mxu0 %v31
  %112 = vmatpush.msra.mxu0 %v30
  %113 = vmatmul.f32.gmra.mxu0 %v14
  %v114 = vpop.f32.mrf.mxu0
  %v115 = vadd.f32 %v82, %v114
  %116 = vmatmul.f32.gmra.mxu0 %v18
  %v117 = vpop.f32.mrf.mxu0
  %v118 = vadd.f32 %v82, %v117
  %119 = vmatmul.f32.gmra.mxu0 %v22
  %v120 = vpop.f32.mrf.mxu0
  %v121 = vadd.f32 %v82, %v120
  %122 = vmatmul.f32.gmra.mxu0 %v26
  %v123 = vpop.f32.mrf.mxu0
  %v124 = vadd.f32 %v82, %v123
  %125 = vdwg.mxu0
  %126 = vmatpush.msra.mxu0 %v61
  %127 = vmatpush.msra.mxu0 %v60
  %128 = vmatpush.msra.mxu0 %v59
  %129 = vmatpush.msra.mxu0 %v58
  %130 = vmatpush.msra.mxu0 %v57
  %131 = vmatpush.msra.mxu0 %v56
  %132 = vmatpush.msra.mxu0 %v55
  %133 = vmatpush.msra.mxu0 %v54
  %134 = vmatpush.msra.mxu0 %v53
  %135 = vmatpush.msra.mxu0 %v52
  %136 = vmatpush.msra.mxu0 %v51
  %137 = vmatpush.msra.mxu0 %v50
  %138 = vmatpush.msra.mxu0 %v49
  %139 = vmatpush.msra.mxu0 %v48
  %140 = vmatpush.msra.mxu0 %v47
  %141 = vmatpush.msra.mxu0 %v46
  %142 = vmatmul.f32.gmra.mxu0 %v15
  %v143 = vpop.f32.mrf.mxu0
  %v144 = vadd.f32 %v115, %v143
  %145 = vmatmul.f32.gmra.mxu0 %v19
  %v146 = vpop.f32.mrf.mxu0
  %v147 = vadd.f32 %v118, %v146
  %148 = vmatmul.f32.gmra.mxu0 %v23
  %v149 = vpop.f32.mrf.mxu0
  %v150 = vadd.f32 %v121, %v149
  %151 = vmatmul.f32.gmra.mxu0 %v27
  %v152 = vpop.f32.mrf.mxu0
  %v153 = vadd.f32 %v124, %v152
  %154 = vdwg.mxu0
  %155 = vmatpush.msra.mxu0 %v77
  %156 = vmatpush.msra.mxu0 %v76
  %157 = vmatpush.msra.mxu0 %v75
  %158 = vmatpush.msra.mxu0 %v74
  %159 = vmatpush.msra.mxu0 %v73
  %160 = vmatpush.msra.mxu0 %v72
  %161 = vmatpush.msra.mxu0 %v71
  %162 = vmatpush.msra.mxu0 %v70
  %163 = vmatpush.msra.mxu0 %v69
  %164 = vmatpush.msra.mxu0 %v68
  %165 = vmatpush.msra.mxu0 %v67
  %166 = vmatpush.msra.mxu0 %v66
  %167 = vmatpush.msra.mxu0 %v65
  %168 = vmatpush.msra.mxu0 %v64
  %169 = vmatpush.msra.mxu0 %v63
  %170 = vmatpush.msra.mxu0 %v62
  %171 = vmatmul.f32.gmra.mxu0 %v16
  %v172 = vpop.f32.mrf.mxu0
  %v173 = vadd.f32 %v144, %v172
  %174 = vmatmul.f32.gmra.mxu0 %v20
  %v175 = vpop.f32.mrf.mxu0
  %v176 = vadd.f32 %v147, %v175
  %177 = vmatmul.f32.gmra.mxu0 %v24
  %v178 = vpop.f32.mrf.mxu0
  %v179 = vadd.f32 %v150, %v178
  %180 = vmatmul.f32.gmra.mxu0 %v28
  %v181 = vpop.f32.mrf.mxu0
  %v182 = vadd.f32 %v153, %v181
  %183 = vdwg.mxu0
  %184 = vmatpush.msra.mxu0 0.0
  %185 = vmatpush.msra.mxu0 0.0
  %186 = vmatpush.msra.mxu0 0.0
  %187 = vmatpush.msra.mxu0 0.0
  %188 = vmatpush.msra.mxu0 0.0
  %189 = vmatpush.msra.mxu0 0.0
  %190 = vmatpush.msra.mxu0 0.0
  %191 = vmatpush.msra.mxu0 0.0
  %192 = vmatpush.msra.mxu0 0.0
  %193 = vmatpush.msra.mxu0 0.0
  %194 = vmatpush.msra.mxu0 0.0
  %195 = vmatpush.msra.mxu0 0.0
  %196 = vmatpush.msra.mxu0 0.0
  %197 = vmatpush.msra.mxu0 0.0
  %198 = vmatpush.msra.mxu0 %v79
  %199 = vmatpush.msra.mxu0 %v78
  %200 = vmatmul.f32.gmra.mxu0 %v86
  %v201 = vpop.f32.mrf.mxu0
  %v202 = vadd.f32 %v173, %v201
  %203 = vmatmul.f32.gmra.mxu0 %v89
  %v204 = vpop.f32.mrf.mxu0
  %v205 = vadd.f32 %v176, %v204
  %206 = vmatmul.f32.gmra.mxu0 %v92
  %v207 = vpop.f32.mrf.mxu0
  %v208 = vadd.f32 %v179, %v207
  %209 = vmatmul.f32.gmra.mxu0 %v95
  %v210 = vpop.f32.mrf.mxu0
  %v211 = vadd.f32 %v182, %v210
  %212 = vdwg.mxu0
  %vm213 = vcmask 195584
  %214 = vst.msk [vmem:[%s3] sm:$0xff] %vm213, %v202
  %215 = vst.msk [vmem:[%s3 + $0x8] sm:$0xff] %vm213, %v205
  %216 = vst.msk [vmem:[%s3 + $0x10] sm:$0xff] %vm213, %v208
  %217 = vst.msk [vmem:[%s3 + $0x18] sm:$0xff] %vm213, %v211
  // Predicated region
  $region14: #{net_forward.22} parent=0 // pred_check
    _
  $region15: #{net_forward.22} parent=0 // pred_check_branch
    %219 = sbr.rel (0) target = $region17
  $region16: #{net_forward.22} parent=0 // pred_region
    _
  $region17: #{net_forward.22} parent=0 // pred_fallthru
    _
  // Predicated region
  $region18: #{net_forward.22} parent=0 // pred_check
    _
  $region19: #{net_forward.22} parent=0 // pred_check_branch
    %221 = sbr.rel (0) target = $region21
  $region20: #{net_forward.22} parent=0 // pred_region
    _
  $region21: #{net_forward.22} parent=0 // pred_fallthru
    _

// kernel: net_forward.20
$region0: #{net_forward.20}
  #allocation0 [shape = 'u32[]', space=smem, size = 0x4, offset = 0x4, fixed_abs, tag = 'smem constant byte address 0x4 - core index']
  #allocation1 [shape = 'u32[72,128]{1,0:T(1,128)}', space=vmem, size = 0x9000, scoped, tag = 'internal scratch']
  %s0 = inlined_call_operand.vmem [shape: f32[32,20], index: 0, kind: input, shape index: {}]
  %s1 = inlined_call_operand.vmem [shape: f32[20,56], index: 1, kind: input, shape index: {}]
  %s2 = inlined_call_operand.vmem [shape: f32[1,56], index: 2, kind: input, shape index: {}]
  %s3 = inlined_call_operand.vmem [shape: f32[32,56], index: 3, kind: output, shape index: {}]
  %s4 = sld [smem:[#allocation0]]
  $region22: #{net_forward.20} parent=0
    _
  %s6 = ssub.s32 1, %s4
  %s7 = scalar_select 0, %s6, %s4
  // Predicated region
  $region2: #{net_forward.20} parent=0 // pred_check
    _
  $region3: #{net_forward.20} parent=0 // pred_check_branch
    %9 = sbr.rel (0) target = $region5
  $region4: #{net_forward.20} parent=0 // pred_region
    _
  $region5: #{net_forward.20} parent=0 // pred_fallthru
    _
  // Predicated region
  $region6: #{net_forward.20} parent=0 // pred_check
    _
  $region7: #{net_forward.20} parent=0 // pred_check_branch
    %11 = sbr.rel (0) target = $region9
  $region8: #{net_forward.20} parent=0 // pred_region
    _
  $region9: #{net_forward.20} parent=0 // pred_fallthru
    _
  // Predicated region
  $region10: #{net_forward.20} parent=0 // pred_check
    _
  $region11: #{net_forward.20} parent=0 // pred_check_branch
    %13 = sbr.rel (0) target = $region13
  $region12: #{net_forward.20} parent=0 // pred_region
    _
  $region13: #{net_forward.20} parent=0 // pred_fallthru
    _
  %v14 = vld [vmem:[%s0] sm:$0xff]
  %v15 = vld [vmem:[%s0 + $0x8] sm:$0xff]
  %v16 = vld [vmem:[%s0 + $0x10] sm:$0xff]
  %v17 = vld [vmem:[%s0 + $0x18] sm:$0xff]
  %v18 = vld [vmem:[%s1] sm:$0xff]
  %v19 = vld [vmem:[%s1 + $0x8] sm:$0xff]
  %v20 = vld [vmem:[%s1 + $0x10] sm:$0xf]
  %v21 = vld [vmem:[%s2] sm:$0x1]
  %v23 = vperm.slane %v21, 0
  %vm25 = vcmask 162816
  %v27 = vsel %vm25, %v14, 0
  %v30 = vsel %vm25, %v15, 0
  %v33 = vsel %vm25, %v16, 0
  %v36 = vsel %vm25, %v17, 0
  %vm38 = vcmask 1043456
  %v40 = vsel %vm38, %v20, 0
  %42 = vmatpush.msra.mxu0 0.0
  %43 = vmatpush.msra.mxu0 0.0
  %44 = vmatpush.msra.mxu0 0.0
  %45 = vmatpush.msra.mxu0 0.0
  %46 = vmatpush.msra.mxu0 0.0
  %47 = vmatpush.msra.mxu0 0.0
  %48 = vmatpush.msra.mxu0 0.0
  %49 = vmatpush.msra.mxu0 0.0
  %50 = vmatpush.msra.mxu0 0.0
  %51 = vmatpush.msra.mxu0 0.0
  %52 = vmatpush.msra.mxu0 0.0
  %53 = vmatpush.msra.mxu0 0.0
  %54 = vmatpush.msra.mxu0 0.0
  %55 = vmatpush.msra.mxu0 %v40
  %56 = vmatpush.msra.mxu0 %v19
  %57 = vmatpush.msra.mxu0 %v18
  %58 = vmatmul.f32.gmra.mxu0 %v27
  %v59 = vpop.f32.mrf.mxu0
  %v60 = vadd.f32 %v23, %v59
  %61 = vmatmul.f32.gmra.mxu0 %v30
  %v62 = vpop.f32.mrf.mxu0
  %v63 = vadd.f32 %v23, %v62
  %64 = vmatmul.f32.gmra.mxu0 %v33
  %v65 = vpop.f32.mrf.mxu0
  %v66 = vadd.f32 %v23, %v65
  %67 = vmatmul.f32.gmra.mxu0 %v36
  %v68 = vpop.f32.mrf.mxu0
  %v69 = vadd.f32 %v23, %v68
  %70 = vdwg.mxu0
  %vm71 = vcmask 457728
  %72 = vst.msk [vmem:[%s3] sm:$0xff] %vm71, %v60
  %73 = vst.msk [vmem:[%s3 + $0x8] sm:$0xff] %vm71, %v63
  %74 = vst.msk [vmem:[%s3 + $0x10] sm:$0xff] %vm71, %v66
  %75 = vst.msk [vmem:[%s3 + $0x18] sm:$0xff] %vm71, %v69
  // Predicated region
  $region14: #{net_forward.20} parent=0 // pred_check
    _
  $region15: #{net_forward.20} parent=0 // pred_check_branch
    %77 = sbr.rel (0) target = $region17
  $region16: #{net_forward.20} parent=0 // pred_region
    _
  $region17: #{net_forward.20} parent=0 // pred_fallthru
    _
  // Predicated region
  $region18: #{net_forward.20} parent=0 // pred_check
    _
  $region19: #{net_forward.20} parent=0 // pred_check_branch
    %79 = sbr.rel (0) target = $region21
  $region20: #{net_forward.20} parent=0 // pred_region
    _
  $region21: #{net_forward.20} parent=0 // pred_fallthru
    _

// kernel: net_forward.23
$region0: #{net_forward.23}
  #allocation0 [shape = 'u32[]', space=smem, size = 0x4, offset = 0x4, fixed_abs, tag = 'smem constant byte address 0x4 - core index']
  #allocation1 [shape = 'u32[72,128]{1,0:T(1,128)}', space=vmem, size = 0x9000, scoped, tag = 'internal scratch']
  %s0 = inlined_call_operand.vmem [shape: f32[32,144], index: 0, kind: input, shape index: {}]
  %s1 = inlined_call_operand.vmem [shape: f32[144,24], index: 1, kind: input, shape index: {}]
  %s2 = inlined_call_operand.vmem [shape: f32[1,24], index: 2, kind: input, shape index: {}]
  %s3 = inlined_call_operand.vmem [shape: f32[32,24], index: 3, kind: output, shape index: {}]
  %s4 = sld [smem:[#allocation0]]
  $region22: #{net_forward.23} parent=0
    _
  %s6 = ssub.s32 1, %s4
  %s7 = scalar_select 0, %s6, %s4
  // Predicated region
  $region2: #{net_forward.23} parent=0 // pred_check
    _
  $region3: #{net_forward.23} parent=0 // pred_check_branch
    %9 = sbr.rel (0) target = $region5
  $region4: #{net_forward.23} parent=0 // pred_region
    _
  $region5: #{net_forward.23} parent=0 // pred_fallthru
    _
  // Predicated region
  $region6: #{net_forward.23} parent=0 // pred_check
    _
  $region7: #{net_forward.23} parent=0 // pred_check_branch
    %11 = sbr.rel (0) target = $region9
  $region8: #{net_forward.23} parent=0 // pred_region
    _
  $region9: #{net_forward.23} parent=0 // pred_fallthru
    _
  // Predicated region
  $region10: #{net_forward.23} parent=0 // pred_check
    _
  $region11: #{net_forward.23} parent=0 // pred_check_branch
    %13 = sbr.rel (0) target = $region13
  $region12: #{net_forward.23} parent=0 // pred_region
    _
  $region13: #{net_forward.23} parent=0 // pred_fallthru
    _
  %v14 = vld [vmem:[%s0] sm:$0xff]
  %v15 = vld [vmem:[%s0 + $0x8] sm:$0xff]
  %v16 = vld [vmem:[%s0 + $0x10] sm:$0xff]
  %v17 = vld [vmem:[%s0 + $0x18] sm:$0xff]
  %v18 = vld [vmem:[%s0 + $0x20] sm:$0xff]
  %v19 = vld [vmem:[%s0 + $0x28] sm:$0xff]
  %v20 = vld [vmem:[%s0 + $0x30] sm:$0xff]
  %v21 = vld [vmem:[%s0 + $0x38] sm:$0xff]
  %v22 = vld [vmem:[%s1] sm:$0xff]
  %v23 = vld [vmem:[%s1 + $0x8] sm:$0xff]
  %v24 = vld [vmem:[%s1 + $0x10] sm:$0xff]
  %v25 = vld [vmem:[%s1 + $0x18] sm:$0xff]
  %v26 = vld [vmem:[%s1 + $0x20] sm:$0xff]
  %v27 = vld [vmem:[%s1 + $0x28] sm:$0xff]
  %v28 = vld [vmem:[%s1 + $0x30] sm:$0xff]
  %v29 = vld [vmem:[%s1 + $0x38] sm:$0xff]
  %v30 = vld [vmem:[%s1 + $0x40] sm:$0xff]
  %v31 = vld [vmem:[%s1 + $0x48] sm:$0xff]
  %v32 = vld [vmem:[%s1 + $0x50] sm:$0xff]
  %v33 = vld [vmem:[%s1 + $0x58] sm:$0xff]
  %v34 = vld [vmem:[%s1 + $0x60] sm:$0xff]
  %v35 = vld [vmem:[%s1 + $0x68] sm:$0xff]
  %v36 = vld [vmem:[%s1 + $0x70] sm:$0xff]
  %v37 = vld [vmem:[%s1 + $0x78] sm:$0xff]
  %v38 = vld [vmem:[%s1 + $0x80] sm:$0xff]
  %v39 = vld [vmem:[%s1 + $0x88] sm:$0xff]
  %v40 = vld [vmem:[%s2] sm:$0x1]
  %v42 = vperm.slane %v40, 0
  %vm44 = vcmask 130048
  %v46 = vsel %vm44, %v15, 0
  %v49 = vsel %vm44, %v17, 0
  %v52 = vsel %vm44, %v19, 0
  %v55 = vsel %vm44, %v21, 0
  %57 = vmatpush.msra.mxu0 %v37
  %58 = vmatpush.msra.mxu0 %v36
  %59 = vmatpush.msra.mxu0 %v35
  %60 = vmatpush.msra.mxu0 %v34
  %61 = vmatpush.msra.mxu0 %v33
  %62 = vmatpush.msra.mxu0 %v32
  %63 = vmatpush.msra.mxu0 %v31
  %64 = vmatpush.msra.mxu0 %v30
  %65 = vmatpush.msra.mxu0 %v29
  %66 = vmatpush.msra.mxu0 %v28
  %67 = vmatpush.msra.mxu0 %v27
  %68 = vmatpush.msra.mxu0 %v26
  %69 = vmatpush.msra.mxu0 %v25
  %70 = vmatpush.msra.mxu0 %v24
  %71 = vmatpush.msra.mxu0 %v23
  %72 = vmatpush.msra.mxu0 %v22
  %73 = vmatmul.f32.gmra.mxu0 %v14
  %v74 = vpop.f32.mrf.mxu0
  %v75 = vadd.f32 %v42, %v74
  %76 = vmatmul.f32.gmra.mxu0 %v16
  %v77 = vpop.f32.mrf.mxu0
  %v78 = vadd.f32 %v42, %v77
  %79 = vmatmul.f32.gmra.mxu0 %v18
  %v80 = vpop.f32.mrf.mxu0
  %v81 = vadd.f32 %v42, %v80
  %82 = vmatmul.f32.gmra.mxu0 %v20
  %v83 = vpop.f32.mrf.mxu0
  %v84 = vadd.f32 %v42, %v83
  %85 = vdwg.mxu0
  %86 = vmatpush.msra.mxu0 0.0
  %87 = vmatpush.msra.mxu0 0.0
  %88 = vmatpush.msra.mxu0 0.0
  %89 = vmatpush.msra.mxu0 0.0
  %90 = vmatpush.msra.mxu0 0.0
  %91 = vmatpush.msra.mxu0 0.0
  %92 = vmatpush.msra.mxu0 0.0
  %93 = vmatpush.msra.mxu0 0.0
  %94 = vmatpush.msra.mxu0 0.0
  %95 = vmatpush.msra.mxu0 0.0
  %96 = vmatpush.msra.mxu0 0.0
  %97 = vmatpush.msra.mxu0 0.0
  %98 = vmatpush.msra.mxu0 0.0
  %99 = vmatpush.msra.mxu0 0.0
  %100 = vmatpush.msra.mxu0 %v39
  %101 = vmatpush.msra.mxu0 %v38
  %102 = vmatmul.f32.gmra.mxu0 %v46
  %v103 = vpop.f32.mrf.mxu0
  %v104 = vadd.f32 %v75, %v103
  %105 = vmatmul.f32.gmra.mxu0 %v49
  %v106 = vpop.f32.mrf.mxu0
  %v107 = vadd.f32 %v78, %v106
  %108 = vmatmul.f32.gmra.mxu0 %v52
  %v109 = vpop.f32.mrf.mxu0
  %v110 = vadd.f32 %v81, %v109
  %111 = vmatmul.f32.gmra.mxu0 %v55
  %v112 = vpop.f32.mrf.mxu0
  %v113 = vadd.f32 %v84, %v112
  %114 = vdwg.mxu0
  %vm115 = vcmask 195584
  %116 = vst.msk [vmem:[%s3] sm:$0xff] %vm115, %v104
  %117 = vst.msk [vmem:[%s3 + $0x8] sm:$0xff] %vm115, %v107
  %118 = vst.msk [vmem:[%s3 + $0x10] sm:$0xff] %vm115, %v110
  %119 = vst.msk [vmem:[%s3 + $0x18] sm:$0xff] %vm115, %v113
  // Predicated region
  $region14: #{net_forward.23} parent=0 // pred_check
    _
  $region15: #{net_forward.23} parent=0 // pred_check_branch
    %121 = sbr.rel (0) target = $region17
  $region16: #{net_forward.23} parent=0 // pred_region
    _
  $region17: #{net_forward.23} parent=0 // pred_fallthru
    _
  // Predicated region
  $region18: #{net_forward.23} parent=0 // pred_check
    _
  $region19: #{net_forward.23} parent=0 // pred_check_branch
    %123 = sbr.rel (0) target = $region21
  $region20: #{net_forward.23} parent=0 // pred_region
    _
  $region21: #{net_forward.23} parent=0 // pred_fallthru
    _

// kernel: net_forward.24
$region0: #{net_forward.24}
  #allocation0 [shape = 'u32[]', space=smem, size = 0x4, offset = 0x4, fixed_abs, tag = 'smem constant byte address 0x4 - core index']
  #allocation1 [shape = 'u32[72,128]{1,0:T(1,128)}', space=vmem, size = 0x9000, scoped, tag = 'internal scratch']
  %s0 = inlined_call_operand.vmem [shape: f32[32,216], index: 0, kind: input, shape index: {}]
  %s1 = inlined_call_operand.vmem [shape: f32[216,24], index: 1, kind: input, shape index: {}]
  %s2 = inlined_call_operand.vmem [shape: f32[1,24], index: 2, kind: input, shape index: {}]
  %s3 = inlined_call_operand.vmem [shape: f32[32,24], index: 3, kind: output, shape index: {}]
  %s4 = sld [smem:[#allocation0]]
  $region22: #{net_forward.24} parent=0
    _
  %s6 = ssub.s32 1, %s4
  %s7 = scalar_select 0, %s6, %s4
  // Predicated region
  $region2: #{net_forward.24} parent=0 // pred_check
    _
  $region3: #{net_forward.24} parent=0 // pred_check_branch
    %9 = sbr.rel (0) target = $region5
  $region4: #{net_forward.24} parent=0 // pred_region
    _
  $region5: #{net_forward.24} parent=0 // pred_fallthru
    _
  // Predicated region
  $region6: #{net_forward.24} parent=0 // pred_check
    _
  $region7: #{net_forward.24} parent=0 // pred_check_branch
    %11 = sbr.rel (0) target = $region9
  $region8: #{net_forward.24} parent=0 // pred_region
    _
  $region9: #{net_forward.24} parent=0 // pred_fallthru
    _
  // Predicated region
  $region10: #{net_forward.24} parent=0 // pred_check
    _
  $region11: #{net_forward.24} parent=0 // pred_check_branch
    %13 = sbr.rel (0) target = $region13
  $region12: #{net_forward.24} parent=0 // pred_region
    _
  $region13: #{net_forward.24} parent=0 // pred_fallthru
    _
  %v14 = vld [vmem:[%s0] sm:$0xff]
  %v15 = vld [vmem:[%s0 + $0x8] sm:$0xff]
  %v16 = vld [vmem:[%s0 + $0x10] sm:$0xff]
  %v17 = vld [vmem:[%s0 + $0x18] sm:$0xff]
  %v18 = vld [vmem:[%s0 + $0x20] sm:$0xff]
  %v19 = vld [vmem:[%s0 + $0x28] sm:$0xff]
  %v20 = vld [vmem:[%s0 + $0x30] sm:$0xff]
  %v21 = vld [vmem:[%s0 + $0x38] sm:$0xff]
  %v22 = vld [vmem:[%s1] sm:$0xff]
  %v23 = vld [vmem:[%s1 + $0x8] sm:$0xff]
  %v24 = vld [vmem:[%s1 + $0x10] sm:$0xff]
  %v25 = vld [vmem:[%s1 + $0x18] sm:$0xff]
  %v26 = vld [vmem:[%s1 + $0x20] sm:$0xff]
  %v27 = vld [vmem:[%s1 + $0x28] sm:$0xff]
  %v28 = vld [vmem:[%s1 + $0x30] sm:$0xff]
  %v29 = vld [vmem:[%s1 + $0x38] sm:$0xff]
  %v30 = vld [vmem:[%s1 + $0x40] sm:$0xff]
  %v31 = vld [vmem:[%s1 + $0x48] sm:$0xff]
  %v32 = vld [vmem:[%s1 + $0x50] sm:$0xff]
  %v33 = vld [vmem:[%s1 + $0x58] sm:$0xff]
  %v34 = vld [vmem:[%s1 + $0x60] sm:$0xff]
  %v35 = vld [vmem:[%s1 + $0x68] sm:$0xff]
  %v36 = vld [vmem:[%s1 + $0x70] sm:$0xff]
  %v37 = vld [vmem:[%s1 + $0x78] sm:$0xff]
  %v38 = vld [vmem:[%s1 + $0x80] sm:$0xff]
  %v39 = vld [vmem:[%s1 + $0x88] sm:$0xff]
  %v40 = vld [vmem:[%s1 + $0x90] sm:$0xff]
  %v41 = vld [vmem:[%s1 + $0x98] sm:$0xff]
  %v42 = vld [vmem:[%s1 + $0xa0] sm:$0xff]
  %v43 = vld [vmem:[%s1 + $0xa8] sm:$0xff]
  %v44 = vld [vmem:[%s1 + $0xb0] sm:$0xff]
  %v45 = vld [vmem:[%s1 + $0xb8] sm:$0xff]
  %v46 = vld [vmem:[%s1 + $0xc0] sm:$0xff]
  %v47 = vld [vmem:[%s1 + $0xc8] sm:$0xff]
  %v48 = vld [vmem:[%s1 + $0xd0] sm:$0xff]
  %v49 = vld [vmem:[%s2] sm:$0x1]
  %v51 = vperm.slane %v49, 0
  %vm53 = vcmask 719872
  %v55 = vsel %vm53, %v15, 0
  %v58 = vsel %vm53, %v17, 0
  %v61 = vsel %vm53, %v19, 0
  %v64 = vsel %vm53, %v21, 0
  %66 = vmatpush.msra.mxu0 %v37
  %67 = vmatpush.msra.mxu0 %v36
  %68 = vmatpush.msra.mxu0 %v35
  %69 = vmatpush.msra.mxu0 %v34
  %70 = vmatpush.msra.mxu0 %v33
  %71 = vmatpush.msra.mxu0 %v32
  %72 = vmatpush.msra.mxu0 %v31
  %73 = vmatpush.msra.mxu0 %v30
  %74 = vmatpush.msra.mxu0 %v29
  %75 = vmatpush.msra.mxu0 %v28
  %76 = vmatpush.msra.mxu0 %v27
  %77 = vmatpush.msra.mxu0 %v26
  %78 = vmatpush.msra.mxu0 %v25
  %79 = vmatpush.msra.mxu0 %v24
  %80 = vmatpush.msra.mxu0 %v23
  %81 = vmatpush.msra.mxu0 %v22
  %82 = vmatmul.f32.gmra.mxu0 %v14
  %v83 = vpop.f32.mrf.mxu0
  %v84 = vadd.f32 %v51, %v83
  %85 = vmatmul.f32.gmra.mxu0 %v16
  %v86 = vpop.f32.mrf.mxu0
  %v87 = vadd.f32 %v51, %v86
  %88 = vmatmul.f32.gmra.mxu0 %v18
  %v89 = vpop.f32.mrf.mxu0
  %v90 = vadd.f32 %v51, %v89
  %91 = vmatmul.f32.gmra.mxu0 %v20
  %v92 = vpop.f32.mrf.mxu0
  %v93 = vadd.f32 %v51, %v92
  %94 = vdwg.mxu0
  %95 = vmatpush.msra.mxu0 0.0
  %96 = vmatpush.msra.mxu0 0.0
  %97 = vmatpush.msra.mxu0 0.0
  %98 = vmatpush.msra.mxu0 0.0
  %99 = vmatpush.msra.mxu0 0.0
  %100 = vmatpush.msra.mxu0 %v48
  %101 = vmatpush.msra.mxu0 %v47
  %102 = vmatpush.msra.mxu0 %v46
  %103 = vmatpush.msra.mxu0 %v45
  %104 = vmatpush.msra.mxu0 %v44
  %105 = vmatpush.msra.mxu0 %v43
  %106 = vmatpush.msra.mxu0 %v42
  %107 = vmatpush.msra.mxu0 %v41
  %108 = vmatpush.msra.mxu0 %v40
  %109 = vmatpush.msra.mxu0 %v39
  %110 = vmatpush.msra.mxu0 %v38
  %111 = vmatmul.f32.gmra.mxu0 %v55
  %v112 = vpop.f32.mrf.mxu0
  %v113 = vadd.f32 %v84, %v112
  %114 = vmatmul.f32.gmra.mxu0 %v58
  %v115 = vpop.f32.mrf.mxu0
  %v116 = vadd.f32 %v87, %v115
  %117 = vmatmul.f32.gmra.mxu0 %v61
  %v118 = vpop.f32.mrf.mxu0
  %v119 = vadd.f32 %v90, %v118
  %120 = vmatmul.f32.gmra.mxu0 %v64
  %v121 = vpop.f32.mrf.mxu0
  %v122 = vadd.f32 %v93, %v121
  %123 = vdwg.mxu0
  %vm124 = vcmask 195584
  %125 = vst.msk [vmem:[%s3] sm:$0xff] %vm124, %v113
  %126 = vst.msk [vmem:[%s3 + $0x8] sm:$0xff] %vm124, %v116
  %127 = vst.msk [vmem:[%s3 + $0x10] sm:$0xff] %vm124, %v119
  %128 = vst.msk [vmem:[%s3 + $0x18] sm:$0xff] %vm124, %v122
  // Predicated region
  $region14: #{net_forward.24} parent=0 // pred_check
    _
  $region15: #{net_forward.24} parent=0 // pred_check_branch
    %130 = sbr.rel (0) target = $region17
  $region16: #{net_forward.24} parent=0 // pred_region
    _
  $region17: #{net_forward.24} parent=0 // pred_fallthru
    _
  // Predicated region
  $region18: #{net_forward.24} parent=0 // pred_check
    _
  $region19: #{net_forward.24} parent=0 // pred_check_branch
    %132 = sbr.rel (0) target = $region21
  $region20: #{net_forward.24} parent=0 // pred_region
    _
  $region21: #{net_forward.24} parent=0 // pred_fallthru
    _

// kernel: net_forward.25
$region0: #{net_forward.25}
  #allocation0 [shape = 'u32[]', space=smem, size = 0x4, offset = 0x4, fixed_abs, tag = 'smem constant byte address 0x4 - core index']
  #allocation1 [shape = 'u32[72,128]{1,0:T(1,128)}', space=vmem, size = 0x9000, scoped, tag = 'internal scratch']
  %s0 = inlined_call_operand.vmem [shape: f32[2,1408], index: 0, kind: input, shape index: {}]
  %s1 = inlined_call_operand.vmem [shape: f32[1408,10], index: 1, kind: input, shape index: {}]
  %s2 = inlined_call_operand.vmem [shape: f32[1,10], index: 2, kind: input, shape index: {}]
  %s3 = inlined_call_operand.hbm [shape: f32[2,10], index: 3, kind: output, shape index: {}]
  %s4 = sld [smem:[#allocation0]]
  $region22: #{net_forward.25} parent=0
    _
  %s6 = ssub.s32 1, %s4
  %s7 = scalar_select 0, %s6, %s4
  $region1: #{net_forward.25} parent=0
    #allocation2 [shape = 'u8[1024]{0}', space=vmem, size = 0x400, scoped, tag = 'output window, operand 0, single buffered']
    #allocation3 [shape = 's32[1]{0}', space=sflag, size = 0x4, scoped, tag = 'scoped memory for net_forward.25']
    %8 = vsyncpa [#allocation3], 0
    // Predicated region
    $region2: #{net_forward.25} parent=1 // pred_check
      _
    $region3: #{net_forward.25} parent=1 // pred_check_branch
      %10 = sbr.rel (0) target = $region5
    $region4: #{net_forward.25} parent=1 // pred_region
      _
    $region5: #{net_forward.25} parent=1 // pred_fallthru
      _
    // Predicated region
    $region6: #{net_forward.25} parent=1 // pred_check
      _
    $region7: #{net_forward.25} parent=1 // pred_check_branch
      %12 = sbr.rel (0) target = $region9
    $region8: #{net_forward.25} parent=1 // pred_region
      _
    $region9: #{net_forward.25} parent=1 // pred_fallthru
      _
    // Predicated region
    $region10: #{net_forward.25} parent=1 // pred_check
      _
    $region11: #{net_forward.25} parent=1 // pred_check_branch
      %14 = sbr.rel (0) target = $region13
    $region12: #{net_forward.25} parent=1 // pred_region
      _
    $region13: #{net_forward.25} parent=1 // pred_fallthru
      _
    %v15 = vld [vmem:[%s0] sm:$0xff]
    %v16 = vld [vmem:[%s0 + $0x8] sm:$0xff]
    %v17 = vld [vmem:[%s0 + $0x10] sm:$0x3f]
    %v18 = vld [vmem:[%s1] sm:$0xff]
    %v19 = vld [vmem:[%s1 + $0x8] sm:$0xff]
    %v20 = vld [vmem:[%s1 + $0x10] sm:$0xff]
    %v21 = vld [vmem:[%s1 + $0x18] sm:$0xff]
    %v22 = vld [vmem:[%s1 + $0x20] sm:$0xff]
    %v23 = vld [vmem:[%s1 + $0x28] sm:$0xff]
    %v24 = vld [vmem:[%s1 + $0x30] sm:$0xff]
    %v25 = vld [vmem:[%s1 + $0x38] sm:$0xff]
    %v26 = vld [vmem:[%s1 + $0x40] sm:$0xff]
    %v27 = vld [vmem:[%s1 + $0x48] sm:$0xff]
    %v28 = vld [vmem:[%s1 + $0x50] sm:$0xff]
    %v29 = vld [vmem:[%s1 + $0x58] sm:$0xff]
    %v30 = vld [vmem:[%s1 + $0x60] sm:$0xff]
    %v31 = vld [vmem:[%s1 + $0x68] sm:$0xff]
    %v32 = vld [vmem:[%s1 + $0x70] sm:$0xff]
    %v33 = vld [vmem:[%s1 + $0x78] sm:$0xff]
    %v34 = vld [vmem:[%s1 + $0x80] sm:$0xff]
    %v35 = vld [vmem:[%s1 + $0x88] sm:$0xff]
    %v36 = vld [vmem:[%s1 + $0x90] sm:$0xff]
    %v37 = vld [vmem:[%s1 + $0x98] sm:$0xff]
    %v38 = vld [vmem:[%s1 + $0xa0] sm:$0xff]
    %v39 = vld [vmem:[%s1 + $0xa8] sm:$0xff]
    %v40 = vld [vmem:[%s1 + $0xb0] sm:$0xff]
    %v41 = vld [vmem:[%s1 + $0xb8] sm:$0xff]
    %v42 = vld [vmem:[%s1 + $0xc0] sm:$0xff]
    %v43 = vld [vmem:[%s1 + $0xc8] sm:$0xff]
    %v44 = vld [vmem:[%s1 + $0xd0] sm:$0xff]
    %v45 = vld [vmem:[%s1 + $0xd8] sm:$0xff]
    %v46 = vld [vmem:[%s1 + $0xe0] sm:$0xff]
    %v47 = vld [vmem:[%s1 + $0xe8] sm:$0xff]
    %v48 = vld [vmem:[%s1 + $0xf0] sm:$0xff]
    %v49 = vld [vmem:[%s1 + $0xf8] sm:$0xff]
    %v50 = vld [vmem:[%s1 + $0x100] sm:$0xff]
    %v51 = vld [vmem:[%s1 + $0x108] sm:$0xff]
    %v52 = vld [vmem:[%s1 + $0x110] sm:$0xff]
    %v53 = vld [vmem:[%s1 + $0x118] sm:$0xff]
    %v54 = vld [vmem:[%s1 + $0x120] sm:$0xff]
    %v55 = vld [vmem:[%s1 + $0x128] sm:$0xff]
    %v56 = vld [vmem:[%s1 + $0x130] sm:$0xff]
    %v57 = vld [vmem:[%s1 + $0x138] sm:$0xff]
    %v58 = vld [vmem:[%s1 + $0x140] sm:$0xff]
    %v59 = vld [vmem:[%s1 + $0x148] sm:$0xff]
    %v60 = vld [vmem:[%s1 + $0x150] sm:$0xff]
    %v61 = vld [vmem:[%s1 + $0x158] sm:$0xff]
    %v62 = vld [vmem:[%s1 + $0x160] sm:$0xff]
    %v63 = vld [vmem:[%s1 + $0x168] sm:$0xff]
    %v64 = vld [vmem:[%s1 + $0x170] sm:$0xff]
    %v65 = vld [vmem:[%s1 + $0x178] sm:$0xff]
    %v66 = vld [vmem:[%s1 + $0x180] sm:$0xff]
    %v67 = vld [vmem:[%s1 + $0x188] sm:$0xff]
    %v68 = vld [vmem:[%s1 + $0x190] sm:$0xff]
    %v69 = vld [vmem:[%s1 + $0x198] sm:$0xff]
    %v70 = vld [vmem:[%s1 + $0x1a0] sm:$0xff]
    %v71 = vld [vmem:[%s1 + $0x1a8] sm:$0xff]
    %v72 = vld [vmem:[%s1 + $0x1b0] sm:$0xff]
    %v73 = vld [vmem:[%s1 + $0x1b8] sm:$0xff]
    %v74 = vld [vmem:[%s1 + $0x1c0] sm:$0xff]
    %v75 = vld [vmem:[%s1 + $0x1c8] sm:$0xff]
    %v76 = vld [vmem:[%s1 + $0x1d0] sm:$0xff]
    %v77 = vld [vmem:[%s1 + $0x1d8] sm:$0xff]
    %v78 = vld [vmem:[%s1 + $0x1e0] sm:$0xff]
    %v79 = vld [vmem:[%s1 + $0x1e8] sm:$0xff]
    %v80 = vld [vmem:[%s1 + $0x1f0] sm:$0xff]
    %v81 = vld [vmem:[%s1 + $0x1f8] sm:$0xff]
    %v82 = vld [vmem:[%s1 + $0x200] sm:$0xff]
    %v83 = vld [vmem:[%s1 + $0x208] sm:$0xff]
    %v84 = vld [vmem:[%s1 + $0x210] sm:$0xff]
    %v85 = vld [vmem:[%s1 + $0x218] sm:$0xff]
    %v86 = vld [vmem:[%s1 + $0x220] sm:$0xff]
    %v87 = vld [vmem:[%s1 + $0x228] sm:$0xff]
    %v88 = vld [vmem:[%s1 + $0x230] sm:$0xff]
    %v89 = vld [vmem:[%s1 + $0x238] sm:$0xff]
    %v90 = vld [vmem:[%s1 + $0x240] sm:$0xff]
    %v91 = vld [vmem:[%s1 + $0x248] sm:$0xff]
    %v92 = vld [vmem:[%s1 + $0x250] sm:$0xff]
    %v93 = vld [vmem:[%s1 + $0x258] sm:$0xff]
    %v94 = vld [vmem:[%s1 + $0x260] sm:$0xff]
    %v95 = vld [vmem:[%s1 + $0x268] sm:$0xff]
    %v96 = vld [vmem:[%s1 + $0x270] sm:$0xff]
    %v97 = vld [vmem:[%s1 + $0x278] sm:$0xff]
    %v98 = vld [vmem:[%s1 + $0x280] sm:$0xff]
    %v99 = vld [vmem:[%s1 + $0x288] sm:$0xff]
    %v100 = vld [vmem:[%s1 + $0x290] sm:$0xff]
    %v101 = vld [vmem:[%s1 + $0x298] sm:$0xff]
    %v102 = vld [vmem:[%s1 + $0x2a0] sm:$0xff]
    %v103 = vld [vmem:[%s1 + $0x2a8] sm:$0xff]
    %v104 = vld [vmem:[%s1 + $0x2b0] sm:$0xff]
    %v105 = vld [vmem:[%s1 + $0x2b8] sm:$0xff]
    %v106 = vld [vmem:[%s1 + $0x2c0] sm:$0xff]
    %v107 = vld [vmem:[%s1 + $0x2c8] sm:$0xff]
    %v108 = vld [vmem:[%s1 + $0x2d0] sm:$0xff]
    %v109 = vld [vmem:[%s1 + $0x2d8] sm:$0xff]
    %v110 = vld [vmem:[%s1 + $0x2e0] sm:$0xff]
    %v111 = vld [vmem:[%s1 + $0x2e8] sm:$0xff]
    %v112 = vld [vmem:[%s1 + $0x2f0] sm:$0xff]
    %v113 = vld [vmem:[%s1 + $0x2f8] sm:$0xff]
    %v114 = vld [vmem:[%s1 + $0x300] sm:$0xff]
    %v115 = vld [vmem:[%s1 + $0x308] sm:$0xff]
    %v116 = vld [vmem:[%s1 + $0x310] sm:$0xff]
    %v117 = vld [vmem:[%s1 + $0x318] sm:$0xff]
    %v118 = vld [vmem:[%s1 + $0x320] sm:$0xff]
    %v119 = vld [vmem:[%s1 + $0x328] sm:$0xff]
    %v120 = vld [vmem:[%s1 + $0x330] sm:$0xff]
    %v121 = vld [vmem:[%s1 + $0x338] sm:$0xff]
    %v122 = vld [vmem:[%s1 + $0x340] sm:$0xff]
    %v123 = vld [vmem:[%s1 + $0x348] sm:$0xff]
    %v124 = vld [vmem:[%s1 + $0x350] sm:$0xff]
    %v125 = vld [vmem:[%s1 + $0x358] sm:$0xff]
    %v126 = vld [vmem:[%s1 + $0x360] sm:$0xff]
    %v127 = vld [vmem:[%s1 + $0x368] sm:$0xff]
    %v128 = vld [vmem:[%s1 + $0x370] sm:$0xff]
    %v129 = vld [vmem:[%s1 + $0x378] sm:$0xff]
    %v130 = vld [vmem:[%s1 + $0x380] sm:$0xff]
    %v131 = vld [vmem:[%s1 + $0x388] sm:$0xff]
    %v132 = vld [vmem:[%s1 + $0x390] sm:$0xff]
    %v133 = vld [vmem:[%s1 + $0x398] sm:$0xff]
    %v134 = vld [vmem:[%s1 + $0x3a0] sm:$0xff]
    %v135 = vld [vmem:[%s1 + $0x3a8] sm:$0xff]
    %v136 = vld [vmem:[%s1 + $0x3b0] sm:$0xff]
    %v137 = vld [vmem:[%s1 + $0x3b8] sm:$0xff]
    %v138 = vld [vmem:[%s1 + $0x3c0] sm:$0xff]
    %v139 = vld [vmem:[%s1 + $0x3c8] sm:$0xff]
    %v140 = vld [vmem:[%s1 + $0x3d0] sm:$0xff]
    %v141 = vld [vmem:[%s1 + $0x3d8] sm:$0xff]
    %v142 = vld [vmem:[%s1 + $0x3e0] sm:$0xff]
    %v143 = vld [vmem:[%s1 + $0x3e8] sm:$0xff]
    %v144 = vld [vmem:[%s1 + $0x3f0] sm:$0xff]
    %v145 = vld [vmem:[%s1 + $0x3f8] sm:$0xff]
    %v146 = vld [vmem:[%s1 + $0x400] sm:$0xff]
    %v147 = vld [vmem:[%s1 + $0x408] sm:$0xff]
    %v148 = vld [vmem:[%s1 + $0x410] sm:$0xff]
    %v149 = vld [vmem:[%s1 + $0x418] sm:$0xff]
    %v150 = vld [vmem:[%s1 + $0x420] sm:$0xff]
    %v151 = vld [vmem:[%s1 + $0x428] sm:$0xff]
    %v152 = vld [vmem:[%s1 + $0x430] sm:$0xff]
    %v153 = vld [vmem:[%s1 + $0x438] sm:$0xff]
    %v154 = vld [vmem:[%s1 + $0x440] sm:$0xff]
    %v155 = vld [vmem:[%s1 + $0x448] sm:$0xff]
    %v156 = vld [vmem:[%s1 + $0x450] sm:$0xff]
    %v157 = vld [vmem:[%s1 + $0x458] sm:$0xff]
    %v158 = vld [vmem:[%s1 + $0x460] sm:$0xff]
    %v159 = vld [vmem:[%s1 + $0x468] sm:$0xff]
    %v160 = vld [vmem:[%s1 + $0x470] sm:$0xff]
    %v161 = vld [vmem:[%s1 + $0x478] sm:$0xff]
    %v162 = vld [vmem:[%s1 + $0x480] sm:$0xff]
    %v163 = vld [vmem:[%s1 + $0x488] sm:$0xff]
    %v164 = vld [vmem:[%s1 + $0x490] sm:$0xff]
    %v165 = vld [vmem:[%s1 + $0x498] sm:$0xff]
    %v166 = vld [vmem:[%s1 + $0x4a0] sm:$0xff]
    %v167 = vld [vmem:[%s1 + $0x4a8] sm:$0xff]
    %v168 = vld [vmem:[%s1 + $0x4b0] sm:$0xff]
    %v169 = vld [vmem:[%s1 + $0x4b8] sm:$0xff]
    %v170 = vld [vmem:[%s1 + $0x4c0] sm:$0xff]
    %v171 = vld [vmem:[%s1 + $0x4c8] sm:$0xff]
    %v172 = vld [vmem:[%s1 + $0x4d0] sm:$0xff]
    %v173 = vld [vmem:[%s1 + $0x4d8] sm:$0xff]
    %v174 = vld [vmem:[%s1 + $0x4e0] sm:$0xff]
    %v175 = vld [vmem:[%s1 + $0x4e8] sm:$0xff]
    %v176 = vld [vmem:[%s1 + $0x4f0] sm:$0xff]
    %v177 = vld [vmem:[%s1 + $0x4f8] sm:$0xff]
    %v178 = vld [vmem:[%s1 + $0x500] sm:$0xff]
    %v179 = vld [vmem:[%s1 + $0x508] sm:$0xff]
    %v180 = vld [vmem:[%s1 + $0x510] sm:$0xff]
    %v181 = vld [vmem:[%s1 + $0x518] sm:$0xff]
    %v182 = vld [vmem:[%s1 + $0x520] sm:$0xff]
    %v183 = vld [vmem:[%s1 + $0x528] sm:$0xff]
    %v184 = vld [vmem:[%s1 + $0x530] sm:$0xff]
    %v185 = vld [vmem:[%s1 + $0x538] sm:$0xff]
    %v186 = vld [vmem:[%s1 + $0x540] sm:$0xff]
    %v187 = vld [vmem:[%s1 + $0x548] sm:$0xff]
    %v188 = vld [vmem:[%s1 + $0x550] sm:$0xff]
    %v189 = vld [vmem:[%s1 + $0x558] sm:$0xff]
    %v190 = vld [vmem:[%s1 + $0x560] sm:$0xff]
    %v191 = vld [vmem:[%s1 + $0x568] sm:$0xff]
    %v192 = vld [vmem:[%s1 + $0x570] sm:$0xff]
    %v193 = vld [vmem:[%s1 + $0x578] sm:$0xff]
    %v194 = vld [vmem:[%s2] sm:$0x1]
    %v196 = vperm.slane %v194, 0
    %201 = vst [vmem:[#allocation1] ss:$4 sm:$0xff] %v15
    %s202 = scalar_lea.vmem [#allocation1], 32
    %203 = vst [vmem:[%s202] ss:$4 sm:$0xff] %v16
    %v204 = vld.sshfl [vmem:[#allocation1] sm:$0xff pattern:$0x73625140]
    %v205 = vld.sshfl [vmem:[#allocation1 + $0x8] sm:$0xff pattern:$0x73625140]
    %v206 = vld.sshfl [vmem:[#allocation1 + $0x10] sm:$0xff pattern:$0x73625140]
    %v207 = vld.sshfl [vmem:[#allocation1 + $0x18] sm:$0xff pattern:$0x73625140]
    %v208 = vld.sshfl [vmem:[#allocation1 + $0x20] sm:$0xff pattern:$0x73625140]
    %v209 = vld.sshfl [vmem:[#allocation1 + $0x28] sm:$0xff pattern:$0x73625140]
    %v210 = vld.sshfl [vmem:[#allocation1 + $0x30] sm:$0xff pattern:$0x73625140]
    %v211 = vld.sshfl [vmem:[#allocation1 + $0x38] sm:$0xff pattern:$0x73625140]
    %212 = vst [vmem:[#allocation1] ss:$4 sm:$0xff] %v17
    %v213 = vld.sshfl [vmem:[#allocation1] sm:$0xff pattern:$0x73625140]
    %v214 = vld.sshfl [vmem:[#allocation1 + $0x8] sm:$0xff pattern:$0x73625140]
    %v215 = vld.sshfl [vmem:[#allocation1 + $0x10] sm:$0xff pattern:$0x73625140]
    %227 = vmatpush.msra.mxu0 %v33
    %228 = vmatpush.msra.mxu0 %v32
    %229 = vmatpush.msra.mxu0 %v31
    %230 = vmatpush.msra.mxu0 %v30
    %231 = vmatpush.msra.mxu0 %v29
    %232 = vmatpush.msra.mxu0 %v28
    %233 = vmatpush.msra.mxu0 %v27
    %234 = vmatpush.msra.mxu0 %v26
    %235 = vmatpush.msra.mxu0 %v25
    %236 = vmatpush.msra.mxu0 %v24
    %237 = vmatpush.msra.mxu0 %v23
    %238 = vmatpush.msra.mxu0 %v22
    %239 = vmatpush.msra.mxu0 %v21
    %240 = vmatpush.msra.mxu0 %v20
    %241 = vmatpush.msra.mxu0 %v19
    %242 = vmatpush.msra.mxu0 %v18
    %243 = vmatmul.f32.gmra.mxu0 %v204
    %v244 = vpop.f32.mrf.mxu0
    %v245 = vadd.f32 %v196, %v244
    %246 = vdwg.mxu0
    %247 = vmatpush.msra.mxu0 %v49
    %248 = vmatpush.msra.mxu0 %v48
    %249 = vmatpush.msra.mxu0 %v47
    %250 = vmatpush.msra.mxu0 %v46
    %251 = vmatpush.msra.mxu0 %v45
    %252 = vmatpush.msra.mxu0 %v44
    %253 = vmatpush.msra.mxu0 %v43
    %254 = vmatpush.msra.mxu0 %v42
    %255 = vmatpush.msra.mxu0 %v41
    %256 = vmatpush.msra.mxu0 %v40
    %257 = vmatpush.msra.mxu0 %v39
    %258 = vmatpush.msra.mxu0 %v38
    %259 = vmatpush.msra.mxu0 %v37
    %260 = vmatpush.msra.mxu0 %v36
    %261 = vmatpush.msra.mxu0 %v35
    %262 = vmatpush.msra.mxu0 %v34
    %263 = vmatmul.f32.gmra.mxu0 %v205
    %v264 = vpop.f32.mrf.mxu0
    %v265 = vadd.f32 %v245, %v264
    %266 = vdwg.mxu0
    %267 = vmatpush.msra.mxu0 %v65
    %268 = vmatpush.msra.mxu0 %v64
    %269 = vmatpush.msra.mxu0 %v63
    %270 = vmatpush.msra.mxu0 %v62
    %271 = vmatpush.msra.mxu0 %v61
    %272 = vmatpush.msra.mxu0 %v60
    %273 = vmatpush.msra.mxu0 %v59
    %274 = vmatpush.msra.mxu0 %v58
    %275 = vmatpush.msra.mxu0 %v57
    %276 = vmatpush.msra.mxu0 %v56
    %277 = vmatpush.msra.mxu0 %v55
    %278 = vmatpush.msra.mxu0 %v54
    %279 = vmatpush.msra.mxu0 %v53
    %280 = vmatpush.msra.mxu0 %v52
    %281 = vmatpush.msra.mxu0 %v51
    %282 = vmatpush.msra.mxu0 %v50
    %283 = vmatmul.f32.gmra.mxu0 %v206
    %v284 = vpop.f32.mrf.mxu0
    %v285 = vadd.f32 %v265, %v284
    %286 = vdwg.mxu0
    %287 = vmatpush.msra.mxu0 %v81
    %288 = vmatpush.msra.mxu0 %v80
    %289 = vmatpush.msra.mxu0 %v79
    %290 = vmatpush.msra.mxu0 %v78
    %291 = vmatpush.msra.mxu0 %v77
    %292 = vmatpush.msra.mxu0 %v76
    %293 = vmatpush.msra.mxu0 %v75
    %294 = vmatpush.msra.mxu0 %v74
    %295 = vmatpush.msra.mxu0 %v73
    %296 = vmatpush.msra.mxu0 %v72
    %297 = vmatpush.msra.mxu0 %v71
    %298 = vmatpush.msra.mxu0 %v70
    %299 = vmatpush.msra.mxu0 %v69
    %300 = vmatpush.msra.mxu0 %v68
    %301 = vmatpush.msra.mxu0 %v67
    %302 = vmatpush.msra.mxu0 %v66
    %303 = vmatmul.f32.gmra.mxu0 %v207
    %v304 = vpop.f32.mrf.mxu0
    %v305 = vadd.f32 %v285, %v304
    %306 = vdwg.mxu0
    %307 = vmatpush.msra.mxu0 %v97
    %308 = vmatpush.msra.mxu0 %v96
    %309 = vmatpush.msra.mxu0 %v95
    %310 = vmatpush.msra.mxu0 %v94
    %311 = vmatpush.msra.mxu0 %v93
    %312 = vmatpush.msra.mxu0 %v92
    %313 = vmatpush.msra.mxu0 %v91
    %314 = vmatpush.msra.mxu0 %v90
    %315 = vmatpush.msra.mxu0 %v89
    %316 = vmatpush.msra.mxu0 %v88
    %317 = vmatpush.msra.mxu0 %v87
    %318 = vmatpush.msra.mxu0 %v86
    %319 = vmatpush.msra.mxu0 %v85
    %320 = vmatpush.msra.mxu0 %v84
    %321 = vmatpush.msra.mxu0 %v83
    %322 = vmatpush.msra.mxu0 %v82
    %323 = vmatmul.f32.gmra.mxu0 %v208
    %v324 = vpop.f32.mrf.mxu0
    %v325 = vadd.f32 %v305, %v324
    %326 = vdwg.mxu0
    %327 = vmatpush.msra.mxu0 %v113
    %328 = vmatpush.msra.mxu0 %v112
    %329 = vmatpush.msra.mxu0 %v111
    %330 = vmatpush.msra.mxu0 %v110
    %331 = vmatpush.msra.mxu0 %v109
    %332 = vmatpush.msra.mxu0 %v108
    %333 = vmatpush.msra.mxu0 %v107
    %334 = vmatpush.msra.mxu0 %v106
    %335 = vmatpush.msra.mxu0 %v105
    %336 = vmatpush.msra.mxu0 %v104
    %337 = vmatpush.msra.mxu0 %v103
    %338 = vmatpush.msra.mxu0 %v102
    %339 = vmatpush.msra.mxu0 %v101
    %340 = vmatpush.msra.mxu0 %v100
    %341 = vmatpush.msra.mxu0 %v99
    %342 = vmatpush.msra.mxu0 %v98
    %343 = vmatmul.f32.gmra.mxu0 %v209
    %v344 = vpop.f32.mrf.mxu0
    %v345 = vadd.f32 %v325, %v344
    %346 = vdwg.mxu0
    %347 = vmatpush.msra.mxu0 %v129
    %348 = vmatpush.msra.mxu0 %v128
    %349 = vmatpush.msra.mxu0 %v127
    %350 = vmatpush.msra.mxu0 %v126
    %351 = vmatpush.msra.mxu0 %v125
    %352 = vmatpush.msra.mxu0 %v124
    %353 = vmatpush.msra.mxu0 %v123
    %354 = vmatpush.msra.mxu0 %v122
    %355 = vmatpush.msra.mxu0 %v121
    %356 = vmatpush.msra.mxu0 %v120
    %357 = vmatpush.msra.mxu0 %v119
    %358 = vmatpush.msra.mxu0 %v118
    %359 = vmatpush.msra.mxu0 %v117
    %360 = vmatpush.msra.mxu0 %v116
    %361 = vmatpush.msra.mxu0 %v115
    %362 = vmatpush.msra.mxu0 %v114
    %363 = vmatmul.f32.gmra.mxu0 %v210
    %v364 = vpop.f32.mrf.mxu0
    %v365 = vadd.f32 %v345, %v364
    %366 = vdwg.mxu0
    %367 = vmatpush.msra.mxu0 %v145
    %368 = vmatpush.msra.mxu0 %v144
    %369 = vmatpush.msra.mxu0 %v143
    %370 = vmatpush.msra.mxu0 %v142
    %371 = vmatpush.msra.mxu0 %v141
    %372 = vmatpush.msra.mxu0 %v140
    %373 = vmatpush.msra.mxu0 %v139
    %374 = vmatpush.msra.mxu0 %v138
    %375 = vmatpush.msra.mxu0 %v137
    %376 = vmatpush.msra.mxu0 %v136
    %377 = vmatpush.msra.mxu0 %v135
    %378 = vmatpush.msra.mxu0 %v134
    %379 = vmatpush.msra.mxu0 %v133
    %380 = vmatpush.msra.mxu0 %v132
    %381 = vmatpush.msra.mxu0 %v131
    %382 = vmatpush.msra.mxu0 %v130
    %383 = vmatmul.f32.gmra.mxu0 %v211
    %v384 = vpop.f32.mrf.mxu0
    %v385 = vadd.f32 %v365, %v384
    %386 = vdwg.mxu0
    %387 = vmatpush.msra.mxu0 %v161
    %388 = vmatpush.msra.mxu0 %v160
    %389 = vmatpush.msra.mxu0 %v159
    %390 = vmatpush.msra.mxu0 %v158
    %391 = vmatpush.msra.mxu0 %v157
    %392 = vmatpush.msra.mxu0 %v156
    %393 = vmatpush.msra.mxu0 %v155
    %394 = vmatpush.msra.mxu0 %v154
    %395 = vmatpush.msra.mxu0 %v153
    %396 = vmatpush.msra.mxu0 %v152
    %397 = vmatpush.msra.mxu0 %v151
    %398 = vmatpush.msra.mxu0 %v150
    %399 = vmatpush.msra.mxu0 %v149
    %400 = vmatpush.msra.mxu0 %v148
    %401 = vmatpush.msra.mxu0 %v147
    %402 = vmatpush.msra.mxu0 %v146
    %403 = vmatmul.f32.gmra.mxu0 %v213
    %v404 = vpop.f32.mrf.mxu0
    %v405 = vadd.f32 %v385, %v404
    %406 = vdwg.mxu0
    %407 = vmatpush.msra.mxu0 %v177
    %408 = vmatpush.msra.mxu0 %v176
    %409 = vmatpush.msra.mxu0 %v175
    %410 = vmatpush.msra.mxu0 %v174
    %411 = vmatpush.msra.mxu0 %v173
    %412 = vmatpush.msra.mxu0 %v172
    %413 = vmatpush.msra.mxu0 %v171
    %414 = vmatpush.msra.mxu0 %v170
    %415 = vmatpush.msra.mxu0 %v169
    %416 = vmatpush.msra.mxu0 %v168
    %417 = vmatpush.msra.mxu0 %v167
    %418 = vmatpush.msra.mxu0 %v166
    %419 = vmatpush.msra.mxu0 %v165
    %420 = vmatpush.msra.mxu0 %v164
    %421 = vmatpush.msra.mxu0 %v163
    %422 = vmatpush.msra.mxu0 %v162
    %423 = vmatmul.f32.gmra.mxu0 %v214
    %v424 = vpop.f32.mrf.mxu0
    %v425 = vadd.f32 %v405, %v424
    %426 = vdwg.mxu0
    %427 = vmatpush.msra.mxu0 %v193
    %428 = vmatpush.msra.mxu0 %v192
    %429 = vmatpush.msra.mxu0 %v191
    %430 = vmatpush.msra.mxu0 %v190
    %431 = vmatpush.msra.mxu0 %v189
    %432 = vmatpush.msra.mxu0 %v188
    %433 = vmatpush.msra.mxu0 %v187
    %434 = vmatpush.msra.mxu0 %v186
    %435 = vmatpush.msra.mxu0 %v185
    %436 = vmatpush.msra.mxu0 %v184
    %437 = vmatpush.msra.mxu0 %v183
    %438 = vmatpush.msra.mxu0 %v182
    %439 = vmatpush.msra.mxu0 %v181
    %440 = vmatpush.msra.mxu0 %v180
    %441 = vmatpush.msra.mxu0 %v179
    %442 = vmatpush.msra.mxu0 %v178
    %443 = vmatmul.f32.gmra.mxu0 %v215
    %v444 = vpop.f32.mrf.mxu0
    %v445 = vadd.f32 %v425, %v444
    %446 = vdwg.mxu0
    %vm447 = vcmask 74752
    %448 = vst.msk [vmem:[#allocation2] sm:$0x3] %vm447, %v445
    // Predicated region
    $region14: #{net_forward.25} parent=1 // pred_check
      _
    $region15: #{net_forward.25} parent=1 // pred_check_branch
      %450 = sbr.rel (0) target = $region17
    $region16: #{net_forward.25} parent=1 // pred_region
      %452 = vsyncadd [#allocation3], 0
      %s454 = sshll.u32 [#allocation2], 4
      %s455 = int_to_ptr.vmem [resolvable:$true] %s454
      %s456 = sshll.u32 %s3, 4
      %s457 = int_to_ptr.hbm [resolvable:$true] %s456
      %459 = dma.vmem_to_hbm [thread:$0]  %s455, 32, %s457, [#allocation3]
    $region17: #{net_forward.25} parent=1 // pred_fallthru
      _
    // Predicated region
    $region18: #{net_forward.25} parent=1 // pred_check
      _
    $region19: #{net_forward.25} parent=1 // pred_check_branch
      %461 = sbr.rel (0) target = $region21
    $region20: #{net_forward.25} parent=1 // pred_region
      %463 = dma.done [#allocation3], 32
    $region21: #{net_forward.25} parent=1 // pred_fallthru
      _
    %464 = vsyncpa [#allocation3], 1

</llo_original>
